<compile_context>
chip_gen: v7x
topology: tpu7x:2x2x1
jax: 0.10.0
libtpu: 0.0.40
codegen_flags: <defaults>
</compile_context>

<pallas_src>
import functools
import numpy as np

import jax
import jax.numpy as jnp
from jax import lax
from jax.experimental import pallas as pl
from jax.experimental.pallas import tpu as pltpu


# ----------------------------------------------------------------------------
# Pallas kernels
# ----------------------------------------------------------------------------
def _matmul_bias_kernel(x_ref, w_ref, b_ref, o_ref):
    """o = x @ w + b.  x/w bf16, f32 accumulation + bias, bf16 output."""
    acc = jnp.dot(x_ref[...], w_ref[...], preferred_element_type=jnp.float32)
    o_ref[...] = (acc + b_ref[...]).astype(o_ref.dtype)


def _levit_stage_kernel(t_ref, wqkv_ref, bqkv_ref, wproj_ref, bproj_ref,
                        w1_ref, b1_ref, w2_ref, b2_ref, g_ref, gmask_ref,
                        o_ref, att_sc, *, num_blocks, num_heads, scale):
    """All LeViT blocks of the stage, fused, for one batch's tokens.

    t_ref   : (N, C) bf16 tokens (from the downsample conv)
    o_ref   : (N, C) f32 tokens after all (gated) blocks; used as the carry
    att_sc  : (N, C) f32 VMEM scratch for per-head attention outputs
    g_ref   : (num_blocks,) f32 gate values   (SMEM)
    gmask_ref: (num_blocks,) int32 gate!=0 mask (SMEM)
    """
    f32, bf16 = jnp.float32, jnp.bfloat16
    N, C = o_ref.shape
    dh = C // num_heads

    # tokens live in the output block (VMEM) across the whole block loop
    o_ref[...] = t_ref[...].astype(f32)

    for i in range(num_blocks):                       # static unroll (small)
        @pl.when(gmask_ref[i] != 0)                   # skip gated-off blocks
        def _(i=i):
            t = o_ref[...]                                         # (N, C) f32

            # fused qkv projection (single MXU matmul, K=C)
            qkv = jnp.dot(t.astype(bf16), wqkv_ref[i],
                          preferred_element_type=f32) + bqkv_ref[i]  # (N, 3C)

            # per-head attention; head outputs written at their lane offsets
            for h in range(num_heads):
                q = qkv[:, h * dh:(h + 1) * dh].astype(bf16)
                k = qkv[:, C + h * dh:C + (h + 1) * dh].astype(bf16)
                v = qkv[:, 2 * C + h * dh:2 * C + (h + 1) * dh].astype(bf16)

                s = lax.dot_general(q, k, (((1,), (1,)), ((), ())),
                                    preferred_element_type=f32) * scale
                s = s - jnp.max(s, axis=-1, keepdims=True)
                p = jnp.exp(s)
                p = p * pl.reciprocal(jnp.sum(p, axis=-1, keepdims=True),
                                      approx=True)
                att_sc[:, h * dh:(h + 1) * dh] = jnp.dot(
                    p.astype(bf16), v, preferred_element_type=f32)

            # single output projection over K=C + internal residual
            y1 = t + jnp.dot(att_sc[...].astype(bf16), wproj_ref[i],
                             preferred_element_type=f32) + bproj_ref[i]

            # hardswish MLP (f32 epilogue on the VPU) + internal residual
            h1 = jnp.dot(y1.astype(bf16), w1_ref[i],
                         preferred_element_type=f32) + b1_ref[i]
            h1 = h1 * jnp.clip(h1 + 3.0, 0.0, 6.0) * (1.0 / 6.0)
            y2 = y1 + jnp.dot(h1.astype(bf16), w2_ref[i],
                              preferred_element_type=f32) + b2_ref[i]

            # gated outer residual: x <- x + gate_i * block(x)
            o_ref[...] = t + g_ref[i] * y2


# ----------------------------------------------------------------------------
# Wrappers
# ----------------------------------------------------------------------------
def _extract_patches_3x3_s2_p1(x_nchw):
    """(B,C,H,W) -> patches (B*Ho*Wo, 9*C) [tap-major, channel-minor], Ho, Wo."""
    B, C, H, W = x_nchw.shape
    x = jnp.transpose(x_nchw, (0, 2, 3, 1))                    # NHWC
    xp = jnp.pad(x, ((0, 0), (1, 1), (1, 1), (0, 0)))
    Ho = (H + 2 - 3) // 2 + 1
    Wo = (W + 2 - 3) // 2 + 1
    taps = []
    for di in range(3):
        for dj in range(3):
            taps.append(
                xp[:, di:di + 2 * Ho:2, dj:dj + 2 * Wo:2, :]
                .reshape(B * Ho * Wo, C))
    return jnp.concatenate(taps, axis=-1), Ho, Wo


def cnn_downsample_tokens(x, conv_w, conv_b):
    """Conv2d(dim, out_dim, 3, s=2, p=1) -> bf16 token slab (B, Ho*Wo, out_dim)."""
    B, C, H, W = x.shape
    O = conv_w.shape[0]
    # cast to bf16 BEFORE im2col: halves the HBM traffic of the patch tensor
    patches, Ho, Wo = _extract_patches_3x3_s2_p1(x.astype(jnp.bfloat16))
    M = patches.shape[0]
    wmat = (jnp.transpose(conv_w, (2, 3, 1, 0))
            .reshape(9 * C, O).astype(jnp.bfloat16))

    TM = 256                                   # fixed row tile, pad M up to it
    Mp = pl.cdiv(M, TM) * TM
    if Mp != M:
        patches = jnp.pad(patches, ((0, Mp - M), (0, 0)))

    y = pl.pallas_call(
        _matmul_bias_kernel,
        grid=(Mp // TM,),
        out_shape=jax.ShapeDtypeStruct((Mp, O), jnp.bfloat16),
        in_specs=[
            pl.BlockSpec((TM, 9 * C), lambda i: (i, 0)),
            pl.BlockSpec((9 * C, O), lambda i: (0, 0)),
            pl.BlockSpec((1, O), lambda i: (0, 0)),
        ],
        out_specs=pl.BlockSpec((TM, O), lambda i: (i, 0)),
        compiler_params=pltpu.CompilerParams(
            dimension_semantics=("parallel",),
            vmem_limit_bytes=32 * 1024 * 1024),
    )(patches, wmat, conv_b.reshape(1, O).astype(jnp.float32))
    return y[:M].reshape(B, Ho * Wo, O), Ho, Wo


def levit_stage_fused(tokens, p, gate, num_heads, num_blocks):
    """tokens: (B, N, C) bf16 -> (B, N, C) f32 after all gated blocks."""
    B, N, C = tokens.shape
    dh = C // num_heads
    scale = 1.0 / float(np.sqrt(dh))
    bf16, f32 = jnp.bfloat16, jnp.float32
    nb = num_blocks

    kern = functools.partial(_levit_stage_kernel, num_blocks=nb,
                             num_heads=num_heads, scale=scale)

    def wspec(shape):
        # constant block index -> weights stay VMEM-resident across the grid
        return pl.BlockSpec(shape, lambda b: (0,) * len(shape))

    gate_f = gate.astype(f32)
    gate_on = (gate_f > 0.0).astype(jnp.int32)

    return pl.pallas_call(
        kern,
        grid=(B,),
        out_shape=jax.ShapeDtypeStruct((B, N, C), f32),
        in_specs=[
            pl.BlockSpec((None, N, C), lambda b: (b, 0, 0)),       # tokens
            wspec((nb, C, 3 * C)), wspec((nb, 1, 3 * C)),          # qkv
            wspec((nb, C, C)),     wspec((nb, 1, C)),              # proj
            wspec((nb, C, 2 * C)), wspec((nb, 1, 2 * C)),          # mlp fc1
            wspec((nb, 2 * C, C)), wspec((nb, 1, C)),              # mlp fc2
            pl.BlockSpec(memory_space=pltpu.MemorySpace.SMEM),     # gate values
            pl.BlockSpec(memory_space=pltpu.MemorySpace.SMEM),     # gate mask
        ],
        out_specs=pl.BlockSpec((None, N, C), lambda b: (b, 0, 0)),
        scratch_shapes=[pltpu.VMEM((N, C), f32)],                  # attn output
        compiler_params=pltpu.CompilerParams(
            dimension_semantics=("parallel",),
            vmem_limit_bytes=32 * 1024 * 1024),
    )(tokens.astype(bf16),
      p["wqkv"].astype(bf16), p["bqkv"][:, None, :].astype(f32),
      p["wproj"].astype(bf16), p["bproj"][:, None, :].astype(f32),
      p["w1"].astype(bf16),   p["b1"][:, None, :].astype(f32),
      p["w2"].astype(bf16),   p["b2"][:, None, :].astype(f32),
      gate_f, gate_on)


def gumbel_softmax_hard(logits, key, tau=1.0):
    """Eval-mode F.gumbel_softmax(..., hard=True): forward value is one-hot."""
    u = jax.random.uniform(key, logits.shape, minval=1e-6, maxval=1.0 - 1e-6)
    g = -jnp.log(-jnp.log(u))
    y_soft = jax.nn.softmax((logits + g) / tau)
    return jax.nn.one_hot(jnp.argmax(y_soft), logits.shape[0],
                          dtype=logits.dtype)


def levit_stage_tinyfusion(x, params, gate_key, num_heads, num_blocks, tau=1.0):
    """Full stage: downsample -> gated LeViT blocks.  Fully jit-able."""
    B = x.shape[0]
    C_out = params["conv_w"].shape[0]

    tokens, Ho, Wo = cnn_downsample_tokens(x, params["conv_w"],
                                           params["conv_b"])

    # Gate stays on device; gating (including skip of gated-off blocks) is
    # applied inside the fused stage kernel via pl.when on the SMEM mask.
    gate = gumbel_softmax_hard(params["gumbel_gate"], gate_key, tau)
    tokens = levit_stage_fused(tokens, params, gate, num_heads, num_blocks)

    return tokens.reshape(B, Ho, Wo, C_out).transpose(0, 3, 1, 2)   # NCHW


# ----------------------------------------------------------------------------
# Deterministic parameter init (stacked per-block weights)
# ----------------------------------------------------------------------------
def init_params(key, dim, out_dim, num_heads, num_blocks):
    std = 0.02
    ks = jax.random.split(key, 5)
    nb, C = num_blocks, out_dim
    params = dict(
        conv_w=jax.random.normal(ks[0], (C, dim, 3, 3), jnp.float32) * std,
        conv_b=jnp.zeros((C,), jnp.float32),
        wqkv=jax.random.normal(ks[1], (nb, C, 3 * C), jnp.float32) * std,
        bqkv=jnp.zeros((nb, 3 * C), jnp.float32),
        wproj=jax.random.normal(ks[2], (nb, C, C), jnp.float32) * std,
        bproj=jnp.zeros((nb, C), jnp.float32),
        w1=jax.random.normal(ks[3], (nb, C, 2 * C), jnp.float32) * std,
        b1=jnp.zeros((nb, 2 * C), jnp.float32),
        w2=jax.random.normal(ks[4], (nb, 2 * C, C), jnp.float32) * std,
        b2=jnp.zeros((nb, C), jnp.float32),
        gumbel_gate=jnp.log(jnp.ones((nb,), jnp.float32) / nb),
    )
    return params


# ----------------------------------------------------------------------------
if __name__ == "__main__":
    # out_dim chosen as a multiple of 128 so token/weight stores are lane-dense
    dim, out_dim = 4, 128
    num_heads, num_blocks, num_select = 4, 2, 1
    B, H, W = 2, 16, 16

    root = jax.random.PRNGKey(0)
    k_x, k_par, k_gate = jax.random.split(root, 3)

    x = jax.random.normal(k_x, (B, dim, H, W), jnp.float32)
    params = init_params(k_par, dim, out_dim, num_heads, num_blocks)

    fwd = jax.jit(functools.partial(levit_stage_tinyfusion,
                                    num_heads=num_heads,
                                    num_blocks=num_blocks,
                                    tau=1.0))
    out = fwd(x, params, k_gate)
    out = jax.block_until_ready(out)

    assert out.shape == (B, out_dim, H // 2, W // 2), out.shape
    assert np.all(np.isfinite(np.asarray(out)))
    print("KERNEL_OK")
</pallas_src>

<mosaic_0001>
module attributes {stable_mosaic.version = 11 : i64} {
  func.func @_levit_stage_kernel(%arg0: i32, %arg1: memref<1x64x128xbf16, #tpu.memory_space<vmem>>, %arg2: memref<2x128x384xbf16, #tpu.memory_space<vmem>>, %arg3: memref<2x1x384xf32, #tpu.memory_space<vmem>>, %arg4: memref<2x128x128xbf16, #tpu.memory_space<vmem>>, %arg5: memref<2x1x128xf32, #tpu.memory_space<vmem>>, %arg6: memref<2x128x256xbf16, #tpu.memory_space<vmem>>, %arg7: memref<2x1x256xf32, #tpu.memory_space<vmem>>, %arg8: memref<2x256x128xbf16, #tpu.memory_space<vmem>>, %arg9: memref<2x1x128xf32, #tpu.memory_space<vmem>>, %arg10: memref<2xf32, #tpu.memory_space<smem>>, %arg11: memref<2xi32, #tpu.memory_space<smem>>, %arg12: memref<1x64x128xf32, #tpu.memory_space<vmem>>, %arg13: memref<64x128xf32, #tpu.memory_space<vmem>>) attributes {dimension_semantics = [#tpu.dimension_semantics<parallel>], iteration_bounds = array<i64: 2>, scalar_prefetch = 0 : i64, scratch_operands = 1 : i64, tpu.core_type = #tpu.core_type<tc>, window_params = [{transform_indices = @transform_0, window_bounds = array<i64: 1, 64, 128>}, {pipeline_mode = #tpu.pipeline_mode<synchronous>, transform_indices = @transform_1, window_bounds = array<i64: 2, 128, 384>}, {pipeline_mode = #tpu.pipeline_mode<synchronous>, transform_indices = @transform_2, window_bounds = array<i64: 2, 1, 384>}, {pipeline_mode = #tpu.pipeline_mode<synchronous>, transform_indices = @transform_3, window_bounds = array<i64: 2, 128, 128>}, {pipeline_mode = #tpu.pipeline_mode<synchronous>, transform_indices = @transform_4, window_bounds = array<i64: 2, 1, 128>}, {pipeline_mode = #tpu.pipeline_mode<synchronous>, transform_indices = @transform_5, window_bounds = array<i64: 2, 128, 256>}, {pipeline_mode = #tpu.pipeline_mode<synchronous>, transform_indices = @transform_6, window_bounds = array<i64: 2, 1, 256>}, {pipeline_mode = #tpu.pipeline_mode<synchronous>, transform_indices = @transform_7, window_bounds = array<i64: 2, 256, 128>}, {pipeline_mode = #tpu.pipeline_mode<synchronous>, transform_indices = @transform_8, window_bounds = array<i64: 2, 1, 128>}, {transform_indices = @transform_9, window_bounds = array<i64: 2>}, {transform_indices = @transform_10, window_bounds = array<i64: 2>}, {transform_indices = @transform_11, window_bounds = array<i64: 1, 64, 128>}]} {
    %c0 = arith.constant 0 : index
    %c0_0 = arith.constant 0 : index
    %c0_1 = arith.constant 0 : index
    %0 = vector.load %arg1[%c0, %c0_0, %c0_1] : memref<1x64x128xbf16, #tpu.memory_space<vmem>>, vector<1x64x128xbf16>
    %1 = vector.shape_cast %0 : vector<1x64x128xbf16> to vector<64x128xbf16>
    %2 = arith.extf %1 : vector<64x128xbf16> to vector<64x128xf32>
    %c0_2 = arith.constant 0 : index
    %c0_3 = arith.constant 0 : index
    %c0_4 = arith.constant 0 : index
    %3 = vector.load %arg12[%c0_2, %c0_3, %c0_4] : memref<1x64x128xf32, #tpu.memory_space<vmem>>, vector<1x64x128xf32>
    %4 = vector.shape_cast %3 : vector<1x64x128xf32> to vector<64x128xf32>
    %5 = vector.shape_cast %2 : vector<64x128xf32> to vector<1x64x128xf32>
    tpu.vector_store %arg12[%c0_2, %c0_3, %c0_4], %5 {strides = array<i32>} : memref<1x64x128xf32, #tpu.memory_space<vmem>>, vector<1x64x128xf32>,
    %c0_5 = arith.constant 0 : index
    %6 = memref.load %arg11[%c0_5] : memref<2xi32, #tpu.memory_space<smem>>
    %c0_i32 = arith.constant 0 : i32
    %7 = arith.cmpi ne, %6, %c0_i32 : i32
    %8 = arith.extui %7 : i1 to i32
    %c0_i32_6 = arith.constant 0 : i32
    %9 = arith.cmpi ne, %8, %c0_i32_6 : i32
    scf.if %9 {
      %c0_9 = arith.constant 0 : index
      %c0_10 = arith.constant 0 : index
      %c0_11 = arith.constant 0 : index
      %14 = vector.load %arg12[%c0_9, %c0_10, %c0_11] : memref<1x64x128xf32, #tpu.memory_space<vmem>>, vector<1x64x128xf32>
      %15 = vector.shape_cast %14 : vector<1x64x128xf32> to vector<64x128xf32>
      %16 = arith.truncf %15 : vector<64x128xf32> to vector<64x128xbf16>
      %c0_12 = arith.constant 0 : index
      %c0_13 = arith.constant 0 : index
      %c0_14 = arith.constant 0 : index
      %17 = vector.load %arg2[%c0_12, %c0_13, %c0_14] : memref<2x128x384xbf16, #tpu.memory_space<vmem>>, vector<1x128x384xbf16>
      %18 = vector.shape_cast %17 : vector<1x128x384xbf16> to vector<128x384xbf16>
      %cst = arith.constant dense<0.000000e+00> : vector<64x384xf32>
      %19 = tpu.matmul %16, %18, %cst {dimension_numbers = #tpu.dot_dimension_numbers<[1], [0], [0], [1], [0, 0, 1, 1], [], []>} : vector<64x128xbf16>, vector<128x384xbf16>, vector<64x384xf32> -> vector<64x384xf32>
      %c0_15 = arith.constant 0 : index
      %c0_16 = arith.constant 0 : index
      %c0_17 = arith.constant 0 : index
      %20 = vector.load %arg3[%c0_15, %c0_16, %c0_17] : memref<2x1x384xf32, #tpu.memory_space<vmem>>, vector<1x1x384xf32>
      %21 = vector.shape_cast %20 : vector<1x1x384xf32> to vector<1x384xf32>
      %22 = vector.broadcast %21 : vector<1x384xf32> to vector<64x384xf32>
      %23 = arith.addf %19, %22 : vector<64x384xf32>
      %24 = vector.extract_strided_slice %23 {offsets = [0, 0], sizes = [64, 32], strides = [1, 1]} : vector<64x384xf32> to vector<64x32xf32>
      %25 = arith.truncf %24 : vector<64x32xf32> to vector<64x32xbf16>
      %26 = vector.extract_strided_slice %23 {offsets = [0, 128], sizes = [64, 32], strides = [1, 1]} : vector<64x384xf32> to vector<64x32xf32>
      %27 = arith.truncf %26 : vector<64x32xf32> to vector<64x32xbf16>
      %28 = vector.extract_strided_slice %23 {offsets = [0, 256], sizes = [64, 32], strides = [1, 1]} : vector<64x384xf32> to vector<64x32xf32>
      %29 = arith.truncf %28 : vector<64x32xf32> to vector<64x32xbf16>
      %cst_18 = arith.constant dense<0.000000e+00> : vector<64x64xf32>
      %30 = tpu.matmul %25, %27, %cst_18 {dimension_numbers = #tpu.dot_dimension_numbers<[1], [1], [0], [0], [0, 0, 1, 0], [], []>} : vector<64x32xbf16>, vector<64x32xbf16>, vector<64x64xf32> -> vector<64x64xf32>
      %cst_19 = arith.constant 0.176776692 : f32
      %31 = vector.broadcast %cst_19 : f32 to vector<64x64xf32>
      %32 = arith.mulf %30, %31 : vector<64x64xf32>
      %cst_20 = arith.constant dense<0xFF800000> : vector<64xf32>
      %33 = vector.multi_reduction <maximumf>, %32, %cst_20 [1] : vector<64x64xf32> to vector<64xf32>
      %34 = vector.shape_cast %33 : vector<64xf32> to vector<64x1xf32>
      %35 = vector.broadcast %34 : vector<64x1xf32> to vector<64x64xf32>
      %36 = arith.subf %32, %35 : vector<64x64xf32>
      %37 = math.exp %36 : vector<64x64xf32>
      %cst_21 = arith.constant dense<0.000000e+00> : vector<64xf32>
      %38 = vector.multi_reduction <add>, %37, %cst_21 [1] : vector<64x64xf32> to vector<64xf32>
      %39 = vector.shape_cast %38 : vector<64xf32> to vector<64x1xf32>
      %40 = tpu.reciprocal %39 {approx = true} : vector<64x1xf32> -> vector<64x1xf32>
      %41 = vector.broadcast %40 : vector<64x1xf32> to vector<64x64xf32>
      %42 = arith.mulf %37, %41 : vector<64x64xf32>
      %43 = arith.truncf %42 : vector<64x64xf32> to vector<64x64xbf16>
      %cst_22 = arith.constant dense<0.000000e+00> : vector<64x32xf32>
      %44 = tpu.matmul %43, %29, %cst_22 {dimension_numbers = #tpu.dot_dimension_numbers<[1], [0], [0], [1], [0, 0, 1, 1], [], []>} : vector<64x64xbf16>, vector<64x32xbf16>, vector<64x32xf32> -> vector<64x32xf32>
      %c0_23 = arith.constant 0 : index
      %c0_24 = arith.constant 0 : index
      %45 = vector.load %arg13[%c0_23, %c0_24] : memref<64x128xf32, #tpu.memory_space<vmem>>, vector<64x32xf32>
      tpu.vector_store %arg13[%c0_23, %c0_24], %44 {strides = array<i32>} : memref<64x128xf32, #tpu.memory_space<vmem>>, vector<64x32xf32>,
      %46 = vector.extract_strided_slice %23 {offsets = [0, 32], sizes = [64, 32], strides = [1, 1]} : vector<64x384xf32> to vector<64x32xf32>
      %47 = arith.truncf %46 : vector<64x32xf32> to vector<64x32xbf16>
      %48 = vector.extract_strided_slice %23 {offsets = [0, 160], sizes = [64, 32], strides = [1, 1]} : vector<64x384xf32> to vector<64x32xf32>
      %49 = arith.truncf %48 : vector<64x32xf32> to vector<64x32xbf16>
      %50 = vector.extract_strided_slice %23 {offsets = [0, 288], sizes = [64, 32], strides = [1, 1]} : vector<64x384xf32> to vector<64x32xf32>
      %51 = arith.truncf %50 : vector<64x32xf32> to vector<64x32xbf16>
      %cst_25 = arith.constant dense<0.000000e+00> : vector<64x64xf32>
      %52 = tpu.matmul %47, %49, %cst_25 {dimension_numbers = #tpu.dot_dimension_numbers<[1], [1], [0], [0], [0, 0, 1, 0], [], []>} : vector<64x32xbf16>, vector<64x32xbf16>, vector<64x64xf32> -> vector<64x64xf32>
      %cst_26 = arith.constant 0.176776692 : f32
      %53 = vector.broadcast %cst_26 : f32 to vector<64x64xf32>
      %54 = arith.mulf %52, %53 : vector<64x64xf32>
      %cst_27 = arith.constant dense<0xFF800000> : vector<64xf32>
      %55 = vector.multi_reduction <maximumf>, %54, %cst_27 [1] : vector<64x64xf32> to vector<64xf32>
      %56 = vector.shape_cast %55 : vector<64xf32> to vector<64x1xf32>
      %57 = vector.broadcast %56 : vector<64x1xf32> to vector<64x64xf32>
      %58 = arith.subf %54, %57 : vector<64x64xf32>
      %59 = math.exp %58 : vector<64x64xf32>
      %cst_28 = arith.constant dense<0.000000e+00> : vector<64xf32>
      %60 = vector.multi_reduction <add>, %59, %cst_28 [1] : vector<64x64xf32> to vector<64xf32>
      %61 = vector.shape_cast %60 : vector<64xf32> to vector<64x1xf32>
      %62 = tpu.reciprocal %61 {approx = true} : vector<64x1xf32> -> vector<64x1xf32>
      %63 = vector.broadcast %62 : vector<64x1xf32> to vector<64x64xf32>
      %64 = arith.mulf %59, %63 : vector<64x64xf32>
      %65 = arith.truncf %64 : vector<64x64xf32> to vector<64x64xbf16>
      %cst_29 = arith.constant dense<0.000000e+00> : vector<64x32xf32>
      %66 = tpu.matmul %65, %51, %cst_29 {dimension_numbers = #tpu.dot_dimension_numbers<[1], [0], [0], [1], [0, 0, 1, 1], [], []>} : vector<64x64xbf16>, vector<64x32xbf16>, vector<64x32xf32> -> vector<64x32xf32>
      %c0_30 = arith.constant 0 : index
      %c32 = arith.constant 32 : index
      %67 = vector.load %arg13[%c0_30, %c32] : memref<64x128xf32, #tpu.memory_space<vmem>>, vector<64x32xf32>
      tpu.vector_store %arg13[%c0_30, %c32], %66 {strides = array<i32>} : memref<64x128xf32, #tpu.memory_space<vmem>>, vector<64x32xf32>,
      %68 = vector.extract_strided_slice %23 {offsets = [0, 64], sizes = [64, 32], strides = [1, 1]} : vector<64x384xf32> to vector<64x32xf32>
      %69 = arith.truncf %68 : vector<64x32xf32> to vector<64x32xbf16>
      %70 = vector.extract_strided_slice %23 {offsets = [0, 192], sizes = [64, 32], strides = [1, 1]} : vector<64x384xf32> to vector<64x32xf32>
      %71 = arith.truncf %70 : vector<64x32xf32> to vector<64x32xbf16>
      %72 = vector.extract_strided_slice %23 {offsets = [0, 320], sizes = [64, 32], strides = [1, 1]} : vector<64x384xf32> to vector<64x32xf32>
      %73 = arith.truncf %72 : vector<64x32xf32> to vector<64x32xbf16>
      %cst_31 = arith.constant dense<0.000000e+00> : vector<64x64xf32>
      %74 = tpu.matmul %69, %71, %cst_31 {dimension_numbers = #tpu.dot_dimension_numbers<[1], [1], [0], [0], [0, 0, 1, 0], [], []>} : vector<64x32xbf16>, vector<64x32xbf16>, vector<64x64xf32> -> vector<64x64xf32>
      %cst_32 = arith.constant 0.176776692 : f32
      %75 = vector.broadcast %cst_32 : f32 to vector<64x64xf32>
      %76 = arith.mulf %74, %75 : vector<64x64xf32>
      %cst_33 = arith.constant dense<0xFF800000> : vector<64xf32>
      %77 = vector.multi_reduction <maximumf>, %76, %cst_33 [1] : vector<64x64xf32> to vector<64xf32>
      %78 = vector.shape_cast %77 : vector<64xf32> to vector<64x1xf32>
      %79 = vector.broadcast %78 : vector<64x1xf32> to vector<64x64xf32>
      %80 = arith.subf %76, %79 : vector<64x64xf32>
      %81 = math.exp %80 : vector<64x64xf32>
      %cst_34 = arith.constant dense<0.000000e+00> : vector<64xf32>
      %82 = vector.multi_reduction <add>, %81, %cst_34 [1] : vector<64x64xf32> to vector<64xf32>
      %83 = vector.shape_cast %82 : vector<64xf32> to vector<64x1xf32>
      %84 = tpu.reciprocal %83 {approx = true} : vector<64x1xf32> -> vector<64x1xf32>
      %85 = vector.broadcast %84 : vector<64x1xf32> to vector<64x64xf32>
      %86 = arith.mulf %81, %85 : vector<64x64xf32>
      %87 = arith.truncf %86 : vector<64x64xf32> to vector<64x64xbf16>
      %cst_35 = arith.constant dense<0.000000e+00> : vector<64x32xf32>
      %88 = tpu.matmul %87, %73, %cst_35 {dimension_numbers = #tpu.dot_dimension_numbers<[1], [0], [0], [1], [0, 0, 1, 1], [], []>} : vector<64x64xbf16>, vector<64x32xbf16>, vector<64x32xf32> -> vector<64x32xf32>
      %c0_36 = arith.constant 0 : index
      %c64 = arith.constant 64 : index
      %89 = vector.load %arg13[%c0_36, %c64] : memref<64x128xf32, #tpu.memory_space<vmem>>, vector<64x32xf32>
      tpu.vector_store %arg13[%c0_36, %c64], %88 {strides = array<i32>} : memref<64x128xf32, #tpu.memory_space<vmem>>, vector<64x32xf32>,
      %90 = vector.extract_strided_slice %23 {offsets = [0, 96], sizes = [64, 32], strides = [1, 1]} : vector<64x384xf32> to vector<64x32xf32>
      %91 = arith.truncf %90 : vector<64x32xf32> to vector<64x32xbf16>
      %92 = vector.extract_strided_slice %23 {offsets = [0, 224], sizes = [64, 32], strides = [1, 1]} : vector<64x384xf32> to vector<64x32xf32>
      %93 = arith.truncf %92 : vector<64x32xf32> to vector<64x32xbf16>
      %94 = vector.extract_strided_slice %23 {offsets = [0, 352], sizes = [64, 32], strides = [1, 1]} : vector<64x384xf32> to vector<64x32xf32>
      %95 = arith.truncf %94 : vector<64x32xf32> to vector<64x32xbf16>
      %cst_37 = arith.constant dense<0.000000e+00> : vector<64x64xf32>
      %96 = tpu.matmul %91, %93, %cst_37 {dimension_numbers = #tpu.dot_dimension_numbers<[1], [1], [0], [0], [0, 0, 1, 0], [], []>} : vector<64x32xbf16>, vector<64x32xbf16>, vector<64x64xf32> -> vector<64x64xf32>
      %cst_38 = arith.constant 0.176776692 : f32
      %97 = vector.broadcast %cst_38 : f32 to vector<64x64xf32>
      %98 = arith.mulf %96, %97 : vector<64x64xf32>
      %cst_39 = arith.constant dense<0xFF800000> : vector<64xf32>
      %99 = vector.multi_reduction <maximumf>, %98, %cst_39 [1] : vector<64x64xf32> to vector<64xf32>
      %100 = vector.shape_cast %99 : vector<64xf32> to vector<64x1xf32>
      %101 = vector.broadcast %100 : vector<64x1xf32> to vector<64x64xf32>
      %102 = arith.subf %98, %101 : vector<64x64xf32>
      %103 = math.exp %102 : vector<64x64xf32>
      %cst_40 = arith.constant dense<0.000000e+00> : vector<64xf32>
      %104 = vector.multi_reduction <add>, %103, %cst_40 [1] : vector<64x64xf32> to vector<64xf32>
      %105 = vector.shape_cast %104 : vector<64xf32> to vector<64x1xf32>
      %106 = tpu.reciprocal %105 {approx = true} : vector<64x1xf32> -> vector<64x1xf32>
      %107 = vector.broadcast %106 : vector<64x1xf32> to vector<64x64xf32>
      %108 = arith.mulf %103, %107 : vector<64x64xf32>
      %109 = arith.truncf %108 : vector<64x64xf32> to vector<64x64xbf16>
      %cst_41 = arith.constant dense<0.000000e+00> : vector<64x32xf32>
      %110 = tpu.matmul %109, %95, %cst_41 {dimension_numbers = #tpu.dot_dimension_numbers<[1], [0], [0], [1], [0, 0, 1, 1], [], []>} : vector<64x64xbf16>, vector<64x32xbf16>, vector<64x32xf32> -> vector<64x32xf32>
      %c0_42 = arith.constant 0 : index
      %c96 = arith.constant 96 : index
      %111 = vector.load %arg13[%c0_42, %c96] : memref<64x128xf32, #tpu.memory_space<vmem>>, vector<64x32xf32>
      tpu.vector_store %arg13[%c0_42, %c96], %110 {strides = array<i32>} : memref<64x128xf32, #tpu.memory_space<vmem>>, vector<64x32xf32>,
      %c0_43 = arith.constant 0 : index
      %c0_44 = arith.constant 0 : index
      %112 = vector.load %arg13[%c0_43, %c0_44] : memref<64x128xf32, #tpu.memory_space<vmem>>, vector<64x128xf32>
      %113 = arith.truncf %112 : vector<64x128xf32> to vector<64x128xbf16>
      %c0_45 = arith.constant 0 : index
      %c0_46 = arith.constant 0 : index
      %c0_47 = arith.constant 0 : index
      %114 = vector.load %arg4[%c0_45, %c0_46, %c0_47] : memref<2x128x128xbf16, #tpu.memory_space<vmem>>, vector<1x128x128xbf16>
      %115 = vector.shape_cast %114 : vector<1x128x128xbf16> to vector<128x128xbf16>
      %cst_48 = arith.constant dense<0.000000e+00> : vector<64x128xf32>
      %116 = tpu.matmul %113, %115, %cst_48 {dimension_numbers = #tpu.dot_dimension_numbers<[1], [0], [0], [1], [0, 0, 1, 1], [], []>} : vector<64x128xbf16>, vector<128x128xbf16>, vector<64x128xf32> -> vector<64x128xf32>
      %117 = arith.addf %15, %116 : vector<64x128xf32>
      %c0_49 = arith.constant 0 : index
      %c0_50 = arith.constant 0 : index
      %c0_51 = arith.constant 0 : index
      %118 = vector.load %arg5[%c0_49, %c0_50, %c0_51] : memref<2x1x128xf32, #tpu.memory_space<vmem>>, vector<1x1x128xf32>
      %119 = vector.shape_cast %118 : vector<1x1x128xf32> to vector<1x128xf32>
      %120 = vector.broadcast %119 : vector<1x128xf32> to vector<64x128xf32>
      %121 = arith.addf %117, %120 : vector<64x128xf32>
      %122 = arith.truncf %121 : vector<64x128xf32> to vector<64x128xbf16>
      %c0_52 = arith.constant 0 : index
      %c0_53 = arith.constant 0 : index
      %c0_54 = arith.constant 0 : index
      %123 = vector.load %arg6[%c0_52, %c0_53, %c0_54] : memref<2x128x256xbf16, #tpu.memory_space<vmem>>, vector<1x128x256xbf16>
      %124 = vector.shape_cast %123 : vector<1x128x256xbf16> to vector<128x256xbf16>
      %cst_55 = arith.constant dense<0.000000e+00> : vector<64x256xf32>
      %125 = tpu.matmul %122, %124, %cst_55 {dimension_numbers = #tpu.dot_dimension_numbers<[1], [0], [0], [1], [0, 0, 1, 1], [], []>} : vector<64x128xbf16>, vector<128x256xbf16>, vector<64x256xf32> -> vector<64x256xf32>
      %c0_56 = arith.constant 0 : index
      %c0_57 = arith.constant 0 : index
      %c0_58 = arith.constant 0 : index
      %126 = vector.load %arg7[%c0_56, %c0_57, %c0_58] : memref<2x1x256xf32, #tpu.memory_space<vmem>>, vector<1x1x256xf32>
      %127 = vector.shape_cast %126 : vector<1x1x256xf32> to vector<1x256xf32>
      %128 = vector.broadcast %127 : vector<1x256xf32> to vector<64x256xf32>
      %129 = arith.addf %125, %128 : vector<64x256xf32>
      %cst_59 = arith.constant 3.000000e+00 : f32
      %130 = vector.broadcast %cst_59 : f32 to vector<64x256xf32>
      %131 = arith.addf %129, %130 : vector<64x256xf32>
      %cst_60 = arith.constant 0.000000e+00 : f32
      %cst_61 = arith.constant 6.000000e+00 : f32
      %132 = vector.broadcast %cst_60 : f32 to vector<64x256xf32>
      %133 = arith.maximumf %132, %131 : vector<64x256xf32>
      %134 = vector.broadcast %cst_61 : f32 to vector<64x256xf32>
      %135 = arith.minimumf %134, %133 : vector<64x256xf32>
      %136 = arith.mulf %129, %135 : vector<64x256xf32>
      %cst_62 = arith.constant 0.166666672 : f32
      %137 = vector.broadcast %cst_62 : f32 to vector<64x256xf32>
      %138 = arith.mulf %136, %137 : vector<64x256xf32>
      %139 = arith.truncf %138 : vector<64x256xf32> to vector<64x256xbf16>
      %c0_63 = arith.constant 0 : index
      %c0_64 = arith.constant 0 : index
      %c0_65 = arith.constant 0 : index
      %140 = vector.load %arg8[%c0_63, %c0_64, %c0_65] : memref<2x256x128xbf16, #tpu.memory_space<vmem>>, vector<1x256x128xbf16>
      %141 = vector.shape_cast %140 : vector<1x256x128xbf16> to vector<256x128xbf16>
      %cst_66 = arith.constant dense<0.000000e+00> : vector<64x128xf32>
      %142 = tpu.matmul %139, %141, %cst_66 {dimension_numbers = #tpu.dot_dimension_numbers<[1], [0], [0], [1], [0, 0, 1, 1], [], []>} : vector<64x256xbf16>, vector<256x128xbf16>, vector<64x128xf32> -> vector<64x128xf32>
      %143 = arith.addf %121, %142 : vector<64x128xf32>
      %c0_67 = arith.constant 0 : index
      %c0_68 = arith.constant 0 : index
      %c0_69 = arith.constant 0 : index
      %144 = vector.load %arg9[%c0_67, %c0_68, %c0_69] : memref<2x1x128xf32, #tpu.memory_space<vmem>>, vector<1x1x128xf32>
      %145 = vector.shape_cast %144 : vector<1x1x128xf32> to vector<1x128xf32>
      %146 = vector.broadcast %145 : vector<1x128xf32> to vector<64x128xf32>
      %147 = arith.addf %143, %146 : vector<64x128xf32>
      %c0_70 = arith.constant 0 : index
      %148 = memref.load %arg10[%c0_70] : memref<2xf32, #tpu.memory_space<smem>>
      %149 = vector.broadcast %148 : f32 to vector<64x128xf32>
      %150 = arith.mulf %149, %147 : vector<64x128xf32>
      %151 = arith.addf %15, %150 : vector<64x128xf32>
      %c0_71 = arith.constant 0 : index
      %c0_72 = arith.constant 0 : index
      %c0_73 = arith.constant 0 : index
      %152 = vector.load %arg12[%c0_71, %c0_72, %c0_73] : memref<1x64x128xf32, #tpu.memory_space<vmem>>, vector<1x64x128xf32>
      %153 = vector.shape_cast %152 : vector<1x64x128xf32> to vector<64x128xf32>
      %154 = vector.shape_cast %151 : vector<64x128xf32> to vector<1x64x128xf32>
      tpu.vector_store %arg12[%c0_71, %c0_72, %c0_73], %154 {strides = array<i32>} : memref<1x64x128xf32, #tpu.memory_space<vmem>>, vector<1x64x128xf32>,
    } else {
    }
    %c1 = arith.constant 1 : index
    %10 = memref.load %arg11[%c1] : memref<2xi32, #tpu.memory_space<smem>>
    %c0_i32_7 = arith.constant 0 : i32
    %11 = arith.cmpi ne, %10, %c0_i32_7 : i32
    %12 = arith.extui %11 : i1 to i32
    %c0_i32_8 = arith.constant 0 : i32
    %13 = arith.cmpi ne, %12, %c0_i32_8 : i32
    scf.if %13 {
      %c0_9 = arith.constant 0 : index
      %c0_10 = arith.constant 0 : index
      %c0_11 = arith.constant 0 : index
      %14 = vector.load %arg12[%c0_9, %c0_10, %c0_11] : memref<1x64x128xf32, #tpu.memory_space<vmem>>, vector<1x64x128xf32>
      %15 = vector.shape_cast %14 : vector<1x64x128xf32> to vector<64x128xf32>
      %16 = arith.truncf %15 : vector<64x128xf32> to vector<64x128xbf16>
      %c1_12 = arith.constant 1 : index
      %c0_13 = arith.constant 0 : index
      %c0_14 = arith.constant 0 : index
      %17 = vector.load %arg2[%c1_12, %c0_13, %c0_14] : memref<2x128x384xbf16, #tpu.memory_space<vmem>>, vector<1x128x384xbf16>
      %18 = vector.shape_cast %17 : vector<1x128x384xbf16> to vector<128x384xbf16>
      %cst = arith.constant dense<0.000000e+00> : vector<64x384xf32>
      %19 = tpu.matmul %16, %18, %cst {dimension_numbers = #tpu.dot_dimension_numbers<[1], [0], [0], [1], [0, 0, 1, 1], [], []>} : vector<64x128xbf16>, vector<128x384xbf16>, vector<64x384xf32> -> vector<64x384xf32>
      %c1_15 = arith.constant 1 : index
      %c0_16 = arith.constant 0 : index
      %c0_17 = arith.constant 0 : index
      %20 = vector.load %arg3[%c1_15, %c0_16, %c0_17] : memref<2x1x384xf32, #tpu.memory_space<vmem>>, vector<1x1x384xf32>
      %21 = vector.shape_cast %20 : vector<1x1x384xf32> to vector<1x384xf32>
      %22 = vector.broadcast %21 : vector<1x384xf32> to vector<64x384xf32>
      %23 = arith.addf %19, %22 : vector<64x384xf32>
      %24 = vector.extract_strided_slice %23 {offsets = [0, 0], sizes = [64, 32], strides = [1, 1]} : vector<64x384xf32> to vector<64x32xf32>
      %25 = arith.truncf %24 : vector<64x32xf32> to vector<64x32xbf16>
      %26 = vector.extract_strided_slice %23 {offsets = [0, 128], sizes = [64, 32], strides = [1, 1]} : vector<64x384xf32> to vector<64x32xf32>
      %27 = arith.truncf %26 : vector<64x32xf32> to vector<64x32xbf16>
      %28 = vector.extract_strided_slice %23 {offsets = [0, 256], sizes = [64, 32], strides = [1, 1]} : vector<64x384xf32> to vector<64x32xf32>
      %29 = arith.truncf %28 : vector<64x32xf32> to vector<64x32xbf16>
      %cst_18 = arith.constant dense<0.000000e+00> : vector<64x64xf32>
      %30 = tpu.matmul %25, %27, %cst_18 {dimension_numbers = #tpu.dot_dimension_numbers<[1], [1], [0], [0], [0, 0, 1, 0], [], []>} : vector<64x32xbf16>, vector<64x32xbf16>, vector<64x64xf32> -> vector<64x64xf32>
      %cst_19 = arith.constant 0.176776692 : f32
      %31 = vector.broadcast %cst_19 : f32 to vector<64x64xf32>
      %32 = arith.mulf %30, %31 : vector<64x64xf32>
      %cst_20 = arith.constant dense<0xFF800000> : vector<64xf32>
      %33 = vector.multi_reduction <maximumf>, %32, %cst_20 [1] : vector<64x64xf32> to vector<64xf32>
      %34 = vector.shape_cast %33 : vector<64xf32> to vector<64x1xf32>
      %35 = vector.broadcast %34 : vector<64x1xf32> to vector<64x64xf32>
      %36 = arith.subf %32, %35 : vector<64x64xf32>
      %37 = math.exp %36 : vector<64x64xf32>
      %cst_21 = arith.constant dense<0.000000e+00> : vector<64xf32>
      %38 = vector.multi_reduction <add>, %37, %cst_21 [1] : vector<64x64xf32> to vector<64xf32>
      %39 = vector.shape_cast %38 : vector<64xf32> to vector<64x1xf32>
      %40 = tpu.reciprocal %39 {approx = true} : vector<64x1xf32> -> vector<64x1xf32>
      %41 = vector.broadcast %40 : vector<64x1xf32> to vector<64x64xf32>
      %42 = arith.mulf %37, %41 : vector<64x64xf32>
      %43 = arith.truncf %42 : vector<64x64xf32> to vector<64x64xbf16>
      %cst_22 = arith.constant dense<0.000000e+00> : vector<64x32xf32>
      %44 = tpu.matmul %43, %29, %cst_22 {dimension_numbers = #tpu.dot_dimension_numbers<[1], [0], [0], [1], [0, 0, 1, 1], [], []>} : vector<64x64xbf16>, vector<64x32xbf16>, vector<64x32xf32> -> vector<64x32xf32>
      %c0_23 = arith.constant 0 : index
      %c0_24 = arith.constant 0 : index
      %45 = vector.load %arg13[%c0_23, %c0_24] : memref<64x128xf32, #tpu.memory_space<vmem>>, vector<64x32xf32>
      tpu.vector_store %arg13[%c0_23, %c0_24], %44 {strides = array<i32>} : memref<64x128xf32, #tpu.memory_space<vmem>>, vector<64x32xf32>,
      %46 = vector.extract_strided_slice %23 {offsets = [0, 32], sizes = [64, 32], strides = [1, 1]} : vector<64x384xf32> to vector<64x32xf32>
      %47 = arith.truncf %46 : vector<64x32xf32> to vector<64x32xbf16>
      %48 = vector.extract_strided_slice %23 {offsets = [0, 160], sizes = [64, 32], strides = [1, 1]} : vector<64x384xf32> to vector<64x32xf32>
      %49 = arith.truncf %48 : vector<64x32xf32> to vector<64x32xbf16>
      %50 = vector.extract_strided_slice %23 {offsets = [0, 288], sizes = [64, 32], strides = [1, 1]} : vector<64x384xf32> to vector<64x32xf32>
      %51 = arith.truncf %50 : vector<64x32xf32> to vector<64x32xbf16>
      %cst_25 = arith.constant dense<0.000000e+00> : vector<64x64xf32>
      %52 = tpu.matmul %47, %49, %cst_25 {dimension_numbers = #tpu.dot_dimension_numbers<[1], [1], [0], [0], [0, 0, 1, 0], [], []>} : vector<64x32xbf16>, vector<64x32xbf16>, vector<64x64xf32> -> vector<64x64xf32>
      %cst_26 = arith.constant 0.176776692 : f32
      %53 = vector.broadcast %cst_26 : f32 to vector<64x64xf32>
      %54 = arith.mulf %52, %53 : vector<64x64xf32>
      %cst_27 = arith.constant dense<0xFF800000> : vector<64xf32>
      %55 = vector.multi_reduction <maximumf>, %54, %cst_27 [1] : vector<64x64xf32> to vector<64xf32>
      %56 = vector.shape_cast %55 : vector<64xf32> to vector<64x1xf32>
      %57 = vector.broadcast %56 : vector<64x1xf32> to vector<64x64xf32>
      %58 = arith.subf %54, %57 : vector<64x64xf32>
      %59 = math.exp %58 : vector<64x64xf32>
      %cst_28 = arith.constant dense<0.000000e+00> : vector<64xf32>
      %60 = vector.multi_reduction <add>, %59, %cst_28 [1] : vector<64x64xf32> to vector<64xf32>
      %61 = vector.shape_cast %60 : vector<64xf32> to vector<64x1xf32>
      %62 = tpu.reciprocal %61 {approx = true} : vector<64x1xf32> -> vector<64x1xf32>
      %63 = vector.broadcast %62 : vector<64x1xf32> to vector<64x64xf32>
      %64 = arith.mulf %59, %63 : vector<64x64xf32>
      %65 = arith.truncf %64 : vector<64x64xf32> to vector<64x64xbf16>
      %cst_29 = arith.constant dense<0.000000e+00> : vector<64x32xf32>
      %66 = tpu.matmul %65, %51, %cst_29 {dimension_numbers = #tpu.dot_dimension_numbers<[1], [0], [0], [1], [0, 0, 1, 1], [], []>} : vector<64x64xbf16>, vector<64x32xbf16>, vector<64x32xf32> -> vector<64x32xf32>
      %c0_30 = arith.constant 0 : index
      %c32 = arith.constant 32 : index
      %67 = vector.load %arg13[%c0_30, %c32] : memref<64x128xf32, #tpu.memory_space<vmem>>, vector<64x32xf32>
      tpu.vector_store %arg13[%c0_30, %c32], %66 {strides = array<i32>} : memref<64x128xf32, #tpu.memory_space<vmem>>, vector<64x32xf32>,
      %68 = vector.extract_strided_slice %23 {offsets = [0, 64], sizes = [64, 32], strides = [1, 1]} : vector<64x384xf32> to vector<64x32xf32>
      %69 = arith.truncf %68 : vector<64x32xf32> to vector<64x32xbf16>
      %70 = vector.extract_strided_slice %23 {offsets = [0, 192], sizes = [64, 32], strides = [1, 1]} : vector<64x384xf32> to vector<64x32xf32>
      %71 = arith.truncf %70 : vector<64x32xf32> to vector<64x32xbf16>
      %72 = vector.extract_strided_slice %23 {offsets = [0, 320], sizes = [64, 32], strides = [1, 1]} : vector<64x384xf32> to vector<64x32xf32>
      %73 = arith.truncf %72 : vector<64x32xf32> to vector<64x32xbf16>
      %cst_31 = arith.constant dense<0.000000e+00> : vector<64x64xf32>
      %74 = tpu.matmul %69, %71, %cst_31 {dimension_numbers = #tpu.dot_dimension_numbers<[1], [1], [0], [0], [0, 0, 1, 0], [], []>} : vector<64x32xbf16>, vector<64x32xbf16>, vector<64x64xf32> -> vector<64x64xf32>
      %cst_32 = arith.constant 0.176776692 : f32
      %75 = vector.broadcast %cst_32 : f32 to vector<64x64xf32>
      %76 = arith.mulf %74, %75 : vector<64x64xf32>
      %cst_33 = arith.constant dense<0xFF800000> : vector<64xf32>
      %77 = vector.multi_reduction <maximumf>, %76, %cst_33 [1] : vector<64x64xf32> to vector<64xf32>
      %78 = vector.shape_cast %77 : vector<64xf32> to vector<64x1xf32>
      %79 = vector.broadcast %78 : vector<64x1xf32> to vector<64x64xf32>
      %80 = arith.subf %76, %79 : vector<64x64xf32>
      %81 = math.exp %80 : vector<64x64xf32>
      %cst_34 = arith.constant dense<0.000000e+00> : vector<64xf32>
      %82 = vector.multi_reduction <add>, %81, %cst_34 [1] : vector<64x64xf32> to vector<64xf32>
      %83 = vector.shape_cast %82 : vector<64xf32> to vector<64x1xf32>
      %84 = tpu.reciprocal %83 {approx = true} : vector<64x1xf32> -> vector<64x1xf32>
      %85 = vector.broadcast %84 : vector<64x1xf32> to vector<64x64xf32>
      %86 = arith.mulf %81, %85 : vector<64x64xf32>
      %87 = arith.truncf %86 : vector<64x64xf32> to vector<64x64xbf16>
      %cst_35 = arith.constant dense<0.000000e+00> : vector<64x32xf32>
      %88 = tpu.matmul %87, %73, %cst_35 {dimension_numbers = #tpu.dot_dimension_numbers<[1], [0], [0], [1], [0, 0, 1, 1], [], []>} : vector<64x64xbf16>, vector<64x32xbf16>, vector<64x32xf32> -> vector<64x32xf32>
      %c0_36 = arith.constant 0 : index
      %c64 = arith.constant 64 : index
      %89 = vector.load %arg13[%c0_36, %c64] : memref<64x128xf32, #tpu.memory_space<vmem>>, vector<64x32xf32>
      tpu.vector_store %arg13[%c0_36, %c64], %88 {strides = array<i32>} : memref<64x128xf32, #tpu.memory_space<vmem>>, vector<64x32xf32>,
      %90 = vector.extract_strided_slice %23 {offsets = [0, 96], sizes = [64, 32], strides = [1, 1]} : vector<64x384xf32> to vector<64x32xf32>
      %91 = arith.truncf %90 : vector<64x32xf32> to vector<64x32xbf16>
      %92 = vector.extract_strided_slice %23 {offsets = [0, 224], sizes = [64, 32], strides = [1, 1]} : vector<64x384xf32> to vector<64x32xf32>
      %93 = arith.truncf %92 : vector<64x32xf32> to vector<64x32xbf16>
      %94 = vector.extract_strided_slice %23 {offsets = [0, 352], sizes = [64, 32], strides = [1, 1]} : vector<64x384xf32> to vector<64x32xf32>
      %95 = arith.truncf %94 : vector<64x32xf32> to vector<64x32xbf16>
      %cst_37 = arith.constant dense<0.000000e+00> : vector<64x64xf32>
      %96 = tpu.matmul %91, %93, %cst_37 {dimension_numbers = #tpu.dot_dimension_numbers<[1], [1], [0], [0], [0, 0, 1, 0], [], []>} : vector<64x32xbf16>, vector<64x32xbf16>, vector<64x64xf32> -> vector<64x64xf32>
      %cst_38 = arith.constant 0.176776692 : f32
      %97 = vector.broadcast %cst_38 : f32 to vector<64x64xf32>
      %98 = arith.mulf %96, %97 : vector<64x64xf32>
      %cst_39 = arith.constant dense<0xFF800000> : vector<64xf32>
      %99 = vector.multi_reduction <maximumf>, %98, %cst_39 [1] : vector<64x64xf32> to vector<64xf32>
      %100 = vector.shape_cast %99 : vector<64xf32> to vector<64x1xf32>
      %101 = vector.broadcast %100 : vector<64x1xf32> to vector<64x64xf32>
      %102 = arith.subf %98, %101 : vector<64x64xf32>
      %103 = math.exp %102 : vector<64x64xf32>
      %cst_40 = arith.constant dense<0.000000e+00> : vector<64xf32>
      %104 = vector.multi_reduction <add>, %103, %cst_40 [1] : vector<64x64xf32> to vector<64xf32>
      %105 = vector.shape_cast %104 : vector<64xf32> to vector<64x1xf32>
      %106 = tpu.reciprocal %105 {approx = true} : vector<64x1xf32> -> vector<64x1xf32>
      %107 = vector.broadcast %106 : vector<64x1xf32> to vector<64x64xf32>
      %108 = arith.mulf %103, %107 : vector<64x64xf32>
      %109 = arith.truncf %108 : vector<64x64xf32> to vector<64x64xbf16>
      %cst_41 = arith.constant dense<0.000000e+00> : vector<64x32xf32>
      %110 = tpu.matmul %109, %95, %cst_41 {dimension_numbers = #tpu.dot_dimension_numbers<[1], [0], [0], [1], [0, 0, 1, 1], [], []>} : vector<64x64xbf16>, vector<64x32xbf16>, vector<64x32xf32> -> vector<64x32xf32>
      %c0_42 = arith.constant 0 : index
      %c96 = arith.constant 96 : index
      %111 = vector.load %arg13[%c0_42, %c96] : memref<64x128xf32, #tpu.memory_space<vmem>>, vector<64x32xf32>
      tpu.vector_store %arg13[%c0_42, %c96], %110 {strides = array<i32>} : memref<64x128xf32, #tpu.memory_space<vmem>>, vector<64x32xf32>,
      %c0_43 = arith.constant 0 : index
      %c0_44 = arith.constant 0 : index
      %112 = vector.load %arg13[%c0_43, %c0_44] : memref<64x128xf32, #tpu.memory_space<vmem>>, vector<64x128xf32>
      %113 = arith.truncf %112 : vector<64x128xf32> to vector<64x128xbf16>
      %c1_45 = arith.constant 1 : index
      %c0_46 = arith.constant 0 : index
      %c0_47 = arith.constant 0 : index
      %114 = vector.load %arg4[%c1_45, %c0_46, %c0_47] : memref<2x128x128xbf16, #tpu.memory_space<vmem>>, vector<1x128x128xbf16>
      %115 = vector.shape_cast %114 : vector<1x128x128xbf16> to vector<128x128xbf16>
      %cst_48 = arith.constant dense<0.000000e+00> : vector<64x128xf32>
      %116 = tpu.matmul %113, %115, %cst_48 {dimension_numbers = #tpu.dot_dimension_numbers<[1], [0], [0], [1], [0, 0, 1, 1], [], []>} : vector<64x128xbf16>, vector<128x128xbf16>, vector<64x128xf32> -> vector<64x128xf32>
      %117 = arith.addf %15, %116 : vector<64x128xf32>
      %c1_49 = arith.constant 1 : index
      %c0_50 = arith.constant 0 : index
      %c0_51 = arith.constant 0 : index
      %118 = vector.load %arg5[%c1_49, %c0_50, %c0_51] : memref<2x1x128xf32, #tpu.memory_space<vmem>>, vector<1x1x128xf32>
      %119 = vector.shape_cast %118 : vector<1x1x128xf32> to vector<1x128xf32>
      %120 = vector.broadcast %119 : vector<1x128xf32> to vector<64x128xf32>
      %121 = arith.addf %117, %120 : vector<64x128xf32>
      %122 = arith.truncf %121 : vector<64x128xf32> to vector<64x128xbf16>
      %c1_52 = arith.constant 1 : index
      %c0_53 = arith.constant 0 : index
      %c0_54 = arith.constant 0 : index
      %123 = vector.load %arg6[%c1_52, %c0_53, %c0_54] : memref<2x128x256xbf16, #tpu.memory_space<vmem>>, vector<1x128x256xbf16>
      %124 = vector.shape_cast %123 : vector<1x128x256xbf16> to vector<128x256xbf16>
      %cst_55 = arith.constant dense<0.000000e+00> : vector<64x256xf32>
      %125 = tpu.matmul %122, %124, %cst_55 {dimension_numbers = #tpu.dot_dimension_numbers<[1], [0], [0], [1], [0, 0, 1, 1], [], []>} : vector<64x128xbf16>, vector<128x256xbf16>, vector<64x256xf32> -> vector<64x256xf32>
      %c1_56 = arith.constant 1 : index
      %c0_57 = arith.constant 0 : index
      %c0_58 = arith.constant 0 : index
      %126 = vector.load %arg7[%c1_56, %c0_57, %c0_58] : memref<2x1x256xf32, #tpu.memory_space<vmem>>, vector<1x1x256xf32>
      %127 = vector.shape_cast %126 : vector<1x1x256xf32> to vector<1x256xf32>
      %128 = vector.broadcast %127 : vector<1x256xf32> to vector<64x256xf32>
      %129 = arith.addf %125, %128 : vector<64x256xf32>
      %cst_59 = arith.constant 3.000000e+00 : f32
      %130 = vector.broadcast %cst_59 : f32 to vector<64x256xf32>
      %131 = arith.addf %129, %130 : vector<64x256xf32>
      %cst_60 = arith.constant 0.000000e+00 : f32
      %cst_61 = arith.constant 6.000000e+00 : f32
      %132 = vector.broadcast %cst_60 : f32 to vector<64x256xf32>
      %133 = arith.maximumf %132, %131 : vector<64x256xf32>
      %134 = vector.broadcast %cst_61 : f32 to vector<64x256xf32>
      %135 = arith.minimumf %134, %133 : vector<64x256xf32>
      %136 = arith.mulf %129, %135 : vector<64x256xf32>
      %cst_62 = arith.constant 0.166666672 : f32
      %137 = vector.broadcast %cst_62 : f32 to vector<64x256xf32>
      %138 = arith.mulf %136, %137 : vector<64x256xf32>
      %139 = arith.truncf %138 : vector<64x256xf32> to vector<64x256xbf16>
      %c1_63 = arith.constant 1 : index
      %c0_64 = arith.constant 0 : index
      %c0_65 = arith.constant 0 : index
      %140 = vector.load %arg8[%c1_63, %c0_64, %c0_65] : memref<2x256x128xbf16, #tpu.memory_space<vmem>>, vector<1x256x128xbf16>
      %141 = vector.shape_cast %140 : vector<1x256x128xbf16> to vector<256x128xbf16>
      %cst_66 = arith.constant dense<0.000000e+00> : vector<64x128xf32>
      %142 = tpu.matmul %139, %141, %cst_66 {dimension_numbers = #tpu.dot_dimension_numbers<[1], [0], [0], [1], [0, 0, 1, 1], [], []>} : vector<64x256xbf16>, vector<256x128xbf16>, vector<64x128xf32> -> vector<64x128xf32>
      %143 = arith.addf %121, %142 : vector<64x128xf32>
      %c1_67 = arith.constant 1 : index
      %c0_68 = arith.constant 0 : index
      %c0_69 = arith.constant 0 : index
      %144 = vector.load %arg9[%c1_67, %c0_68, %c0_69] : memref<2x1x128xf32, #tpu.memory_space<vmem>>, vector<1x1x128xf32>
      %145 = vector.shape_cast %144 : vector<1x1x128xf32> to vector<1x128xf32>
      %146 = vector.broadcast %145 : vector<1x128xf32> to vector<64x128xf32>
      %147 = arith.addf %143, %146 : vector<64x128xf32>
      %c1_70 = arith.constant 1 : index
      %148 = memref.load %arg10[%c1_70] : memref<2xf32, #tpu.memory_space<smem>>
      %149 = vector.broadcast %148 : f32 to vector<64x128xf32>
      %150 = arith.mulf %149, %147 : vector<64x128xf32>
      %151 = arith.addf %15, %150 : vector<64x128xf32>
      %c0_71 = arith.constant 0 : index
      %c0_72 = arith.constant 0 : index
      %c0_73 = arith.constant 0 : index
      %152 = vector.load %arg12[%c0_71, %c0_72, %c0_73] : memref<1x64x128xf32, #tpu.memory_space<vmem>>, vector<1x64x128xf32>
      %153 = vector.shape_cast %152 : vector<1x64x128xf32> to vector<64x128xf32>
      %154 = vector.shape_cast %151 : vector<64x128xf32> to vector<1x64x128xf32>
      tpu.vector_store %arg12[%c0_71, %c0_72, %c0_73], %154 {strides = array<i32>} : memref<1x64x128xf32, #tpu.memory_space<vmem>>, vector<1x64x128xf32>,
    } else {
    }
    return
  }
  func.func @transform_0(%arg0: i32) -> (i32, i32, i32) {
    %c0_i32 = arith.constant 0 : i32
    %c0_i32_0 = arith.constant 0 : i32
    %c0_i32_1 = arith.constant 0 : i32
    return %arg0, %c0_i32, %c0_i32_0 : i32, i32, i32
  }
  func.func @transform_1(%arg0: i32) -> (i32, i32, i32) {
    %c0_i32 = arith.constant 0 : i32
    %c0_i32_0 = arith.constant 0 : i32
    %c0_i32_1 = arith.constant 0 : i32
    %c0_i32_2 = arith.constant 0 : i32
    return %c0_i32, %c0_i32_0, %c0_i32_1 : i32, i32, i32
  }
  func.func @transform_2(%arg0: i32) -> (i32, i32, i32) {
    %c0_i32 = arith.constant 0 : i32
    %c0_i32_0 = arith.constant 0 : i32
    %c0_i32_1 = arith.constant 0 : i32
    %c0_i32_2 = arith.constant 0 : i32
    return %c0_i32, %c0_i32_0, %c0_i32_1 : i32, i32, i32
  }
  func.func @transform_3(%arg0: i32) -> (i32, i32, i32) {
    %c0_i32 = arith.constant 0 : i32
    %c0_i32_0 = arith.constant 0 : i32
    %c0_i32_1 = arith.constant 0 : i32
    %c0_i32_2 = arith.constant 0 : i32
    return %c0_i32, %c0_i32_0, %c0_i32_1 : i32, i32, i32
  }
  func.func @transform_4(%arg0: i32) -> (i32, i32, i32) {
    %c0_i32 = arith.constant 0 : i32
    %c0_i32_0 = arith.constant 0 : i32
    %c0_i32_1 = arith.constant 0 : i32
    %c0_i32_2 = arith.constant 0 : i32
    return %c0_i32, %c0_i32_0, %c0_i32_1 : i32, i32, i32
  }
  func.func @transform_5(%arg0: i32) -> (i32, i32, i32) {
    %c0_i32 = arith.constant 0 : i32
    %c0_i32_0 = arith.constant 0 : i32
    %c0_i32_1 = arith.constant 0 : i32
    %c0_i32_2 = arith.constant 0 : i32
    return %c0_i32, %c0_i32_0, %c0_i32_1 : i32, i32, i32
  }
  func.func @transform_6(%arg0: i32) -> (i32, i32, i32) {
    %c0_i32 = arith.constant 0 : i32
    %c0_i32_0 = arith.constant 0 : i32
    %c0_i32_1 = arith.constant 0 : i32
    %c0_i32_2 = arith.constant 0 : i32
    return %c0_i32, %c0_i32_0, %c0_i32_1 : i32, i32, i32
  }
  func.func @transform_7(%arg0: i32) -> (i32, i32, i32) {
    %c0_i32 = arith.constant 0 : i32
    %c0_i32_0 = arith.constant 0 : i32
    %c0_i32_1 = arith.constant 0 : i32
    %c0_i32_2 = arith.constant 0 : i32
    return %c0_i32, %c0_i32_0, %c0_i32_1 : i32, i32, i32
  }
  func.func @transform_8(%arg0: i32) -> (i32, i32, i32) {
    %c0_i32 = arith.constant 0 : i32
    %c0_i32_0 = arith.constant 0 : i32
    %c0_i32_1 = arith.constant 0 : i32
    %c0_i32_2 = arith.constant 0 : i32
    return %c0_i32, %c0_i32_0, %c0_i32_1 : i32, i32, i32
  }
  func.func @transform_9(%arg0: i32) -> i32 {
    %c0_i32 = arith.constant 0 : i32
    %c0_i32_0 = arith.constant 0 : i32
    return %c0_i32 : i32
  }
  func.func @transform_10(%arg0: i32) -> i32 {
    %c0_i32 = arith.constant 0 : i32
    %c0_i32_0 = arith.constant 0 : i32
    return %c0_i32 : i32
  }
  func.func @transform_11(%arg0: i32) -> (i32, i32, i32) {
    %c0_i32 = arith.constant 0 : i32
    %c0_i32_0 = arith.constant 0 : i32
    %c0_i32_1 = arith.constant 0 : i32
    return %arg0, %c0_i32, %c0_i32_0 : i32, i32, i32
  }
}

module attributes {stable_mosaic.version = 11 : i64} {
  func.func @_matmul_bias_kernel(%arg0: i32, %arg1: memref<256x36xbf16, #tpu.memory_space<vmem>>, %arg2: memref<36x128xbf16, #tpu.memory_space<vmem>>, %arg3: memref<1x128xf32, #tpu.memory_space<vmem>>, %arg4: memref<256x128xbf16, #tpu.memory_space<vmem>>) attributes {dimension_semantics = [#tpu.dimension_semantics<parallel>], iteration_bounds = array<i64: 1>, scalar_prefetch = 0 : i64, scratch_operands = 0 : i64, tpu.core_type = #tpu.core_type<tc>, window_params = [{transform_indices = @transform_0, window_bounds = array<i64: 256, 36>}, {pipeline_mode = #tpu.pipeline_mode<synchronous>, transform_indices = @transform_1, window_bounds = array<i64: 36, 128>}, {pipeline_mode = #tpu.pipeline_mode<synchronous>, transform_indices = @transform_2, window_bounds = array<i64: 1, 128>}, {transform_indices = @transform_3, window_bounds = array<i64: 256, 128>}]} {
    %c0 = arith.constant 0 : index
    %c0_0 = arith.constant 0 : index
    %0 = vector.load %arg1[%c0, %c0_0] : memref<256x36xbf16, #tpu.memory_space<vmem>>, vector<256x36xbf16>
    %c0_1 = arith.constant 0 : index
    %c0_2 = arith.constant 0 : index
    %1 = vector.load %arg2[%c0_1, %c0_2] : memref<36x128xbf16, #tpu.memory_space<vmem>>, vector<36x128xbf16>
    %cst = arith.constant dense<0.000000e+00> : vector<256x128xf32>
    %2 = tpu.matmul %0, %1, %cst {dimension_numbers = #tpu.dot_dimension_numbers<[1], [0], [0], [1], [0, 0, 1, 1], [], []>} : vector<256x36xbf16>, vector<36x128xbf16>, vector<256x128xf32> -> vector<256x128xf32>
    %c0_3 = arith.constant 0 : index
    %c0_4 = arith.constant 0 : index
    %3 = vector.load %arg3[%c0_3, %c0_4] : memref<1x128xf32, #tpu.memory_space<vmem>>, vector<1x128xf32>
    %4 = vector.broadcast %3 : vector<1x128xf32> to vector<256x128xf32>
    %5 = arith.addf %2, %4 : vector<256x128xf32>
    %6 = arith.truncf %5 : vector<256x128xf32> to vector<256x128xbf16>
    %c0_5 = arith.constant 0 : index
    %c0_6 = arith.constant 0 : index
    %7 = vector.load %arg4[%c0_5, %c0_6] : memref<256x128xbf16, #tpu.memory_space<vmem>>, vector<256x128xbf16>
    tpu.vector_store %arg4[%c0_5, %c0_6], %6 {strides = array<i32>} : memref<256x128xbf16, #tpu.memory_space<vmem>>, vector<256x128xbf16>,
    return
  }
  func.func @transform_0(%arg0: i32) -> (i32, i32) {
    %c0_i32 = arith.constant 0 : i32
    %c0_i32_0 = arith.constant 0 : i32
    return %arg0, %c0_i32 : i32, i32
  }
  func.func @transform_1(%arg0: i32) -> (i32, i32) {
    %c0_i32 = arith.constant 0 : i32
    %c0_i32_0 = arith.constant 0 : i32
    %c0_i32_1 = arith.constant 0 : i32
    return %c0_i32, %c0_i32_0 : i32, i32
  }
  func.func @transform_2(%arg0: i32) -> (i32, i32) {
    %c0_i32 = arith.constant 0 : i32
    %c0_i32_0 = arith.constant 0 : i32
    %c0_i32_1 = arith.constant 0 : i32
    return %c0_i32, %c0_i32_0 : i32, i32
  }
  func.func @transform_3(%arg0: i32) -> (i32, i32) {
    %c0_i32 = arith.constant 0 : i32
    %c0_i32_0 = arith.constant 0 : i32
    return %arg0, %c0_i32 : i32, i32
  }
}

</mosaic_0001>

<llo_original>
// kernel: levit_stage_tinyfusion.2
$region0: #{levit_stage_tinyfusion.2}
  #allocation0 [shape = 'u32[]', space=smem, size = 0x4, offset = 0x4, fixed_abs, tag = 'smem constant byte address 0x4 - core index']
  #allocation1 [shape = 'u32[144,128]{1,0:T(1,128)}', space=vmem, size = 0x12000, scoped, tag = 'internal scratch']
  %s0 = inlined_call_operand.vmem [shape: bf16[256,36], index: 0, kind: input, shape index: {}]
  %s1 = inlined_call_operand.vmem [shape: bf16[36,128], index: 1, kind: input, shape index: {}]
  %s2 = inlined_call_operand.vmem [shape: f32[1,128], index: 2, kind: input, shape index: {}]
  %s3 = inlined_call_operand.vmem [shape: bf16[256,128], index: 3, kind: output, shape index: {}]
  %s4 = sld [smem:[#allocation0]]
  $region22: #{levit_stage_tinyfusion.2} parent=0
    _
  %s6 = ssub.s32 1, %s4
  %s7 = scalar_select 0, %s6, %s4
  // Predicated region
  $region2: #{levit_stage_tinyfusion.2} parent=0 // pred_check
    _
  $region3: #{levit_stage_tinyfusion.2} parent=0 // pred_check_branch
    %9 = sbr.rel (0) target = $region5
  $region4: #{levit_stage_tinyfusion.2} parent=0 // pred_region
    _
  $region5: #{levit_stage_tinyfusion.2} parent=0 // pred_fallthru
    _
  // Predicated region
  $region6: #{levit_stage_tinyfusion.2} parent=0 // pred_check
    _
  $region7: #{levit_stage_tinyfusion.2} parent=0 // pred_check_branch
    %11 = sbr.rel (0) target = $region9
  $region8: #{levit_stage_tinyfusion.2} parent=0 // pred_region
    _
  $region9: #{levit_stage_tinyfusion.2} parent=0 // pred_fallthru
    _
  // Predicated region
  $region10: #{levit_stage_tinyfusion.2} parent=0 // pred_check
    _
  $region11: #{levit_stage_tinyfusion.2} parent=0 // pred_check_branch
    %13 = sbr.rel (0) target = $region13
  $region12: #{levit_stage_tinyfusion.2} parent=0 // pred_region
    _
  $region13: #{levit_stage_tinyfusion.2} parent=0 // pred_fallthru
    _
  %v15 = vld [vmem:[%s0] sm:$0xf]
  %v16 = vld [vmem:[%s0 + $0x4] sm:$0xf]
  %v17 = vld [vmem:[%s0 + $0x8] sm:$0xf]
  %v18 = vld [vmem:[%s0 + $0xc] sm:$0xf]
  %v19 = vld [vmem:[%s0 + $0x10] sm:$0xf]
  %v20 = vld [vmem:[%s0 + $0x14] sm:$0xf]
  %v21 = vld [vmem:[%s0 + $0x18] sm:$0xf]
  %v22 = vld [vmem:[%s0 + $0x1c] sm:$0xf]
  %v23 = vld [vmem:[%s0 + $0x20] sm:$0xf]
  %v24 = vld [vmem:[%s0 + $0x24] sm:$0xf]
  %v25 = vld [vmem:[%s0 + $0x28] sm:$0xf]
  %v26 = vld [vmem:[%s0 + $0x2c] sm:$0xf]
  %v27 = vld [vmem:[%s0 + $0x30] sm:$0xf]
  %v28 = vld [vmem:[%s0 + $0x34] sm:$0xf]
  %v29 = vld [vmem:[%s0 + $0x38] sm:$0xf]
  %v30 = vld [vmem:[%s0 + $0x3c] sm:$0xf]
  %v31 = vld [vmem:[%s0 + $0x40] sm:$0xf]
  %v32 = vld [vmem:[%s0 + $0x44] sm:$0xf]
  %v33 = vld [vmem:[%s0 + $0x48] sm:$0xf]
  %v34 = vld [vmem:[%s0 + $0x4c] sm:$0xf]
  %v35 = vld [vmem:[%s0 + $0x50] sm:$0xf]
  %v36 = vld [vmem:[%s0 + $0x54] sm:$0xf]
  %v37 = vld [vmem:[%s0 + $0x58] sm:$0xf]
  %v38 = vld [vmem:[%s0 + $0x5c] sm:$0xf]
  %v39 = vld [vmem:[%s0 + $0x60] sm:$0xf]
  %v40 = vld [vmem:[%s0 + $0x64] sm:$0xf]
  %v41 = vld [vmem:[%s0 + $0x68] sm:$0xf]
  %v42 = vld [vmem:[%s0 + $0x6c] sm:$0xf]
  %v43 = vld [vmem:[%s0 + $0x70] sm:$0xf]
  %v44 = vld [vmem:[%s0 + $0x74] sm:$0xf]
  %v45 = vld [vmem:[%s0 + $0x78] sm:$0xf]
  %v46 = vld [vmem:[%s0 + $0x7c] sm:$0xf]
  %v47 = vld [vmem:[%s1] sm:$0xf]
  %v48 = vld [vmem:[%s1 + $0x4] sm:$0xf]
  %v49 = vld [vmem:[%s1 + $0x8] sm:$0xf]
  %v50 = vld [vmem:[%s1 + $0xc] sm:$0xf]
  %v51 = vld [vmem:[%s1 + $0x10] sm:$0x3]
  %v52 = vld [vmem:[%s2] sm:$0x1]
  %v54 = vlaneseq
  %v55 = vshrl.u32 %v54, 7
  %v56 = vsub.s32 0, %v55
  %v57 = vrot.slane %v52, %v56
  %v91 = vunpack.c.l.b16 %v15
  %v92 = vunpack.c.l.b16 %v16
  %v93 = vunpack.c.l.b16 %v17
  %v94 = vunpack.c.l.b16 %v18
  %v95 = vunpack.c.l.b16 %v19
  %v96 = vunpack.c.l.b16 %v20
  %v97 = vunpack.c.l.b16 %v21
  %v98 = vunpack.c.l.b16 %v22
  %v99 = vunpack.c.l.b16 %v23
  %v100 = vunpack.c.l.b16 %v24
  %v101 = vunpack.c.l.b16 %v25
  %v102 = vunpack.c.l.b16 %v26
  %v103 = vunpack.c.l.b16 %v27
  %v104 = vunpack.c.l.b16 %v28
  %v105 = vunpack.c.l.b16 %v29
  %v106 = vunpack.c.l.b16 %v30
  %v107 = vunpack.c.l.b16 %v31
  %v108 = vunpack.c.l.b16 %v32
  %v109 = vunpack.c.l.b16 %v33
  %v110 = vunpack.c.l.b16 %v34
  %v111 = vunpack.c.l.b16 %v35
  %v112 = vunpack.c.l.b16 %v36
  %v113 = vunpack.c.l.b16 %v37
  %v114 = vunpack.c.l.b16 %v38
  %v115 = vunpack.c.l.b16 %v39
  %v116 = vunpack.c.l.b16 %v40
  %v117 = vunpack.c.l.b16 %v41
  %v118 = vunpack.c.l.b16 %v42
  %v119 = vunpack.c.l.b16 %v43
  %v120 = vunpack.c.l.b16 %v44
  %v121 = vunpack.c.l.b16 %v45
  %v122 = vunpack.c.l.b16 %v46
  %v123 = vpack.c.b16 %v92, %v91
  %v124 = vpack.c.b16 %v94, %v93
  %v125 = vpack.c.b16 %v96, %v95
  %v126 = vpack.c.b16 %v98, %v97
  %v127 = vpack.c.b16 %v100, %v99
  %v128 = vpack.c.b16 %v102, %v101
  %v129 = vpack.c.b16 %v104, %v103
  %v130 = vpack.c.b16 %v106, %v105
  %v131 = vpack.c.b16 %v108, %v107
  %v132 = vpack.c.b16 %v110, %v109
  %v133 = vpack.c.b16 %v112, %v111
  %v134 = vpack.c.b16 %v114, %v113
  %v135 = vpack.c.b16 %v116, %v115
  %v136 = vpack.c.b16 %v118, %v117
  %v137 = vpack.c.b16 %v120, %v119
  %v138 = vpack.c.b16 %v122, %v121
  %v144 = vunpack.c.l.b16 %v47
  %v145 = vunpack.c.l.b16 %v48
  %v146 = vunpack.c.l.b16 %v49
  %v147 = vunpack.c.l.b16 %v50
  %v148 = vunpack.c.l.b16 %v51
  %v149 = vpack.c.b16 %v145, %v144
  %v150 = vpack.c.b16 %v147, %v146
  %v151 = vpack.c.b16 %v148, %v148
  %vm154 = vcmask 293888
  %v156 = vsel %vm154, %v123, 0
  %v159 = vsel %vm154, %v124, 0
  %v162 = vsel %vm154, %v125, 0
  %v165 = vsel %vm154, %v126, 0
  %v168 = vsel %vm154, %v127, 0
  %v171 = vsel %vm154, %v128, 0
  %v174 = vsel %vm154, %v129, 0
  %v177 = vsel %vm154, %v130, 0
  %v180 = vsel %vm154, %v131, 0
  %v183 = vsel %vm154, %v132, 0
  %v186 = vsel %vm154, %v133, 0
  %v189 = vsel %vm154, %v134, 0
  %v192 = vsel %vm154, %v135, 0
  %v195 = vsel %vm154, %v136, 0
  %v198 = vsel %vm154, %v137, 0
  %v201 = vsel %vm154, %v138, 0
  %vm203 = vcmask 1041408
  %v205 = vsel %vm203, %v151, 0
  %207 = vmatprep.subr.bf16.mxu0 0
  %208 = vmatpush1.bf16.msra.mxu0 %v149
  %209 = vmatprep.subr.bf16.mxu0 0
  %210 = vmatpush1.bf16.msra.mxu0 %v150
  %211 = vmatprep.subr.bf16.mxu0 0
  %212 = vmatpush1.bf16.msra.mxu0 %v205
  %213 = vmatprep.subr.bf16.mxu0 0
  %214 = vmatpush1.bf16.msra.mxu0 0
  %215 = vmatprep.subr.bf16.mxu0 0
  %216 = vmatpush1.bf16.msra.mxu0 0
  %217 = vmatprep.subr.bf16.mxu0 0
  %218 = vmatpush1.bf16.msra.mxu0 0
  %219 = vmatprep.subr.bf16.mxu0 0
  %220 = vmatpush1.bf16.msra.mxu0 0
  %221 = vmatprep.subr.bf16.mxu0 0
  %222 = vmatpush1.bf16.msra.mxu0 0
  %223 = vmatprep.subr.bf16.mxu0 0
  %224 = vmatpush1.bf16.msra.mxu0 0
  %225 = vmatprep.subr.bf16.mxu0 0
  %226 = vmatpush1.bf16.msra.mxu0 0
  %227 = vmatprep.subr.bf16.mxu0 0
  %228 = vmatpush1.bf16.msra.mxu0 0
  %229 = vmatprep.subr.bf16.mxu0 0
  %230 = vmatpush1.bf16.msra.mxu0 0
  %231 = vmatprep.subr.bf16.mxu0 0
  %232 = vmatpush1.bf16.msra.mxu0 0
  %233 = vmatprep.subr.bf16.mxu0 0
  %234 = vmatpush1.bf16.msra.mxu0 0
  %235 = vmatprep.subr.bf16.mxu0 0
  %236 = vmatpush1.bf16.msra.mxu0 0
  %237 = vmatprep.subr.bf16.mxu0 0
  %238 = vmatpush1.bf16.msra.mxu0 0
  %239 = vmatprep.mubr.bf16.mxu0 0
  %240 = vmatmul.mubr.bf16.gmra.mrb[0].mxu0 %v156
  %v241 = vpop.f32.mrb[0].mxu0
  %v242 = vadd.f32 %v57, %v241
  %v243 = vpop.f32.mrb[0].mxu0
  %v244 = vpop.f32.mrb[0].mxu0
  %v245 = vadd.f32 %v57, %v244
  %v246 = vpop.f32.mrb[0].mxu0
  %247 = vmatprep.mubr.bf16.mxu0 0
  %248 = vmatmul.mubr.bf16.gmra.mrb[0].mxu0 %v159
  %v249 = vpop.f32.mrb[0].mxu0
  %v250 = vadd.f32 %v57, %v249
  %v251 = vpop.f32.mrb[0].mxu0
  %v252 = vpop.f32.mrb[0].mxu0
  %v253 = vadd.f32 %v57, %v252
  %v254 = vpop.f32.mrb[0].mxu0
  %255 = vmatprep.mubr.bf16.mxu0 0
  %256 = vmatmul.mubr.bf16.gmra.mrb[0].mxu0 %v162
  %v257 = vpop.f32.mrb[0].mxu0
  %v258 = vadd.f32 %v57, %v257
  %v259 = vpop.f32.mrb[0].mxu0
  %v260 = vpop.f32.mrb[0].mxu0
  %v261 = vadd.f32 %v57, %v260
  %v262 = vpop.f32.mrb[0].mxu0
  %263 = vmatprep.mubr.bf16.mxu0 0
  %264 = vmatmul.mubr.bf16.gmra.mrb[0].mxu0 %v165
  %v265 = vpop.f32.mrb[0].mxu0
  %v266 = vadd.f32 %v57, %v265
  %v267 = vpop.f32.mrb[0].mxu0
  %v268 = vpop.f32.mrb[0].mxu0
  %v269 = vadd.f32 %v57, %v268
  %v270 = vpop.f32.mrb[0].mxu0
  %271 = vmatprep.mubr.bf16.mxu0 0
  %272 = vmatmul.mubr.bf16.gmra.mrb[0].mxu0 %v168
  %v273 = vpop.f32.mrb[0].mxu0
  %v274 = vadd.f32 %v57, %v273
  %v275 = vpop.f32.mrb[0].mxu0
  %v276 = vpop.f32.mrb[0].mxu0
  %v277 = vadd.f32 %v57, %v276
  %v278 = vpop.f32.mrb[0].mxu0
  %279 = vmatprep.mubr.bf16.mxu0 0
  %280 = vmatmul.mubr.bf16.gmra.mrb[0].mxu0 %v171
  %v281 = vpop.f32.mrb[0].mxu0
  %v282 = vadd.f32 %v57, %v281
  %v283 = vpop.f32.mrb[0].mxu0
  %v284 = vpop.f32.mrb[0].mxu0
  %v285 = vadd.f32 %v57, %v284
  %v286 = vpop.f32.mrb[0].mxu0
  %287 = vmatprep.mubr.bf16.mxu0 0
  %288 = vmatmul.mubr.bf16.gmra.mrb[0].mxu0 %v174
  %v289 = vpop.f32.mrb[0].mxu0
  %v290 = vadd.f32 %v57, %v289
  %v291 = vpop.f32.mrb[0].mxu0
  %v292 = vpop.f32.mrb[0].mxu0
  %v293 = vadd.f32 %v57, %v292
  %v294 = vpop.f32.mrb[0].mxu0
  %295 = vmatprep.mubr.bf16.mxu0 0
  %296 = vmatmul.mubr.bf16.gmra.mrb[0].mxu0 %v177
  %v297 = vpop.f32.mrb[0].mxu0
  %v298 = vadd.f32 %v57, %v297
  %v299 = vpop.f32.mrb[0].mxu0
  %v300 = vpop.f32.mrb[0].mxu0
  %v301 = vadd.f32 %v57, %v300
  %v302 = vpop.f32.mrb[0].mxu0
  %303 = vmatprep.mubr.bf16.mxu0 0
  %304 = vmatmul.mubr.bf16.gmra.mrb[0].mxu0 %v180
  %v305 = vpop.f32.mrb[0].mxu0
  %v306 = vadd.f32 %v57, %v305
  %v307 = vpop.f32.mrb[0].mxu0
  %v308 = vpop.f32.mrb[0].mxu0
  %v309 = vadd.f32 %v57, %v308
  %v310 = vpop.f32.mrb[0].mxu0
  %311 = vmatprep.mubr.bf16.mxu0 0
  %312 = vmatmul.mubr.bf16.gmra.mrb[0].mxu0 %v183
  %v313 = vpop.f32.mrb[0].mxu0
  %v314 = vadd.f32 %v57, %v313
  %v315 = vpop.f32.mrb[0].mxu0
  %v316 = vpop.f32.mrb[0].mxu0
  %v317 = vadd.f32 %v57, %v316
  %v318 = vpop.f32.mrb[0].mxu0
  %319 = vmatprep.mubr.bf16.mxu0 0
  %320 = vmatmul.mubr.bf16.gmra.mrb[0].mxu0 %v186
  %v321 = vpop.f32.mrb[0].mxu0
  %v322 = vadd.f32 %v57, %v321
  %v323 = vpop.f32.mrb[0].mxu0
  %v324 = vpop.f32.mrb[0].mxu0
  %v325 = vadd.f32 %v57, %v324
  %v326 = vpop.f32.mrb[0].mxu0
  %327 = vmatprep.mubr.bf16.mxu0 0
  %328 = vmatmul.mubr.bf16.gmra.mrb[0].mxu0 %v189
  %v329 = vpop.f32.mrb[0].mxu0
  %v330 = vadd.f32 %v57, %v329
  %v331 = vpop.f32.mrb[0].mxu0
  %v332 = vpop.f32.mrb[0].mxu0
  %v333 = vadd.f32 %v57, %v332
  %v334 = vpop.f32.mrb[0].mxu0
  %335 = vmatprep.mubr.bf16.mxu0 0
  %336 = vmatmul.mubr.bf16.gmra.mrb[0].mxu0 %v192
  %v337 = vpop.f32.mrb[0].mxu0
  %v338 = vadd.f32 %v57, %v337
  %v339 = vpop.f32.mrb[0].mxu0
  %v340 = vpop.f32.mrb[0].mxu0
  %v341 = vadd.f32 %v57, %v340
  %v342 = vpop.f32.mrb[0].mxu0
  %343 = vmatprep.mubr.bf16.mxu0 0
  %344 = vmatmul.mubr.bf16.gmra.mrb[0].mxu0 %v195
  %v345 = vpop.f32.mrb[0].mxu0
  %v346 = vadd.f32 %v57, %v345
  %v347 = vpop.f32.mrb[0].mxu0
  %v348 = vpop.f32.mrb[0].mxu0
  %v349 = vadd.f32 %v57, %v348
  %v350 = vpop.f32.mrb[0].mxu0
  %351 = vmatprep.mubr.bf16.mxu0 0
  %352 = vmatmul.mubr.bf16.gmra.mrb[0].mxu0 %v198
  %v353 = vpop.f32.mrb[0].mxu0
  %v354 = vadd.f32 %v57, %v353
  %v355 = vpop.f32.mrb[0].mxu0
  %v356 = vpop.f32.mrb[0].mxu0
  %v357 = vadd.f32 %v57, %v356
  %v358 = vpop.f32.mrb[0].mxu0
  %359 = vmatprep.mubr.bf16.mxu0 0
  %360 = vmatmul.mubr.bf16.gmra.mrb[0].mxu0 %v201
  %v361 = vpop.f32.mrb[0].mxu0
  %v362 = vadd.f32 %v57, %v361
  %v363 = vpop.f32.mrb[0].mxu0
  %v364 = vpop.f32.mrb[0].mxu0
  %v365 = vadd.f32 %v57, %v364
  %v366 = vpop.f32.mrb[0].mxu0
  %367 = vdwg.mxu0
  %v368 = vpack.c.bf16 %v245, %v242
  %v369 = vpack.c.bf16 %v253, %v250
  %v370 = vpack.c.bf16 %v261, %v258
  %v371 = vpack.c.bf16 %v269, %v266
  %v372 = vpack.c.bf16 %v277, %v274
  %v373 = vpack.c.bf16 %v285, %v282
  %v374 = vpack.c.bf16 %v293, %v290
  %v375 = vpack.c.bf16 %v301, %v298
  %v376 = vpack.c.bf16 %v309, %v306
  %v377 = vpack.c.bf16 %v317, %v314
  %v378 = vpack.c.bf16 %v325, %v322
  %v379 = vpack.c.bf16 %v333, %v330
  %v380 = vpack.c.bf16 %v341, %v338
  %v381 = vpack.c.bf16 %v349, %v346
  %v382 = vpack.c.bf16 %v357, %v354
  %v383 = vpack.c.bf16 %v365, %v362
  %v400 = vunpack.c.l.b16 %v368
  %v401 = vunpack.c.h.b16 %v368
  %v402 = vunpack.c.l.b16 %v369
  %v403 = vunpack.c.h.b16 %v369
  %v404 = vunpack.c.l.b16 %v370
  %v405 = vunpack.c.h.b16 %v370
  %v406 = vunpack.c.l.b16 %v371
  %v407 = vunpack.c.h.b16 %v371
  %v408 = vunpack.c.l.b16 %v372
  %v409 = vunpack.c.h.b16 %v372
  %v410 = vunpack.c.l.b16 %v373
  %v411 = vunpack.c.h.b16 %v373
  %v412 = vunpack.c.l.b16 %v374
  %v413 = vunpack.c.h.b16 %v374
  %v414 = vunpack.c.l.b16 %v375
  %v415 = vunpack.c.h.b16 %v375
  %v416 = vunpack.c.l.b16 %v376
  %v417 = vunpack.c.h.b16 %v376
  %v418 = vunpack.c.l.b16 %v377
  %v419 = vunpack.c.h.b16 %v377
  %v420 = vunpack.c.l.b16 %v378
  %v421 = vunpack.c.h.b16 %v378
  %v422 = vunpack.c.l.b16 %v379
  %v423 = vunpack.c.h.b16 %v379
  %v424 = vunpack.c.l.b16 %v380
  %v425 = vunpack.c.h.b16 %v380
  %v426 = vunpack.c.l.b16 %v381
  %v427 = vunpack.c.h.b16 %v381
  %v428 = vunpack.c.l.b16 %v382
  %v429 = vunpack.c.h.b16 %v382
  %v430 = vunpack.c.l.b16 %v383
  %v431 = vunpack.c.h.b16 %v383
  %v432 = vpack.c.b16 %v400, %v400
  %v433 = vpack.c.b16 %v401, %v401
  %v434 = vpack.c.b16 %v402, %v402
  %v435 = vpack.c.b16 %v403, %v403
  %v436 = vpack.c.b16 %v404, %v404
  %v437 = vpack.c.b16 %v405, %v405
  %v438 = vpack.c.b16 %v406, %v406
  %v439 = vpack.c.b16 %v407, %v407
  %v440 = vpack.c.b16 %v408, %v408
  %v441 = vpack.c.b16 %v409, %v409
  %v442 = vpack.c.b16 %v410, %v410
  %v443 = vpack.c.b16 %v411, %v411
  %v444 = vpack.c.b16 %v412, %v412
  %v445 = vpack.c.b16 %v413, %v413
  %v446 = vpack.c.b16 %v414, %v414
  %v447 = vpack.c.b16 %v415, %v415
  %v448 = vpack.c.b16 %v416, %v416
  %v449 = vpack.c.b16 %v417, %v417
  %v450 = vpack.c.b16 %v418, %v418
  %v451 = vpack.c.b16 %v419, %v419
  %v452 = vpack.c.b16 %v420, %v420
  %v453 = vpack.c.b16 %v421, %v421
  %v454 = vpack.c.b16 %v422, %v422
  %v455 = vpack.c.b16 %v423, %v423
  %v456 = vpack.c.b16 %v424, %v424
  %v457 = vpack.c.b16 %v425, %v425
  %v458 = vpack.c.b16 %v426, %v426
  %v459 = vpack.c.b16 %v427, %v427
  %v460 = vpack.c.b16 %v428, %v428
  %v461 = vpack.c.b16 %v429, %v429
  %v462 = vpack.c.b16 %v430, %v430
  %v463 = vpack.c.b16 %v431, %v431
  %496 = vst [vmem:[%s3] sm:$0xf] %v432
  %497 = vst [vmem:[%s3 + $0x4] sm:$0xf] %v433
  %498 = vst [vmem:[%s3 + $0x8] sm:$0xf] %v434
  %499 = vst [vmem:[%s3 + $0xc] sm:$0xf] %v435
  %500 = vst [vmem:[%s3 + $0x10] sm:$0xf] %v436
  %501 = vst [vmem:[%s3 + $0x14] sm:$0xf] %v437
  %502 = vst [vmem:[%s3 + $0x18] sm:$0xf] %v438
  %503 = vst [vmem:[%s3 + $0x1c] sm:$0xf] %v439
  %504 = vst [vmem:[%s3 + $0x20] sm:$0xf] %v440
  %505 = vst [vmem:[%s3 + $0x24] sm:$0xf] %v441
  %506 = vst [vmem:[%s3 + $0x28] sm:$0xf] %v442
  %507 = vst [vmem:[%s3 + $0x2c] sm:$0xf] %v443
  %508 = vst [vmem:[%s3 + $0x30] sm:$0xf] %v444
  %509 = vst [vmem:[%s3 + $0x34] sm:$0xf] %v445
  %510 = vst [vmem:[%s3 + $0x38] sm:$0xf] %v446
  %511 = vst [vmem:[%s3 + $0x3c] sm:$0xf] %v447
  %512 = vst [vmem:[%s3 + $0x40] sm:$0xf] %v448
  %513 = vst [vmem:[%s3 + $0x44] sm:$0xf] %v449
  %514 = vst [vmem:[%s3 + $0x48] sm:$0xf] %v450
  %515 = vst [vmem:[%s3 + $0x4c] sm:$0xf] %v451
  %516 = vst [vmem:[%s3 + $0x50] sm:$0xf] %v452
  %517 = vst [vmem:[%s3 + $0x54] sm:$0xf] %v453
  %518 = vst [vmem:[%s3 + $0x58] sm:$0xf] %v454
  %519 = vst [vmem:[%s3 + $0x5c] sm:$0xf] %v455
  %520 = vst [vmem:[%s3 + $0x60] sm:$0xf] %v456
  %521 = vst [vmem:[%s3 + $0x64] sm:$0xf] %v457
  %522 = vst [vmem:[%s3 + $0x68] sm:$0xf] %v458
  %523 = vst [vmem:[%s3 + $0x6c] sm:$0xf] %v459
  %524 = vst [vmem:[%s3 + $0x70] sm:$0xf] %v460
  %525 = vst [vmem:[%s3 + $0x74] sm:$0xf] %v461
  %526 = vst [vmem:[%s3 + $0x78] sm:$0xf] %v462
  %527 = vst [vmem:[%s3 + $0x7c] sm:$0xf] %v463
  // Predicated region
  $region14: #{levit_stage_tinyfusion.2} parent=0 // pred_check
    _
  $region15: #{levit_stage_tinyfusion.2} parent=0 // pred_check_branch
    %529 = sbr.rel (0) target = $region17
  $region16: #{levit_stage_tinyfusion.2} parent=0 // pred_region
    _
  $region17: #{levit_stage_tinyfusion.2} parent=0 // pred_fallthru
    _
  // Predicated region
  $region18: #{levit_stage_tinyfusion.2} parent=0 // pred_check
    _
  $region19: #{levit_stage_tinyfusion.2} parent=0 // pred_check_branch
    %531 = sbr.rel (0) target = $region21
  $region20: #{levit_stage_tinyfusion.2} parent=0 // pred_region
    _
  $region21: #{levit_stage_tinyfusion.2} parent=0 // pred_fallthru
    _

// kernel: levit_stage_tinyfusion.3
$region0: #{levit_stage_tinyfusion.3}
  #allocation0 [shape = 'u32[]', space=smem, size = 0x4, offset = 0x4, fixed_abs, tag = 'smem constant byte address 0x4 - core index']
  #allocation1 [shape = 'u32[144,128]{1,0:T(1,128)}', space=vmem, size = 0x12000, scoped, tag = 'internal scratch']
  #allocation2 [shape = 'f32[64,128]{1,0:T(8,128)}', space=vmem, size = 0x8000, scoped, tag = 'scratch operand']
  %s0 = inlined_call_operand.vmem [shape: bf16[2,64,128], index: 0, kind: input, shape index: {}]
  %s1 = inlined_call_operand.vmem [shape: bf16[2,128,384], index: 1, kind: input, shape index: {}]
  %s2 = inlined_call_operand.vmem [shape: f32[2,1,384], index: 2, kind: input, shape index: {}]
  %s3 = inlined_call_operand.vmem [shape: bf16[2,128,128], index: 3, kind: input, shape index: {}]
  %s4 = inlined_call_operand.vmem [shape: f32[2,1,128], index: 4, kind: input, shape index: {}]
  %s5 = inlined_call_operand.vmem [shape: bf16[2,128,256], index: 5, kind: input, shape index: {}]
  %s6 = inlined_call_operand.vmem [shape: f32[2,1,256], index: 6, kind: input, shape index: {}]
  %s7 = inlined_call_operand.vmem [shape: bf16[2,256,128], index: 7, kind: input, shape index: {}]
  %s8 = inlined_call_operand.vmem [shape: f32[2,1,128], index: 8, kind: input, shape index: {}]
  %s9 = inlined_call_operand.vmem [shape: f32[2], index: 9, kind: input, shape index: {}]
  %s10 = inlined_call_operand.vmem [shape: s32[2], index: 10, kind: input, shape index: {}]
  %s11 = inlined_call_operand.hbm [shape: f32[2,64,128], index: 11, kind: output, shape index: {}]
  %s12 = sld [smem:[#allocation0]]
  $region93: #{levit_stage_tinyfusion.3} parent=0
    _
  %s14 = ssub.s32 1, %s12
  %s15 = scalar_select 0, %s14, %s12
  $region1: #{levit_stage_tinyfusion.3} parent=0
    #allocation3 [shape = 'u8[512]{0}', space=smem, size = 0x200, scoped, tag = 'input window, operand 9, single buffered']
    #allocation4 [shape = 's32[2]{0}', space=sflag, size = 0x8, scoped, tag = 'scoped memory for levit_stage_tinyfusion.3']
    #allocation5 [shape = 's32[2]{0}', space=sflag, size = 0x8, scoped, tag = 'scoped memory for levit_stage_tinyfusion.3']
    #allocation6 [shape = 'u8[512]{0}', space=smem, size = 0x200, scoped, tag = 'input window, operand 10, single buffered']
    #allocation7 [shape = 's32[1]{0}', space=sflag, size = 0x4, scoped, tag = 'scoped memory for levit_stage_tinyfusion.3']
    #allocation8 [shape = 'u8[65536]{0}', space=vmem, size = 0x10000, scoped, tag = 'output window, operand 0']
    %16 = vsyncpa [#allocation5], 0
    %17 = vsyncpa [#allocation7], 0
    %18 = vsyncpa [#allocation4], 0
    %s19 = scalar_lea.sflag [#allocation4], 1
    %20 = vsyncpa %s19, 0
    loop: start=0, step=1, limit=4
    $region2: #{levit_stage_tinyfusion.3} parent=1 // loop_pre_header
      _
    $region3: #{levit_stage_tinyfusion.3} parent=1 // loop_header
      %s22 = sphi 0, %s26
      %p23 = scmp.ge.s32.totalorder %s22, 4
      %s32 = sphi 0, %s34
      %s35 = sphi 0, %s32
      %s36 = sphi 0, %s35
      %s52 = sphi 0, %s36
      %s56 = sphi 0, %s56
      %s58 = sphi 0, %s56
      %s59 = sphi 0, %s58
      %s73 = sphi 0, %s59
      %s77 = sphi 0, %s77
      %s79 = sphi 0, %s77
      %s80 = sphi 0, %s79
      %s94 = sphi 0, %s80
      %s98 = sphi 0, %s98
      %s100 = sphi 0, %s98
      %s101 = sphi 0, %s100
      %s115 = sphi 0, %s101
      %s119 = sphi 0, %s119
      %s121 = sphi 0, %s119
      %s122 = sphi 0, %s121
      %s136 = sphi 0, %s122
      %s140 = sphi 0, %s140
      %s142 = sphi 0, %s140
      %s143 = sphi 0, %s142
      %s157 = sphi 0, %s143
      %s161 = sphi 0, %s161
      %s163 = sphi 0, %s161
      %s164 = sphi 0, %s163
      %s178 = sphi 0, %s164
      %s182 = sphi 0, %s182
      %s184 = sphi 0, %s182
      %s185 = sphi 0, %s184
      %s199 = sphi 0, %s185
      %s203 = sphi 0, %s203
      %s205 = sphi 0, %s203
      %s206 = sphi 0, %s205
      %s220 = sphi 0, %s206
      %s224 = sphi 0, %s224
      %s226 = sphi 0, %s224
      %s227 = sphi 0, %s226
      %s241 = sphi 0, %s227
      %s245 = sphi 0, %s245
      %s247 = sphi 0, %s245
      %s248 = sphi 0, %s247
      %s262 = sphi 0, %s248
      %s268 = sphi 0, %s270
      %s271 = sphi 0, %s268
      %s272 = sphi 0, %s271
      %s288 = sphi 0, %s272
    $region4: #{levit_stage_tinyfusion.3} parent=1 // loop_header_branch
      %25 = sbr.rel (%p23) target = $region8
    $region5: #{levit_stage_tinyfusion.3} parent=1 // loop_body
      %s27 = ssub.s32 %s22, 1
      %s28 = ssub.s32 %s22, 2
      %s29 = sadd.s32 %s22, 1
      %s30 = ssub.s32 %s22, %s29
      %p31 = scmp.eq.s32.totalorder %s30, 0
      %s33 = sadd.s32 %s32, 1
      %s34 = scalar_select %p31, %s32, %s33
      %p37 = pneg %p31
      %p38 = scmp.eq.s32.totalorder %s22, 1
      %p39 = por %p37, %p38
      %p40 = scmp.ne.s32.totalorder %s32, %s35
      %p41 = scmp.eq.s32.totalorder %s22, 0
      %p42 = por %p40, %p41
      %p43 = scmp.ne.s32.totalorder %s32, %s35
      %p44 = scmp.eq.s32.totalorder %s27, 1
      %p45 = por %p43, %p44
      %p46 = scmp.ne.s32.totalorder %s35, %s36
      %p47 = scmp.eq.s32.totalorder %s27, 0
      %p48 = por %p46, %p47
      %p49 = scmp.ne.s32.totalorder %s35, %s36
      %p50 = scmp.eq.s32.totalorder %s28, 1
      %p51 = por %p49, %p50
      %p53 = scmp.ne.s32.totalorder %s36, %s52
      %p54 = scmp.eq.s32.totalorder %s28, 0
      %p55 = por %p53, %p54
      %s57 = sadd.s32 %s56, 1
      %p60 = scmp.eq.s32.totalorder %s22, 1
      %p61 = scmp.ne.s32.totalorder %s56, %s58
      %p62 = scmp.eq.s32.totalorder %s22, 0
      %p63 = por %p61, %p62
      %p64 = scmp.ne.s32.totalorder %s56, %s58
      %p65 = scmp.eq.s32.totalorder %s27, 1
      %p66 = por %p64, %p65
      %p67 = scmp.ne.s32.totalorder %s58, %s59
      %p68 = scmp.eq.s32.totalorder %s27, 0
      %p69 = por %p67, %p68
      %p70 = scmp.ne.s32.totalorder %s58, %s59
      %p71 = scmp.eq.s32.totalorder %s28, 1
      %p72 = por %p70, %p71
      %p74 = scmp.ne.s32.totalorder %s59, %s73
      %p75 = scmp.eq.s32.totalorder %s28, 0
      %p76 = por %p74, %p75
      %s78 = sadd.s32 %s77, 1
      %p81 = scmp.eq.s32.totalorder %s22, 1
      %p82 = scmp.ne.s32.totalorder %s77, %s79
      %p83 = scmp.eq.s32.totalorder %s22, 0
      %p84 = por %p82, %p83
      %p85 = scmp.ne.s32.totalorder %s77, %s79
      %p86 = scmp.eq.s32.totalorder %s27, 1
      %p87 = por %p85, %p86
      %p88 = scmp.ne.s32.totalorder %s79, %s80
      %p89 = scmp.eq.s32.totalorder %s27, 0
      %p90 = por %p88, %p89
      %p91 = scmp.ne.s32.totalorder %s79, %s80
      %p92 = scmp.eq.s32.totalorder %s28, 1
      %p93 = por %p91, %p92
      %p95 = scmp.ne.s32.totalorder %s80, %s94
      %p96 = scmp.eq.s32.totalorder %s28, 0
      %p97 = por %p95, %p96
      %s99 = sadd.s32 %s98, 1
      %p102 = scmp.eq.s32.totalorder %s22, 1
      %p103 = scmp.ne.s32.totalorder %s98, %s100
      %p104 = scmp.eq.s32.totalorder %s22, 0
      %p105 = por %p103, %p104
      %p106 = scmp.ne.s32.totalorder %s98, %s100
      %p107 = scmp.eq.s32.totalorder %s27, 1
      %p108 = por %p106, %p107
      %p109 = scmp.ne.s32.totalorder %s100, %s101
      %p110 = scmp.eq.s32.totalorder %s27, 0
      %p111 = por %p109, %p110
      %p112 = scmp.ne.s32.totalorder %s100, %s101
      %p113 = scmp.eq.s32.totalorder %s28, 1
      %p114 = por %p112, %p113
      %p116 = scmp.ne.s32.totalorder %s101, %s115
      %p117 = scmp.eq.s32.totalorder %s28, 0
      %p118 = por %p116, %p117
      %s120 = sadd.s32 %s119, 1
      %p123 = scmp.eq.s32.totalorder %s22, 1
      %p124 = scmp.ne.s32.totalorder %s119, %s121
      %p125 = scmp.eq.s32.totalorder %s22, 0
      %p126 = por %p124, %p125
      %p127 = scmp.ne.s32.totalorder %s119, %s121
      %p128 = scmp.eq.s32.totalorder %s27, 1
      %p129 = por %p127, %p128
      %p130 = scmp.ne.s32.totalorder %s121, %s122
      %p131 = scmp.eq.s32.totalorder %s27, 0
      %p132 = por %p130, %p131
      %p133 = scmp.ne.s32.totalorder %s121, %s122
      %p134 = scmp.eq.s32.totalorder %s28, 1
      %p135 = por %p133, %p134
      %p137 = scmp.ne.s32.totalorder %s122, %s136
      %p138 = scmp.eq.s32.totalorder %s28, 0
      %p139 = por %p137, %p138
      %s141 = sadd.s32 %s140, 1
      %p144 = scmp.eq.s32.totalorder %s22, 1
      %p145 = scmp.ne.s32.totalorder %s140, %s142
      %p146 = scmp.eq.s32.totalorder %s22, 0
      %p147 = por %p145, %p146
      %p148 = scmp.ne.s32.totalorder %s140, %s142
      %p149 = scmp.eq.s32.totalorder %s27, 1
      %p150 = por %p148, %p149
      %p151 = scmp.ne.s32.totalorder %s142, %s143
      %p152 = scmp.eq.s32.totalorder %s27, 0
      %p153 = por %p151, %p152
      %p154 = scmp.ne.s32.totalorder %s142, %s143
      %p155 = scmp.eq.s32.totalorder %s28, 1
      %p156 = por %p154, %p155
      %p158 = scmp.ne.s32.totalorder %s143, %s157
      %p159 = scmp.eq.s32.totalorder %s28, 0
      %p160 = por %p158, %p159
      %s162 = sadd.s32 %s161, 1
      %p165 = scmp.eq.s32.totalorder %s22, 1
      %p166 = scmp.ne.s32.totalorder %s161, %s163
      %p167 = scmp.eq.s32.totalorder %s22, 0
      %p168 = por %p166, %p167
      %p169 = scmp.ne.s32.totalorder %s161, %s163
      %p170 = scmp.eq.s32.totalorder %s27, 1
      %p171 = por %p169, %p170
      %p172 = scmp.ne.s32.totalorder %s163, %s164
      %p173 = scmp.eq.s32.totalorder %s27, 0
      %p174 = por %p172, %p173
      %p175 = scmp.ne.s32.totalorder %s163, %s164
      %p176 = scmp.eq.s32.totalorder %s28, 1
      %p177 = por %p175, %p176
      %p179 = scmp.ne.s32.totalorder %s164, %s178
      %p180 = scmp.eq.s32.totalorder %s28, 0
      %p181 = por %p179, %p180
      %s183 = sadd.s32 %s182, 1
      %p186 = scmp.eq.s32.totalorder %s22, 1
      %p187 = scmp.ne.s32.totalorder %s182, %s184
      %p188 = scmp.eq.s32.totalorder %s22, 0
      %p189 = por %p187, %p188
      %p190 = scmp.ne.s32.totalorder %s182, %s184
      %p191 = scmp.eq.s32.totalorder %s27, 1
      %p192 = por %p190, %p191
      %p193 = scmp.ne.s32.totalorder %s184, %s185
      %p194 = scmp.eq.s32.totalorder %s27, 0
      %p195 = por %p193, %p194
      %p196 = scmp.ne.s32.totalorder %s184, %s185
      %p197 = scmp.eq.s32.totalorder %s28, 1
      %p198 = por %p196, %p197
      %p200 = scmp.ne.s32.totalorder %s185, %s199
      %p201 = scmp.eq.s32.totalorder %s28, 0
      %p202 = por %p200, %p201
      %s204 = sadd.s32 %s203, 1
      %p207 = scmp.eq.s32.totalorder %s22, 1
      %p208 = scmp.ne.s32.totalorder %s203, %s205
      %p209 = scmp.eq.s32.totalorder %s22, 0
      %p210 = por %p208, %p209
      %p211 = scmp.ne.s32.totalorder %s203, %s205
      %p212 = scmp.eq.s32.totalorder %s27, 1
      %p213 = por %p211, %p212
      %p214 = scmp.ne.s32.totalorder %s205, %s206
      %p215 = scmp.eq.s32.totalorder %s27, 0
      %p216 = por %p214, %p215
      %p217 = scmp.ne.s32.totalorder %s205, %s206
      %p218 = scmp.eq.s32.totalorder %s28, 1
      %p219 = por %p217, %p218
      %p221 = scmp.ne.s32.totalorder %s206, %s220
      %p222 = scmp.eq.s32.totalorder %s28, 0
      %p223 = por %p221, %p222
      %s225 = sadd.s32 %s224, 1
      %p228 = scmp.eq.s32.totalorder %s22, 1
      %p229 = scmp.ne.s32.totalorder %s224, %s226
      %p230 = scmp.eq.s32.totalorder %s22, 0
      %p231 = por %p229, %p230
      %p232 = scmp.ne.s32.totalorder %s224, %s226
      %p233 = scmp.eq.s32.totalorder %s27, 1
      %p234 = por %p232, %p233
      %p235 = scmp.ne.s32.totalorder %s226, %s227
      %p236 = scmp.eq.s32.totalorder %s27, 0
      %p237 = por %p235, %p236
      %p238 = scmp.ne.s32.totalorder %s226, %s227
      %p239 = scmp.eq.s32.totalorder %s28, 1
      %p240 = por %p238, %p239
      %p242 = scmp.ne.s32.totalorder %s227, %s241
      %p243 = scmp.eq.s32.totalorder %s28, 0
      %p244 = por %p242, %p243
      %s246 = sadd.s32 %s245, 1
      %p249 = scmp.eq.s32.totalorder %s22, 1
      %p250 = scmp.ne.s32.totalorder %s245, %s247
      %p251 = scmp.eq.s32.totalorder %s22, 0
      %p252 = por %p250, %p251
      %p253 = scmp.ne.s32.totalorder %s245, %s247
      %p254 = scmp.eq.s32.totalorder %s27, 1
      %p255 = por %p253, %p254
      %p256 = scmp.ne.s32.totalorder %s247, %s248
      %p257 = scmp.eq.s32.totalorder %s27, 0
      %p258 = por %p256, %p257
      %p259 = scmp.ne.s32.totalorder %s247, %s248
      %p260 = scmp.eq.s32.totalorder %s28, 1
      %p261 = por %p259, %p260
      %p263 = scmp.ne.s32.totalorder %s248, %s262
      %p264 = scmp.eq.s32.totalorder %s28, 0
      %p265 = por %p263, %p264
      %s266 = ssub.s32 %s22, %s29
      %p267 = scmp.eq.s32.totalorder %s266, 0
      %s269 = sadd.s32 %s268, 1
      %s270 = scalar_select %p267, %s268, %s269
      %p273 = pneg %p267
      %p274 = scmp.eq.s32.totalorder %s22, 1
      %p275 = por %p273, %p274
      %p276 = scmp.ne.s32.totalorder %s268, %s271
      %p277 = scmp.eq.s32.totalorder %s22, 0
      %p278 = por %p276, %p277
      %p279 = scmp.ne.s32.totalorder %s268, %s271
      %p280 = scmp.eq.s32.totalorder %s27, 1
      %p281 = por %p279, %p280
      %p282 = scmp.ne.s32.totalorder %s271, %s272
      %p283 = scmp.eq.s32.totalorder %s27, 0
      %p284 = por %p282, %p283
      %p285 = scmp.ne.s32.totalorder %s271, %s272
      %p286 = scmp.eq.s32.totalorder %s28, 1
      %p287 = por %p285, %p286
      %p289 = scmp.ne.s32.totalorder %s272, %s288
      %p290 = scmp.eq.s32.totalorder %s28, 0
      %p291 = por %p289, %p290
      %p292 = scmp.le.s32.totalorder 1, %s22
      %p293 = scmp.lt.s32.totalorder %s22, 3
      %p294 = pnand %p292, %p293
      %p295 = pneg %p294
      // Predicated region
      $region9: #{levit_stage_tinyfusion.3} parent=5 // pred_check
        _
      $region10: #{levit_stage_tinyfusion.3} parent=5 // pred_check_branch
        %297 = sbr.rel (%p294) target = $region12
      $region11: #{levit_stage_tinyfusion.3} parent=5 // pred_region
        %s298 = ssub.s32 %s22, 1
        // Predicated region
        $region13: #{levit_stage_tinyfusion.3} parent=11 // pred_check
          %p299 = pneg %p69
        $region14: #{levit_stage_tinyfusion.3} parent=11 // pred_check_branch
          %301 = sbr.rel (%p299) target = $region16
        $region15: #{levit_stage_tinyfusion.3} parent=11 // pred_region
          _
        $region16: #{levit_stage_tinyfusion.3} parent=11 // pred_fallthru
          _
        // Predicated region
        $region17: #{levit_stage_tinyfusion.3} parent=11 // pred_check
          %p302 = pneg %p90
        $region18: #{levit_stage_tinyfusion.3} parent=11 // pred_check_branch
          %304 = sbr.rel (%p302) target = $region20
        $region19: #{levit_stage_tinyfusion.3} parent=11 // pred_region
          _
        $region20: #{levit_stage_tinyfusion.3} parent=11 // pred_fallthru
          _
        // Predicated region
        $region21: #{levit_stage_tinyfusion.3} parent=11 // pred_check
          %p305 = pneg %p111
        $region22: #{levit_stage_tinyfusion.3} parent=11 // pred_check_branch
          %307 = sbr.rel (%p305) target = $region24
        $region23: #{levit_stage_tinyfusion.3} parent=11 // pred_region
          _
        $region24: #{levit_stage_tinyfusion.3} parent=11 // pred_fallthru
          _
        // Predicated region
        $region25: #{levit_stage_tinyfusion.3} parent=11 // pred_check
          %p308 = pneg %p132
        $region26: #{levit_stage_tinyfusion.3} parent=11 // pred_check_branch
          %310 = sbr.rel (%p308) target = $region28
        $region27: #{levit_stage_tinyfusion.3} parent=11 // pred_region
          _
        $region28: #{levit_stage_tinyfusion.3} parent=11 // pred_fallthru
          _
        // Predicated region
        $region29: #{levit_stage_tinyfusion.3} parent=11 // pred_check
          %p311 = pneg %p153
        $region30: #{levit_stage_tinyfusion.3} parent=11 // pred_check_branch
          %313 = sbr.rel (%p311) target = $region32
        $region31: #{levit_stage_tinyfusion.3} parent=11 // pred_region
          _
        $region32: #{levit_stage_tinyfusion.3} parent=11 // pred_fallthru
          _
        // Predicated region
        $region33: #{levit_stage_tinyfusion.3} parent=11 // pred_check
          %p314 = pneg %p174
        $region34: #{levit_stage_tinyfusion.3} parent=11 // pred_check_branch
          %316 = sbr.rel (%p314) target = $region36
        $region35: #{levit_stage_tinyfusion.3} parent=11 // pred_region
          _
        $region36: #{levit_stage_tinyfusion.3} parent=11 // pred_fallthru
          _
        // Predicated region
        $region37: #{levit_stage_tinyfusion.3} parent=11 // pred_check
          %p317 = pneg %p195
        $region38: #{levit_stage_tinyfusion.3} parent=11 // pred_check_branch
          %319 = sbr.rel (%p317) target = $region40
        $region39: #{levit_stage_tinyfusion.3} parent=11 // pred_region
          _
        $region40: #{levit_stage_tinyfusion.3} parent=11 // pred_fallthru
          _
        // Predicated region
        $region41: #{levit_stage_tinyfusion.3} parent=11 // pred_check
          %p320 = pneg %p216
        $region42: #{levit_stage_tinyfusion.3} parent=11 // pred_check_branch
          %322 = sbr.rel (%p320) target = $region44
        $region43: #{levit_stage_tinyfusion.3} parent=11 // pred_region
          _
        $region44: #{levit_stage_tinyfusion.3} parent=11 // pred_fallthru
          _
        // Predicated region
        $region45: #{levit_stage_tinyfusion.3} parent=11 // pred_check
          %p323 = pneg %p237
        $region46: #{levit_stage_tinyfusion.3} parent=11 // pred_check_branch
          %325 = sbr.rel (%p323) target = $region48
        $region47: #{levit_stage_tinyfusion.3} parent=11 // pred_region
          %s327 = ssub.s32 16, 16
          %328 = vsyncadd [#allocation5], %s327
          %s330 = sshll.u32 %s9, 4
          %s331 = int_to_ptr.vmem [resolvable:$true] %s330
          %333 = dma.vmem_to_smem %s331, 16, [#allocation3], [#allocation5]
        $region48: #{levit_stage_tinyfusion.3} parent=11 // pred_fallthru
          _
        // Predicated region
        $region49: #{levit_stage_tinyfusion.3} parent=11 // pred_check
          %p334 = pneg %p258
        $region50: #{levit_stage_tinyfusion.3} parent=11 // pred_check_branch
          %336 = sbr.rel (%p334) target = $region52
        $region51: #{levit_stage_tinyfusion.3} parent=11 // pred_region
          %s338 = ssub.s32 16, 16
          %339 = vsyncadd [#allocation7], %s338
          %s341 = sshll.u32 %s10, 4
          %s342 = int_to_ptr.vmem [resolvable:$true] %s341
          %344 = dma.vmem_to_smem %s342, 16, [#allocation6], [#allocation7]
        $region52: #{levit_stage_tinyfusion.3} parent=11 // pred_fallthru
          _
      $region12: #{levit_stage_tinyfusion.3} parent=5 // pred_fallthru
        _
      %p345 = scmp.lt.s32.totalorder %s22, 2
      // Predicated region
      $region53: #{levit_stage_tinyfusion.3} parent=5 // pred_check
        %p346 = pneg %p345
      $region54: #{levit_stage_tinyfusion.3} parent=5 // pred_check_branch
        %348 = sbr.rel (%p346) target = $region56
      $region55: #{levit_stage_tinyfusion.3} parent=5 // pred_region
        // Predicated region
        $region57: #{levit_stage_tinyfusion.3} parent=55 // pred_check
          %p349 = pneg %p42
        $region58: #{levit_stage_tinyfusion.3} parent=55 // pred_check_branch
          %351 = sbr.rel (%p349) target = $region60
        $region59: #{levit_stage_tinyfusion.3} parent=55 // pred_region
          %p352 = scmp.lt.s32.totalorder %s22, 1
          %s353 = scalar_select %p352, %s22, 1
          %s354 = smul.addr %s353, 8
          %s355 = smul.addr %s354, 4
          %s356 = scalar_lea.vmem %s0, %s355
        $region60: #{levit_stage_tinyfusion.3} parent=55 // pred_fallthru
          _
      $region56: #{levit_stage_tinyfusion.3} parent=5 // pred_fallthru
        _
      %p357 = scmp.le.s32.totalorder 1, %s22
      %p358 = scmp.lt.s32.totalorder %s22, 3
      %p359 = pnand %p357, %p358
      %p360 = pneg %p359
      // Predicated region
      $region61: #{levit_stage_tinyfusion.3} parent=5 // pred_check
        _
      $region62: #{levit_stage_tinyfusion.3} parent=5 // pred_check_branch
        %362 = sbr.rel (%p359) target = $region64
      $region63: #{levit_stage_tinyfusion.3} parent=5 // pred_region
        %s363 = ssub.s32 %s22, 1
        // Predicated region
        $region65: #{levit_stage_tinyfusion.3} parent=63 // pred_check
          %p364 = pneg %p237
        $region66: #{levit_stage_tinyfusion.3} parent=63 // pred_check_branch
          %366 = sbr.rel (%p364) target = $region68
        $region67: #{levit_stage_tinyfusion.3} parent=63 // pred_region
          %367 = dma.done [#allocation5], 16
        $region68: #{levit_stage_tinyfusion.3} parent=63 // pred_fallthru
          _
        // Predicated region
        $region69: #{levit_stage_tinyfusion.3} parent=63 // pred_check
          %p368 = pneg %p258
        $region70: #{levit_stage_tinyfusion.3} parent=63 // pred_check_branch
          %370 = sbr.rel (%p368) target = $region72
        $region71: #{levit_stage_tinyfusion.3} parent=63 // pred_region
          %371 = dma.done [#allocation7], 16
        $region72: #{levit_stage_tinyfusion.3} parent=63 // pred_fallthru
          _
        %372 = sfence
        %p373 = scmp.lt.s32.totalorder %s27, 1
        %s374 = scalar_select %p373, %s27, 1
        %s375 = smul.addr %s374, 8
        %s376 = smul.addr %s375, 4
        %s377 = scalar_lea.vmem %s0, %s376
        %p378 = pneg %p48
        %p379 = pneg %p45
        %p380 = pneg %p69
        %p381 = pneg %p66
        %p382 = pneg %p90
        %p383 = pneg %p87
        %p384 = pneg %p111
        %p385 = pneg %p108
        %p386 = pneg %p132
        %p387 = pneg %p129
        %p388 = pneg %p153
        %p389 = pneg %p150
        %p390 = pneg %p174
        %p391 = pneg %p171
        %p392 = pneg %p195
        %p393 = pneg %p192
        %p394 = pneg %p216
        %p395 = pneg %p213
        %p396 = pneg %p237
        %p397 = pneg %p234
        %p398 = pneg %p258
        %p399 = pneg %p255
        %p400 = pneg %p284
        %p401 = pneg %p281
        %s402 = sand.u32 %s271, 1
        %s403 = scalar_lea.sflag [#allocation4], %s402
        %s404 = sand.u32 %s271, 1
        %s405 = smul.addr %s404, 64
        %s406 = scalar_lea.vmem [#allocation8], %s405
        %p407 = scmp.lt.s32.totalorder %s27, 1
        %s408 = scalar_select %p407, %s27, 1
        %s409 = smul.addr %s408, 8
        %s410 = smul.addr %s409, 4
        %s411 = scalar_lea.vmem %s0, %s410
        %v413 = vld [vmem:[%s411] sm:$0xf]
        %v414 = vld [vmem:[%s411 + $0x4] sm:$0xf]
        %v415 = vld [vmem:[%s411 + $0x8] sm:$0xf]
        %v416 = vld [vmem:[%s411 + $0xc] sm:$0xf]
        %v417 = vld [vmem:[%s411 + $0x10] sm:$0xf]
        %v418 = vld [vmem:[%s411 + $0x14] sm:$0xf]
        %v419 = vld [vmem:[%s411 + $0x18] sm:$0xf]
        %v420 = vld [vmem:[%s411 + $0x1c] sm:$0xf]
        %v421 = vunpack.c.l.bf16 %v413
        %v422 = vunpack.c.l.bf16 %v414
        %v423 = vunpack.c.l.bf16 %v415
        %v424 = vunpack.c.l.bf16 %v416
        %v425 = vunpack.c.l.bf16 %v417
        %v426 = vunpack.c.l.bf16 %v418
        %v427 = vunpack.c.l.bf16 %v419
        %v428 = vunpack.c.l.bf16 %v420
        %429 = vst [vmem:[%s406] sm:$0xff] %v421
        %430 = vst [vmem:[%s406 + $0x8] sm:$0xff] %v422
        %431 = vst [vmem:[%s406 + $0x10] sm:$0xff] %v423
        %432 = vst [vmem:[%s406 + $0x18] sm:$0xff] %v424
        %433 = vst [vmem:[%s406 + $0x20] sm:$0xff] %v425
        %434 = vst [vmem:[%s406 + $0x28] sm:$0xff] %v426
        %435 = vst [vmem:[%s406 + $0x30] sm:$0xff] %v427
        %436 = vst [vmem:[%s406 + $0x38] sm:$0xff] %v428
        %s437 = sld [smem:[#allocation6]]
        %p438 = scmp.ne.s32.totalorder %s437, 0
        // Predicated region
        $region73: #{levit_stage_tinyfusion.3} parent=63 // pred_check
          %p439 = pneg %p438
        $region74: #{levit_stage_tinyfusion.3} parent=63 // pred_check_branch
          %441 = sbr.rel (%p439) target = $region76
        $region75: #{levit_stage_tinyfusion.3} parent=63 // pred_region
          %v442 = vld [vmem:[%s406] sm:$0xff]
          %v443 = vld [vmem:[%s406 + $0x8] sm:$0xff]
          %v444 = vld [vmem:[%s406 + $0x10] sm:$0xff]
          %v445 = vld [vmem:[%s406 + $0x18] sm:$0xff]
          %v446 = vld [vmem:[%s406 + $0x20] sm:$0xff]
          %v447 = vld [vmem:[%s406 + $0x28] sm:$0xff]
          %v448 = vld [vmem:[%s406 + $0x30] sm:$0xff]
          %v449 = vld [vmem:[%s406 + $0x38] sm:$0xff]
          %v450 = vpack.c.bf16 %v443, %v442
          %v451 = vpack.c.bf16 %v445, %v444
          %v452 = vpack.c.bf16 %v447, %v446
          %v453 = vpack.c.bf16 %v449, %v448
          %v454 = vld [vmem:[%s1] sm:$0xff]
          %v455 = vld [vmem:[%s1 + $0x8] sm:$0xf]
          %v456 = vld [vmem:[%s1 + $0xc] sm:$0xff]
          %v457 = vld [vmem:[%s1 + $0x14] sm:$0xf]
          %v458 = vld [vmem:[%s1 + $0x18] sm:$0xff]
          %v459 = vld [vmem:[%s1 + $0x20] sm:$0xf]
          %v460 = vld [vmem:[%s1 + $0x24] sm:$0xff]
          %v461 = vld [vmem:[%s1 + $0x2c] sm:$0xf]
          %v462 = vld [vmem:[%s1 + $0x30] sm:$0xff]
          %v463 = vld [vmem:[%s1 + $0x38] sm:$0xf]
          %v464 = vld [vmem:[%s1 + $0x3c] sm:$0xff]
          %v465 = vld [vmem:[%s1 + $0x44] sm:$0xf]
          %v466 = vld [vmem:[%s1 + $0x48] sm:$0xff]
          %v467 = vld [vmem:[%s1 + $0x50] sm:$0xf]
          %v468 = vld [vmem:[%s1 + $0x54] sm:$0xff]
          %v469 = vld [vmem:[%s1 + $0x5c] sm:$0xf]
          %v470 = vld [vmem:[%s1 + $0x60] sm:$0xff]
          %v471 = vld [vmem:[%s1 + $0x68] sm:$0xf]
          %v472 = vld [vmem:[%s1 + $0x6c] sm:$0xff]
          %v473 = vld [vmem:[%s1 + $0x74] sm:$0xf]
          %v474 = vld [vmem:[%s1 + $0x78] sm:$0xff]
          %v475 = vld [vmem:[%s1 + $0x80] sm:$0xf]
          %v476 = vld [vmem:[%s1 + $0x84] sm:$0xff]
          %v477 = vld [vmem:[%s1 + $0x8c] sm:$0xf]
          %v478 = vld [vmem:[%s1 + $0x90] sm:$0xff]
          %v479 = vld [vmem:[%s1 + $0x98] sm:$0xf]
          %v480 = vld [vmem:[%s1 + $0x9c] sm:$0xff]
          %v481 = vld [vmem:[%s1 + $0xa4] sm:$0xf]
          %v482 = vld [vmem:[%s1 + $0xa8] sm:$0xff]
          %v483 = vld [vmem:[%s1 + $0xb0] sm:$0xf]
          %v484 = vld [vmem:[%s1 + $0xb4] sm:$0xff]
          %v485 = vld [vmem:[%s1 + $0xbc] sm:$0xf]
          %v486 = vld [vmem:[%s2] sm:$0x7]
          %v488 = vlaneseq
          %v489 = vshrl.u32 %v488, 7
          %v490 = vsub.s32 0, %v489
          %v491 = vrot.slane %v486, %v490
          %v492 = vlaneseq
          %v493 = vshrl.u32 %v492, 7
          %v494 = vsub.s32 1, %v493
          %v495 = vrot.slane %v486, %v494
          %v496 = vlaneseq
          %v497 = vshrl.u32 %v496, 7
          %v498 = vsub.s32 2, %v497
          %v499 = vrot.slane %v486, %v498
          %v535 = vunpack.c.l.b16 %v454
          %v536 = vunpack.c.h.b16 %v454
          %v537 = vunpack.c.l.b16 %v455
          %v538 = vunpack.c.l.b16 %v456
          %v539 = vunpack.c.h.b16 %v456
          %v540 = vunpack.c.l.b16 %v457
          %v541 = vunpack.c.l.b16 %v458
          %v542 = vunpack.c.h.b16 %v458
          %v543 = vunpack.c.l.b16 %v459
          %v544 = vunpack.c.l.b16 %v460
          %v545 = vunpack.c.h.b16 %v460
          %v546 = vunpack.c.l.b16 %v461
          %v547 = vunpack.c.l.b16 %v462
          %v548 = vunpack.c.h.b16 %v462
          %v549 = vunpack.c.l.b16 %v463
          %v550 = vunpack.c.l.b16 %v464
          %v551 = vunpack.c.h.b16 %v464
          %v552 = vunpack.c.l.b16 %v465
          %v553 = vunpack.c.l.b16 %v466
          %v554 = vunpack.c.h.b16 %v466
          %v555 = vunpack.c.l.b16 %v467
          %v556 = vunpack.c.l.b16 %v468
          %v557 = vunpack.c.h.b16 %v468
          %v558 = vunpack.c.l.b16 %v469
          %v559 = vunpack.c.l.b16 %v470
          %v560 = vunpack.c.h.b16 %v470
          %v561 = vunpack.c.l.b16 %v471
          %v562 = vunpack.c.l.b16 %v472
          %v563 = vunpack.c.h.b16 %v472
          %v564 = vunpack.c.l.b16 %v473
          %v565 = vunpack.c.l.b16 %v474
          %v566 = vunpack.c.h.b16 %v474
          %v567 = vunpack.c.l.b16 %v475
          %v568 = vunpack.c.l.b16 %v476
          %v569 = vunpack.c.h.b16 %v476
          %v570 = vunpack.c.l.b16 %v477
          %v571 = vunpack.c.l.b16 %v478
          %v572 = vunpack.c.h.b16 %v478
          %v573 = vunpack.c.l.b16 %v479
          %v574 = vunpack.c.l.b16 %v480
          %v575 = vunpack.c.h.b16 %v480
          %v576 = vunpack.c.l.b16 %v481
          %v577 = vunpack.c.l.b16 %v482
          %v578 = vunpack.c.h.b16 %v482
          %v579 = vunpack.c.l.b16 %v483
          %v580 = vunpack.c.l.b16 %v484
          %v581 = vunpack.c.h.b16 %v484
          %v582 = vunpack.c.l.b16 %v485
          %v583 = vpack.c.b16 %v538, %v535
          %v584 = vpack.c.b16 %v539, %v536
          %v585 = vpack.c.b16 %v540, %v537
          %v586 = vpack.c.b16 %v544, %v541
          %v587 = vpack.c.b16 %v545, %v542
          %v588 = vpack.c.b16 %v546, %v543
          %v589 = vpack.c.b16 %v550, %v547
          %v590 = vpack.c.b16 %v551, %v548
          %v591 = vpack.c.b16 %v552, %v549
          %v592 = vpack.c.b16 %v556, %v553
          %v593 = vpack.c.b16 %v557, %v554
          %v594 = vpack.c.b16 %v558, %v555
          %v595 = vpack.c.b16 %v562, %v559
          %v596 = vpack.c.b16 %v563, %v560
          %v597 = vpack.c.b16 %v564, %v561
          %v598 = vpack.c.b16 %v568, %v565
          %v599 = vpack.c.b16 %v569, %v566
          %v600 = vpack.c.b16 %v570, %v567
          %v601 = vpack.c.b16 %v574, %v571
          %v602 = vpack.c.b16 %v575, %v572
          %v603 = vpack.c.b16 %v576, %v573
          %v604 = vpack.c.b16 %v580, %v577
          %v605 = vpack.c.b16 %v581, %v578
          %v606 = vpack.c.b16 %v582, %v579
          %631 = vmatprep.subr.bf16.mxu0 %v584
          %632 = vmatpush1.bf16.msra.mxu0 %v583
          %633 = vmatprep.subr.bf16.mxu0 %v587
          %634 = vmatpush1.bf16.msra.mxu0 %v586
          %635 = vmatprep.subr.bf16.mxu0 %v590
          %636 = vmatpush1.bf16.msra.mxu0 %v589
          %637 = vmatprep.subr.bf16.mxu0 %v593
          %638 = vmatpush1.bf16.msra.mxu0 %v592
          %639 = vmatprep.subr.bf16.mxu0 %v596
          %640 = vmatpush1.bf16.msra.mxu0 %v595
          %641 = vmatprep.subr.bf16.mxu0 %v599
          %642 = vmatpush1.bf16.msra.mxu0 %v598
          %643 = vmatprep.subr.bf16.mxu0 %v602
          %644 = vmatpush1.bf16.msra.mxu0 %v601
          %645 = vmatprep.subr.bf16.mxu0 %v605
          %646 = vmatpush1.bf16.msra.mxu0 %v604
          %647 = vmatprep.subr.bf16.mxu0 0
          %648 = vmatpush1.bf16.msra.mxu0 0
          %649 = vmatprep.subr.bf16.mxu0 0
          %650 = vmatpush1.bf16.msra.mxu0 0
          %651 = vmatprep.subr.bf16.mxu0 0
          %652 = vmatpush1.bf16.msra.mxu0 0
          %653 = vmatprep.subr.bf16.mxu0 0
          %654 = vmatpush1.bf16.msra.mxu0 0
          %655 = vmatprep.subr.bf16.mxu0 0
          %656 = vmatpush1.bf16.msra.mxu0 0
          %657 = vmatprep.subr.bf16.mxu0 0
          %658 = vmatpush1.bf16.msra.mxu0 0
          %659 = vmatprep.subr.bf16.mxu0 0
          %660 = vmatpush1.bf16.msra.mxu0 0
          %661 = vmatprep.subr.bf16.mxu0 0
          %662 = vmatpush1.bf16.msra.mxu0 0
          %663 = vmatprep.mubr.bf16.mxu0 0
          %664 = vmatmul.mubr.bf16.gmra.mrb[0].mxu0 %v450
          %v665 = vpop.f32.mrb[0].mxu0
          %v666 = vadd.f32 %v491, %v665
          %v667 = vpop.f32.mrb[0].mxu0
          %v668 = vadd.f32 %v495, %v667
          %v669 = vpop.f32.mrb[0].mxu0
          %v670 = vadd.f32 %v491, %v669
          %v671 = vpop.f32.mrb[0].mxu0
          %v672 = vadd.f32 %v495, %v671
          %673 = vmatprep.mubr.bf16.mxu0 0
          %674 = vmatmul.mubr.bf16.gmra.mrb[0].mxu0 %v451
          %v675 = vpop.f32.mrb[0].mxu0
          %v676 = vadd.f32 %v491, %v675
          %v677 = vpop.f32.mrb[0].mxu0
          %v678 = vadd.f32 %v495, %v677
          %v679 = vpop.f32.mrb[0].mxu0
          %v680 = vadd.f32 %v491, %v679
          %v681 = vpop.f32.mrb[0].mxu0
          %v682 = vadd.f32 %v495, %v681
          %683 = vmatprep.mubr.bf16.mxu0 0
          %684 = vmatmul.mubr.bf16.gmra.mrb[0].mxu0 %v452
          %v685 = vpop.f32.mrb[0].mxu0
          %v686 = vadd.f32 %v491, %v685
          %v687 = vpop.f32.mrb[0].mxu0
          %v688 = vadd.f32 %v495, %v687
          %v689 = vpop.f32.mrb[0].mxu0
          %v690 = vadd.f32 %v491, %v689
          %v691 = vpop.f32.mrb[0].mxu0
          %v692 = vadd.f32 %v495, %v691
          %693 = vmatprep.mubr.bf16.mxu0 0
          %694 = vmatmul.mubr.bf16.gmra.mrb[0].mxu0 %v453
          %v695 = vpop.f32.mrb[0].mxu0
          %v696 = vadd.f32 %v491, %v695
          %v697 = vpop.f32.mrb[0].mxu0
          %v698 = vadd.f32 %v495, %v697
          %v699 = vpop.f32.mrb[0].mxu0
          %v700 = vadd.f32 %v491, %v699
          %v701 = vpop.f32.mrb[0].mxu0
          %v702 = vadd.f32 %v495, %v701
          %703 = vdwg.mxu0
          %704 = vmatprep.subr.bf16.mxu0 0
          %705 = vmatpush1.bf16.msra.mxu0 %v585
          %706 = vmatprep.subr.bf16.mxu0 0
          %707 = vmatpush1.bf16.msra.mxu0 %v588
          %708 = vmatprep.subr.bf16.mxu0 0
          %709 = vmatpush1.bf16.msra.mxu0 %v591
          %710 = vmatprep.subr.bf16.mxu0 0
          %711 = vmatpush1.bf16.msra.mxu0 %v594
          %712 = vmatprep.subr.bf16.mxu0 0
          %713 = vmatpush1.bf16.msra.mxu0 %v597
          %714 = vmatprep.subr.bf16.mxu0 0
          %715 = vmatpush1.bf16.msra.mxu0 %v600
          %716 = vmatprep.subr.bf16.mxu0 0
          %717 = vmatpush1.bf16.msra.mxu0 %v603
          %718 = vmatprep.subr.bf16.mxu0 0
          %719 = vmatpush1.bf16.msra.mxu0 %v606
          %720 = vmatprep.subr.bf16.mxu0 0
          %721 = vmatpush1.bf16.msra.mxu0 0
          %722 = vmatprep.subr.bf16.mxu0 0
          %723 = vmatpush1.bf16.msra.mxu0 0
          %724 = vmatprep.subr.bf16.mxu0 0
          %725 = vmatpush1.bf16.msra.mxu0 0
          %726 = vmatprep.subr.bf16.mxu0 0
          %727 = vmatpush1.bf16.msra.mxu0 0
          %728 = vmatprep.subr.bf16.mxu0 0
          %729 = vmatpush1.bf16.msra.mxu0 0
          %730 = vmatprep.subr.bf16.mxu0 0
          %731 = vmatpush1.bf16.msra.mxu0 0
          %732 = vmatprep.subr.bf16.mxu0 0
          %733 = vmatpush1.bf16.msra.mxu0 0
          %734 = vmatprep.subr.bf16.mxu0 0
          %735 = vmatpush1.bf16.msra.mxu0 0
          %736 = vmatprep.mubr.bf16.mxu0 0
          %737 = vmatmul.mubr.bf16.gmra.mrb[0].mxu0 %v450
          %v738 = vpop.f32.mrb[0].mxu0
          %v739 = vadd.f32 %v499, %v738
          %v740 = vpop.f32.mrb[0].mxu0
          %v741 = vpop.f32.mrb[0].mxu0
          %v742 = vadd.f32 %v499, %v741
          %v743 = vpop.f32.mrb[0].mxu0
          %744 = vmatprep.mubr.bf16.mxu0 0
          %745 = vmatmul.mubr.bf16.gmra.mrb[0].mxu0 %v451
          %v746 = vpop.f32.mrb[0].mxu0
          %v747 = vadd.f32 %v499, %v746
          %v748 = vpop.f32.mrb[0].mxu0
          %v749 = vpop.f32.mrb[0].mxu0
          %v750 = vadd.f32 %v499, %v749
          %v751 = vpop.f32.mrb[0].mxu0
          %752 = vmatprep.mubr.bf16.mxu0 0
          %753 = vmatmul.mubr.bf16.gmra.mrb[0].mxu0 %v452
          %v754 = vpop.f32.mrb[0].mxu0
          %v755 = vadd.f32 %v499, %v754
          %v756 = vpop.f32.mrb[0].mxu0
          %v757 = vpop.f32.mrb[0].mxu0
          %v758 = vadd.f32 %v499, %v757
          %v759 = vpop.f32.mrb[0].mxu0
          %760 = vmatprep.mubr.bf16.mxu0 0
          %761 = vmatmul.mubr.bf16.gmra.mrb[0].mxu0 %v453
          %v762 = vpop.f32.mrb[0].mxu0
          %v763 = vadd.f32 %v499, %v762
          %v764 = vpop.f32.mrb[0].mxu0
          %v765 = vpop.f32.mrb[0].mxu0
          %v766 = vadd.f32 %v499, %v765
          %v767 = vpop.f32.mrb[0].mxu0
          %768 = vdwg.mxu0
          %v769 = vpack.c.bf16 %v670, %v666
          %v770 = vpack.c.bf16 %v680, %v676
          %v771 = vpack.c.bf16 %v690, %v686
          %v772 = vpack.c.bf16 %v700, %v696
          %v773 = vpack.c.bf16 %v672, %v668
          %v774 = vpack.c.bf16 %v682, %v678
          %v775 = vpack.c.bf16 %v692, %v688
          %v776 = vpack.c.bf16 %v702, %v698
          %v777 = vpack.c.bf16 %v742, %v739
          %v778 = vpack.c.bf16 %v750, %v747
          %v779 = vpack.c.bf16 %v758, %v755
          %v780 = vpack.c.bf16 %v766, %v763
          %vm781 = vcmask 261120
          %v783 = vsel %vm781, %v769, 0
          %v786 = vsel %vm781, %v770, 0
          %v789 = vsel %vm781, %v771, 0
          %v792 = vsel %vm781, %v772, 0
          %v795 = vsel %vm781, %v773, 0
          %v798 = vsel %vm781, %v774, 0
          %v801 = vsel %vm781, %v775, 0
          %v804 = vsel %vm781, %v776, 0
          %806 = vmatprep.subr.bf16.mxu0 0
          %807 = vmatpush1.bf16.xpose.msra.mxu0 %v795
          %808 = vmatprep.subr.bf16.mxu0 0
          %809 = vmatpush1.bf16.xpose.msra.mxu0 %v798
          %810 = vmatprep.subr.bf16.mxu0 0
          %811 = vmatpush1.bf16.xpose.msra.mxu0 %v801
          %812 = vmatprep.subr.bf16.mxu0 0
          %813 = vmatpush1.bf16.xpose.msra.mxu0 %v804
          %814 = vmatprep.subr.bf16.mxu0 0
          %815 = vmatpush1.bf16.xpose.msra.mxu0 0
          %816 = vmatprep.subr.bf16.mxu0 0
          %817 = vmatpush1.bf16.xpose.msra.mxu0 0
          %818 = vmatprep.subr.bf16.mxu0 0
          %819 = vmatpush1.bf16.xpose.msra.mxu0 0
          %820 = vmatprep.subr.bf16.mxu0 0
          %821 = vmatpush1.bf16.xpose.msra.mxu0 0
          %822 = vmatprep.subr.bf16.mxu0 0
          %823 = vmatpush1.bf16.xpose.msra.mxu0 0
          %824 = vmatprep.subr.bf16.mxu0 0
          %825 = vmatpush1.bf16.xpose.msra.mxu0 0
          %826 = vmatprep.subr.bf16.mxu0 0
          %827 = vmatpush1.bf16.xpose.msra.mxu0 0
          %828 = vmatprep.subr.bf16.mxu0 0
          %829 = vmatpush1.bf16.xpose.msra.mxu0 0
          %830 = vmatprep.subr.bf16.mxu0 0
          %831 = vmatpush1.bf16.xpose.msra.mxu0 0
          %832 = vmatprep.subr.bf16.mxu0 0
          %833 = vmatpush1.bf16.xpose.msra.mxu0 0
          %834 = vmatprep.subr.bf16.mxu0 0
          %835 = vmatpush1.bf16.xpose.msra.mxu0 0
          %836 = vmatprep.subr.bf16.mxu0 0
          %837 = vmatpush1.bf16.xpose.msra.mxu0 0
          %838 = vmatprep.mubr.bf16.mxu0 0
          %839 = vmatmul.mubr.bf16.gmra.mrb[0].mxu0 %v783
          %v840 = vpop.f32.mrb[0].mxu0
          %v841 = vadd.f32 0.0, %v840
          %v842 = vpop.f32.mrb[0].mxu0
          %v843 = vpop.f32.mrb[0].mxu0
          %v844 = vadd.f32 0.0, %v843
          %v845 = vpop.f32.mrb[0].mxu0
          %846 = vmatprep.mubr.bf16.mxu0 0
          %847 = vmatmul.mubr.bf16.gmra.mrb[0].mxu0 %v786
          %v848 = vpop.f32.mrb[0].mxu0
          %v849 = vadd.f32 0.0, %v848
          %v850 = vpop.f32.mrb[0].mxu0
          %v851 = vpop.f32.mrb[0].mxu0
          %v852 = vadd.f32 0.0, %v851
          %v853 = vpop.f32.mrb[0].mxu0
          %854 = vmatprep.mubr.bf16.mxu0 0
          %855 = vmatmul.mubr.bf16.gmra.mrb[0].mxu0 %v789
          %v856 = vpop.f32.mrb[0].mxu0
          %v857 = vadd.f32 0.0, %v856
          %v858 = vpop.f32.mrb[0].mxu0
          %v859 = vpop.f32.mrb[0].mxu0
          %v860 = vadd.f32 0.0, %v859
          %v861 = vpop.f32.mrb[0].mxu0
          %862 = vmatprep.mubr.bf16.mxu0 0
          %863 = vmatmul.mubr.bf16.gmra.mrb[0].mxu0 %v792
          %v864 = vpop.f32.mrb[0].mxu0
          %v865 = vadd.f32 0.0, %v864
          %v866 = vpop.f32.mrb[0].mxu0
          %v867 = vpop.f32.mrb[0].mxu0
          %v868 = vadd.f32 0.0, %v867
          %v869 = vpop.f32.mrb[0].mxu0
          %870 = vdwg.mxu0
          %v871 = vmul.f32 %v841, 0.17677669
          %v872 = vmul.f32 %v844, 0.17677669
          %v873 = vmul.f32 %v849, 0.17677669
          %v874 = vmul.f32 %v852, 0.17677669
          %v875 = vmul.f32 %v857, 0.17677669
          %v876 = vmul.f32 %v860, 0.17677669
          %v877 = vmul.f32 %v865, 0.17677669
          %v878 = vmul.f32 %v868, 0.17677669
          %vm879 = vcmask 523264
          %v880 = vsel %vm879, %v871, -inf
          %881 = vmax.xlane.f32.xlu0 %v880
          %v882 = vpop.xlane.xlu0 %881
          %v883 = vsel %vm879, %v872, -inf
          %884 = vmax.xlane.f32.xlu0 %v883
          %v885 = vpop.xlane.xlu0 %884
          %v886 = vsel %vm879, %v873, -inf
          %887 = vmax.xlane.f32.xlu0 %v886
          %v888 = vpop.xlane.xlu0 %887
          %v889 = vsel %vm879, %v874, -inf
          %890 = vmax.xlane.f32.xlu0 %v889
          %v891 = vpop.xlane.xlu0 %890
          %v892 = vsel %vm879, %v875, -inf
          %893 = vmax.xlane.f32.xlu0 %v892
          %v894 = vpop.xlane.xlu0 %893
          %v895 = vsel %vm879, %v876, -inf
          %896 = vmax.xlane.f32.xlu0 %v895
          %v897 = vpop.xlane.xlu0 %896
          %v898 = vsel %vm879, %v877, -inf
          %899 = vmax.xlane.f32.xlu0 %v898
          %v900 = vpop.xlane.xlu0 %899
          %v901 = vsel %vm879, %v878, -inf
          %902 = vmax.xlane.f32.xlu0 %v901
          %v903 = vpop.xlane.xlu0 %902
          %v904 = vsub.f32 %v871, %v882
          %v905 = vsub.f32 %v872, %v885
          %v906 = vsub.f32 %v873, %v888
          %v907 = vsub.f32 %v874, %v891
          %v908 = vsub.f32 %v875, %v894
          %v909 = vsub.f32 %v876, %v897
          %v910 = vsub.f32 %v877, %v900
          %v911 = vsub.f32 %v878, %v903
          %v912 = vmul.f32 %v904, 1.442695
          %v913 = vpow.pop %v912
          %v914 = vmul.f32 %v905, 1.442695
          %v915 = vpow.pop %v914
          %v916 = vmul.f32 %v906, 1.442695
          %v917 = vpow.pop %v916
          %v918 = vmul.f32 %v907, 1.442695
          %v919 = vpow.pop %v918
          %v920 = vmul.f32 %v908, 1.442695
          %v921 = vpow.pop %v920
          %v922 = vmul.f32 %v909, 1.442695
          %v923 = vpow.pop %v922
          %v924 = vmul.f32 %v910, 1.442695
          %v925 = vpow.pop %v924
          %v926 = vmul.f32 %v911, 1.442695
          %v927 = vpow.pop %v926
          %v928 = vsel %vm879, %v913, 0.0
          %929 = vadd.xlane.f32.xlu0 %v928
          %v930 = vpop.xlane.xlu0 %929
          %v931 = vsel %vm879, %v915, 0.0
          %932 = vadd.xlane.f32.xlu0 %v931
          %v933 = vpop.xlane.xlu0 %932
          %v934 = vsel %vm879, %v917, 0.0
          %935 = vadd.xlane.f32.xlu0 %v934
          %v936 = vpop.xlane.xlu0 %935
          %v937 = vsel %vm879, %v919, 0.0
          %938 = vadd.xlane.f32.xlu0 %v937
          %v939 = vpop.xlane.xlu0 %938
          %v940 = vsel %vm879, %v921, 0.0
          %941 = vadd.xlane.f32.xlu0 %v940
          %v942 = vpop.xlane.xlu0 %941
          %v943 = vsel %vm879, %v923, 0.0
          %944 = vadd.xlane.f32.xlu0 %v943
          %v945 = vpop.xlane.xlu0 %944
          %v946 = vsel %vm879, %v925, 0.0
          %947 = vadd.xlane.f32.xlu0 %v946
          %v948 = vpop.xlane.xlu0 %947
          %v949 = vsel %vm879, %v927, 0.0
          %950 = vadd.xlane.f32.xlu0 %v949
          %v951 = vpop.xlane.xlu0 %950
          %v952 = vrcp.pop %v930
          %v953 = vrcp.pop %v933
          %v954 = vrcp.pop %v936
          %v955 = vrcp.pop %v939
          %v956 = vrcp.pop %v942
          %v957 = vrcp.pop %v945
          %v958 = vrcp.pop %v948
          %v959 = vrcp.pop %v951
          %v960 = vmul.f32 %v913, %v952
          %v961 = vmul.f32 %v915, %v953
          %v962 = vmul.f32 %v917, %v954
          %v963 = vmul.f32 %v919, %v955
          %v964 = vmul.f32 %v921, %v956
          %v965 = vmul.f32 %v923, %v957
          %v966 = vmul.f32 %v925, %v958
          %v967 = vmul.f32 %v927, %v959
          %v968 = vpack.c.bf16 %v961, %v960
          %v969 = vpack.c.bf16 %v963, %v962
          %v970 = vpack.c.bf16 %v965, %v964
          %v971 = vpack.c.bf16 %v967, %v966
          %v973 = vsel %vm879, %v968, 0
          %v976 = vsel %vm879, %v969, 0
          %v979 = vsel %vm879, %v970, 0
          %v982 = vsel %vm879, %v971, 0
          %984 = vmatprep.subr.bf16.mxu0 0
          %985 = vmatpush1.bf16.msra.mxu0 %v777
          %986 = vmatprep.subr.bf16.mxu0 0
          %987 = vmatpush1.bf16.msra.mxu0 %v778
          %988 = vmatprep.subr.bf16.mxu0 0
          %989 = vmatpush1.bf16.msra.mxu0 %v779
          %990 = vmatprep.subr.bf16.mxu0 0
          %991 = vmatpush1.bf16.msra.mxu0 %v780
          %992 = vmatprep.subr.bf16.mxu0 0
          %993 = vmatpush1.bf16.msra.mxu0 0
          %994 = vmatprep.subr.bf16.mxu0 0
          %995 = vmatpush1.bf16.msra.mxu0 0
          %996 = vmatprep.subr.bf16.mxu0 0
          %997 = vmatpush1.bf16.msra.mxu0 0
          %998 = vmatprep.subr.bf16.mxu0 0
          %999 = vmatpush1.bf16.msra.mxu0 0
          %1000 = vmatprep.subr.bf16.mxu0 0
          %1001 = vmatpush1.bf16.msra.mxu0 0
          %1002 = vmatprep.subr.bf16.mxu0 0
          %1003 = vmatpush1.bf16.msra.mxu0 0
          %1004 = vmatprep.subr.bf16.mxu0 0
          %1005 = vmatpush1.bf16.msra.mxu0 0
          %1006 = vmatprep.subr.bf16.mxu0 0
          %1007 = vmatpush1.bf16.msra.mxu0 0
          %1008 = vmatprep.subr.bf16.mxu0 0
          %1009 = vmatpush1.bf16.msra.mxu0 0
          %1010 = vmatprep.subr.bf16.mxu0 0
          %1011 = vmatpush1.bf16.msra.mxu0 0
          %1012 = vmatprep.subr.bf16.mxu0 0
          %1013 = vmatpush1.bf16.msra.mxu0 0
          %1014 = vmatprep.subr.bf16.mxu0 0
          %1015 = vmatpush1.bf16.msra.mxu0 0
          %1016 = vmatprep.mubr.bf16.mxu0 0
          %1017 = vmatmul.mubr.bf16.gmra.mrb[0].mxu0 %v973
          %v1018 = vpop.f32.mrb[0].mxu0
          %v1019 = vadd.f32 0.0, %v1018
          %v1020 = vpop.f32.mrb[0].mxu0
          %v1021 = vpop.f32.mrb[0].mxu0
          %v1022 = vadd.f32 0.0, %v1021
          %v1023 = vpop.f32.mrb[0].mxu0
          %1024 = vmatprep.mubr.bf16.mxu0 0
          %1025 = vmatmul.mubr.bf16.gmra.mrb[0].mxu0 %v976
          %v1026 = vpop.f32.mrb[0].mxu0
          %v1027 = vadd.f32 0.0, %v1026
          %v1028 = vpop.f32.mrb[0].mxu0
          %v1029 = vpop.f32.mrb[0].mxu0
          %v1030 = vadd.f32 0.0, %v1029
          %v1031 = vpop.f32.mrb[0].mxu0
          %1032 = vmatprep.mubr.bf16.mxu0 0
          %1033 = vmatmul.mubr.bf16.gmra.mrb[0].mxu0 %v979
          %v1034 = vpop.f32.mrb[0].mxu0
          %v1035 = vadd.f32 0.0, %v1034
          %v1036 = vpop.f32.mrb[0].mxu0
          %v1037 = vpop.f32.mrb[0].mxu0
          %v1038 = vadd.f32 0.0, %v1037
          %v1039 = vpop.f32.mrb[0].mxu0
          %1040 = vmatprep.mubr.bf16.mxu0 0
          %1041 = vmatmul.mubr.bf16.gmra.mrb[0].mxu0 %v982
          %v1042 = vpop.f32.mrb[0].mxu0
          %v1043 = vadd.f32 0.0, %v1042
          %v1044 = vpop.f32.mrb[0].mxu0
          %v1045 = vpop.f32.mrb[0].mxu0
          %v1046 = vadd.f32 0.0, %v1045
          %v1047 = vpop.f32.mrb[0].mxu0
          %1048 = vdwg.mxu0
          %1049 = vst.msk [vmem:[#allocation2] sm:$0xff] %vm781, %v1019
          %1050 = vst.msk [vmem:[#allocation2 + $0x8] sm:$0xff] %vm781, %v1022
          %1051 = vst.msk [vmem:[#allocation2 + $0x10] sm:$0xff] %vm781, %v1027
          %1052 = vst.msk [vmem:[#allocation2 + $0x18] sm:$0xff] %vm781, %v1030
          %1053 = vst.msk [vmem:[#allocation2 + $0x20] sm:$0xff] %vm781, %v1035
          %1054 = vst.msk [vmem:[#allocation2 + $0x28] sm:$0xff] %vm781, %v1038
          %1055 = vst.msk [vmem:[#allocation2 + $0x30] sm:$0xff] %vm781, %v1043
          %1056 = vst.msk [vmem:[#allocation2 + $0x38] sm:$0xff] %vm781, %v1046
          %1061 = vrot.lane.b32.xlu0 %v769, 96
          %v1062 = vpop.permute.xlu0 %1061
          %1063 = vrot.lane.b32.xlu0 %v770, 96
          %v1064 = vpop.permute.xlu0 %1063
          %1065 = vrot.lane.b32.xlu0 %v771, 96
          %v1066 = vpop.permute.xlu0 %1065
          %1067 = vrot.lane.b32.xlu0 %v772, 96
          %v1068 = vpop.permute.xlu0 %1067
          %1073 = vrot.lane.b32.xlu0 %v773, 96
          %v1074 = vpop.permute.xlu0 %1073
          %1075 = vrot.lane.b32.xlu0 %v774, 96
          %v1076 = vpop.permute.xlu0 %1075
          %1077 = vrot.lane.b32.xlu0 %v775, 96
          %v1078 = vpop.permute.xlu0 %1077
          %1079 = vrot.lane.b32.xlu0 %v776, 96
          %v1080 = vpop.permute.xlu0 %1079
          %v1082 = vsel %vm781, %v1062, 0
          %v1085 = vsel %vm781, %v1064, 0
          %v1088 = vsel %vm781, %v1066, 0
          %v1091 = vsel %vm781, %v1068, 0
          %v1094 = vsel %vm781, %v1074, 0
          %v1097 = vsel %vm781, %v1076, 0
          %v1100 = vsel %vm781, %v1078, 0
          %v1103 = vsel %vm781, %v1080, 0
          %1105 = vmatprep.subr.bf16.mxu0 0
          %1106 = vmatpush1.bf16.xpose.msra.mxu0 %v1094
          %1107 = vmatprep.subr.bf16.mxu0 0
          %1108 = vmatpush1.bf16.xpose.msra.mxu0 %v1097
          %1109 = vmatprep.subr.bf16.mxu0 0
          %1110 = vmatpush1.bf16.xpose.msra.mxu0 %v1100
          %1111 = vmatprep.subr.bf16.mxu0 0
          %1112 = vmatpush1.bf16.xpose.msra.mxu0 %v1103
          %1113 = vmatprep.subr.bf16.mxu0 0
          %1114 = vmatpush1.bf16.xpose.msra.mxu0 0
          %1115 = vmatprep.subr.bf16.mxu0 0
          %1116 = vmatpush1.bf16.xpose.msra.mxu0 0
          %1117 = vmatprep.subr.bf16.mxu0 0
          %1118 = vmatpush1.bf16.xpose.msra.mxu0 0
          %1119 = vmatprep.subr.bf16.mxu0 0
          %1120 = vmatpush1.bf16.xpose.msra.mxu0 0
          %1121 = vmatprep.subr.bf16.mxu0 0
          %1122 = vmatpush1.bf16.xpose.msra.mxu0 0
          %1123 = vmatprep.subr.bf16.mxu0 0
          %1124 = vmatpush1.bf16.xpose.msra.mxu0 0
          %1125 = vmatprep.subr.bf16.mxu0 0
          %1126 = vmatpush1.bf16.xpose.msra.mxu0 0
          %1127 = vmatprep.subr.bf16.mxu0 0
          %1128 = vmatpush1.bf16.xpose.msra.mxu0 0
          %1129 = vmatprep.subr.bf16.mxu0 0
          %1130 = vmatpush1.bf16.xpose.msra.mxu0 0
          %1131 = vmatprep.subr.bf16.mxu0 0
          %1132 = vmatpush1.bf16.xpose.msra.mxu0 0
          %1133 = vmatprep.subr.bf16.mxu0 0
          %1134 = vmatpush1.bf16.xpose.msra.mxu0 0
          %1135 = vmatprep.subr.bf16.mxu0 0
          %1136 = vmatpush1.bf16.xpose.msra.mxu0 0
          %1137 = vmatprep.mubr.bf16.mxu0 0
          %1138 = vmatmul.mubr.bf16.gmra.mrb[0].mxu0 %v1082
          %v1139 = vpop.f32.mrb[0].mxu0
          %v1140 = vadd.f32 0.0, %v1139
          %v1141 = vpop.f32.mrb[0].mxu0
          %v1142 = vpop.f32.mrb[0].mxu0
          %v1143 = vadd.f32 0.0, %v1142
          %v1144 = vpop.f32.mrb[0].mxu0
          %1145 = vmatprep.mubr.bf16.mxu0 0
          %1146 = vmatmul.mubr.bf16.gmra.mrb[0].mxu0 %v1085
          %v1147 = vpop.f32.mrb[0].mxu0
          %v1148 = vadd.f32 0.0, %v1147
          %v1149 = vpop.f32.mrb[0].mxu0
          %v1150 = vpop.f32.mrb[0].mxu0
          %v1151 = vadd.f32 0.0, %v1150
          %v1152 = vpop.f32.mrb[0].mxu0
          %1153 = vmatprep.mubr.bf16.mxu0 0
          %1154 = vmatmul.mubr.bf16.gmra.mrb[0].mxu0 %v1088
          %v1155 = vpop.f32.mrb[0].mxu0
          %v1156 = vadd.f32 0.0, %v1155
          %v1157 = vpop.f32.mrb[0].mxu0
          %v1158 = vpop.f32.mrb[0].mxu0
          %v1159 = vadd.f32 0.0, %v1158
          %v1160 = vpop.f32.mrb[0].mxu0
          %1161 = vmatprep.mubr.bf16.mxu0 0
          %1162 = vmatmul.mubr.bf16.gmra.mrb[0].mxu0 %v1091
          %v1163 = vpop.f32.mrb[0].mxu0
          %v1164 = vadd.f32 0.0, %v1163
          %v1165 = vpop.f32.mrb[0].mxu0
          %v1166 = vpop.f32.mrb[0].mxu0
          %v1167 = vadd.f32 0.0, %v1166
          %v1168 = vpop.f32.mrb[0].mxu0
          %1169 = vdwg.mxu0
          %v1170 = vmul.f32 %v1140, 0.17677669
          %v1171 = vmul.f32 %v1143, 0.17677669
          %v1172 = vmul.f32 %v1148, 0.17677669
          %v1173 = vmul.f32 %v1151, 0.17677669
          %v1174 = vmul.f32 %v1156, 0.17677669
          %v1175 = vmul.f32 %v1159, 0.17677669
          %v1176 = vmul.f32 %v1164, 0.17677669
          %v1177 = vmul.f32 %v1167, 0.17677669
          %v1178 = vsel %vm879, %v1170, -inf
          %1179 = vmax.xlane.f32.xlu0 %v1178
          %v1180 = vpop.xlane.xlu0 %1179
          %v1181 = vsel %vm879, %v1171, -inf
          %1182 = vmax.xlane.f32.xlu0 %v1181
          %v1183 = vpop.xlane.xlu0 %1182
          %v1184 = vsel %vm879, %v1172, -inf
          %1185 = vmax.xlane.f32.xlu0 %v1184
          %v1186 = vpop.xlane.xlu0 %1185
          %v1187 = vsel %vm879, %v1173, -inf
          %1188 = vmax.xlane.f32.xlu0 %v1187
          %v1189 = vpop.xlane.xlu0 %1188
          %v1190 = vsel %vm879, %v1174, -inf
          %1191 = vmax.xlane.f32.xlu0 %v1190
          %v1192 = vpop.xlane.xlu0 %1191
          %v1193 = vsel %vm879, %v1175, -inf
          %1194 = vmax.xlane.f32.xlu0 %v1193
          %v1195 = vpop.xlane.xlu0 %1194
          %v1196 = vsel %vm879, %v1176, -inf
          %1197 = vmax.xlane.f32.xlu0 %v1196
          %v1198 = vpop.xlane.xlu0 %1197
          %v1199 = vsel %vm879, %v1177, -inf
          %1200 = vmax.xlane.f32.xlu0 %v1199
          %v1201 = vpop.xlane.xlu0 %1200
          %v1202 = vsub.f32 %v1170, %v1180
          %v1203 = vsub.f32 %v1171, %v1183
          %v1204 = vsub.f32 %v1172, %v1186
          %v1205 = vsub.f32 %v1173, %v1189
          %v1206 = vsub.f32 %v1174, %v1192
          %v1207 = vsub.f32 %v1175, %v1195
          %v1208 = vsub.f32 %v1176, %v1198
          %v1209 = vsub.f32 %v1177, %v1201
          %v1210 = vmul.f32 %v1202, 1.442695
          %v1211 = vpow.pop %v1210
          %v1212 = vmul.f32 %v1203, 1.442695
          %v1213 = vpow.pop %v1212
          %v1214 = vmul.f32 %v1204, 1.442695
          %v1215 = vpow.pop %v1214
          %v1216 = vmul.f32 %v1205, 1.442695
          %v1217 = vpow.pop %v1216
          %v1218 = vmul.f32 %v1206, 1.442695
          %v1219 = vpow.pop %v1218
          %v1220 = vmul.f32 %v1207, 1.442695
          %v1221 = vpow.pop %v1220
          %v1222 = vmul.f32 %v1208, 1.442695
          %v1223 = vpow.pop %v1222
          %v1224 = vmul.f32 %v1209, 1.442695
          %v1225 = vpow.pop %v1224
          %v1226 = vsel %vm879, %v1211, 0.0
          %1227 = vadd.xlane.f32.xlu0 %v1226
          %v1228 = vpop.xlane.xlu0 %1227
          %v1229 = vsel %vm879, %v1213, 0.0
          %1230 = vadd.xlane.f32.xlu0 %v1229
          %v1231 = vpop.xlane.xlu0 %1230
          %v1232 = vsel %vm879, %v1215, 0.0
          %1233 = vadd.xlane.f32.xlu0 %v1232
          %v1234 = vpop.xlane.xlu0 %1233
          %v1235 = vsel %vm879, %v1217, 0.0
          %1236 = vadd.xlane.f32.xlu0 %v1235
          %v1237 = vpop.xlane.xlu0 %1236
          %v1238 = vsel %vm879, %v1219, 0.0
          %1239 = vadd.xlane.f32.xlu0 %v1238
          %v1240 = vpop.xlane.xlu0 %1239
          %v1241 = vsel %vm879, %v1221, 0.0
          %1242 = vadd.xlane.f32.xlu0 %v1241
          %v1243 = vpop.xlane.xlu0 %1242
          %v1244 = vsel %vm879, %v1223, 0.0
          %1245 = vadd.xlane.f32.xlu0 %v1244
          %v1246 = vpop.xlane.xlu0 %1245
          %v1247 = vsel %vm879, %v1225, 0.0
          %1248 = vadd.xlane.f32.xlu0 %v1247
          %v1249 = vpop.xlane.xlu0 %1248
          %v1250 = vrcp.pop %v1228
          %v1251 = vrcp.pop %v1231
          %v1252 = vrcp.pop %v1234
          %v1253 = vrcp.pop %v1237
          %v1254 = vrcp.pop %v1240
          %v1255 = vrcp.pop %v1243
          %v1256 = vrcp.pop %v1246
          %v1257 = vrcp.pop %v1249
          %v1258 = vmul.f32 %v1211, %v1250
          %v1259 = vmul.f32 %v1213, %v1251
          %v1260 = vmul.f32 %v1215, %v1252
          %v1261 = vmul.f32 %v1217, %v1253
          %v1262 = vmul.f32 %v1219, %v1254
          %v1263 = vmul.f32 %v1221, %v1255
          %v1264 = vmul.f32 %v1223, %v1256
          %v1265 = vmul.f32 %v1225, %v1257
          %v1266 = vpack.c.bf16 %v1259, %v1258
          %v1267 = vpack.c.bf16 %v1261, %v1260
          %v1268 = vpack.c.bf16 %v1263, %v1262
          %v1269 = vpack.c.bf16 %v1265, %v1264
          %1274 = vrot.lane.b32.xlu0 %v777, 96
          %v1275 = vpop.permute.xlu0 %1274
          %1276 = vrot.lane.b32.xlu0 %v778, 96
          %v1277 = vpop.permute.xlu0 %1276
          %1278 = vrot.lane.b32.xlu0 %v779, 96
          %v1279 = vpop.permute.xlu0 %1278
          %1280 = vrot.lane.b32.xlu0 %v780, 96
          %v1281 = vpop.permute.xlu0 %1280
          %v1287 = vsel %vm879, %v1266, 0
          %v1290 = vsel %vm879, %v1267, 0
          %v1293 = vsel %vm879, %v1268, 0
          %v1296 = vsel %vm879, %v1269, 0
          %1298 = vmatprep.subr.bf16.mxu0 0
          %1299 = vmatpush1.bf16.msra.mxu0 %v1275
          %1300 = vmatprep.subr.bf16.mxu0 0
          %1301 = vmatpush1.bf16.msra.mxu0 %v1277
          %1302 = vmatprep.subr.bf16.mxu0 0
          %1303 = vmatpush1.bf16.msra.mxu0 %v1279
          %1304 = vmatprep.subr.bf16.mxu0 0
          %1305 = vmatpush1.bf16.msra.mxu0 %v1281
          %1306 = vmatprep.subr.bf16.mxu0 0
          %1307 = vmatpush1.bf16.msra.mxu0 0
          %1308 = vmatprep.subr.bf16.mxu0 0
          %1309 = vmatpush1.bf16.msra.mxu0 0
          %1310 = vmatprep.subr.bf16.mxu0 0
          %1311 = vmatpush1.bf16.msra.mxu0 0
          %1312 = vmatprep.subr.bf16.mxu0 0
          %1313 = vmatpush1.bf16.msra.mxu0 0
          %1314 = vmatprep.subr.bf16.mxu0 0
          %1315 = vmatpush1.bf16.msra.mxu0 0
          %1316 = vmatprep.subr.bf16.mxu0 0
          %1317 = vmatpush1.bf16.msra.mxu0 0
          %1318 = vmatprep.subr.bf16.mxu0 0
          %1319 = vmatpush1.bf16.msra.mxu0 0
          %1320 = vmatprep.subr.bf16.mxu0 0
          %1321 = vmatpush1.bf16.msra.mxu0 0
          %1322 = vmatprep.subr.bf16.mxu0 0
          %1323 = vmatpush1.bf16.msra.mxu0 0
          %1324 = vmatprep.subr.bf16.mxu0 0
          %1325 = vmatpush1.bf16.msra.mxu0 0
          %1326 = vmatprep.subr.bf16.mxu0 0
          %1327 = vmatpush1.bf16.msra.mxu0 0
          %1328 = vmatprep.subr.bf16.mxu0 0
          %1329 = vmatpush1.bf16.msra.mxu0 0
          %1330 = vmatprep.mubr.bf16.mxu0 0
          %1331 = vmatmul.mubr.bf16.gmra.mrb[0].mxu0 %v1287
          %v1332 = vpop.f32.mrb[0].mxu0
          %v1333 = vadd.f32 0.0, %v1332
          %v1334 = vpop.f32.mrb[0].mxu0
          %v1335 = vpop.f32.mrb[0].mxu0
          %v1336 = vadd.f32 0.0, %v1335
          %v1337 = vpop.f32.mrb[0].mxu0
          %1338 = vmatprep.mubr.bf16.mxu0 0
          %1339 = vmatmul.mubr.bf16.gmra.mrb[0].mxu0 %v1290
          %v1340 = vpop.f32.mrb[0].mxu0
          %v1341 = vadd.f32 0.0, %v1340
          %v1342 = vpop.f32.mrb[0].mxu0
          %v1343 = vpop.f32.mrb[0].mxu0
          %v1344 = vadd.f32 0.0, %v1343
          %v1345 = vpop.f32.mrb[0].mxu0
          %1346 = vmatprep.mubr.bf16.mxu0 0
          %1347 = vmatmul.mubr.bf16.gmra.mrb[0].mxu0 %v1293
          %v1348 = vpop.f32.mrb[0].mxu0
          %v1349 = vadd.f32 0.0, %v1348
          %v1350 = vpop.f32.mrb[0].mxu0
          %v1351 = vpop.f32.mrb[0].mxu0
          %v1352 = vadd.f32 0.0, %v1351
          %v1353 = vpop.f32.mrb[0].mxu0
          %1354 = vmatprep.mubr.bf16.mxu0 0
          %1355 = vmatmul.mubr.bf16.gmra.mrb[0].mxu0 %v1296
          %v1356 = vpop.f32.mrb[0].mxu0
          %v1357 = vadd.f32 0.0, %v1356
          %v1358 = vpop.f32.mrb[0].mxu0
          %v1359 = vpop.f32.mrb[0].mxu0
          %v1360 = vadd.f32 0.0, %v1359
          %v1361 = vpop.f32.mrb[0].mxu0
          %1362 = vdwg.mxu0
          %1371 = vrot.lane.b32.xlu0 %v1333, 32
          %v1372 = vpop.permute.xlu0 %1371
          %1373 = vrot.lane.b32.xlu0 %v1336, 32
          %v1374 = vpop.permute.xlu0 %1373
          %1375 = vrot.lane.b32.xlu0 %v1341, 32
          %v1376 = vpop.permute.xlu0 %1375
          %1377 = vrot.lane.b32.xlu0 %v1344, 32
          %v1378 = vpop.permute.xlu0 %1377
          %1379 = vrot.lane.b32.xlu0 %v1349, 32
          %v1380 = vpop.permute.xlu0 %1379
          %1381 = vrot.lane.b32.xlu0 %v1352, 32
          %v1382 = vpop.permute.xlu0 %1381
          %1383 = vrot.lane.b32.xlu0 %v1357, 32
          %v1384 = vpop.permute.xlu0 %1383
          %1385 = vrot.lane.b32.xlu0 %v1360, 32
          %v1386 = vpop.permute.xlu0 %1385
          %vm1395 = vcmask 523520
          %1396 = vst.msk [vmem:[#allocation2] sm:$0xff] %vm1395, %v1372
          %1397 = vst.msk [vmem:[#allocation2 + $0x8] sm:$0xff] %vm1395, %v1374
          %1398 = vst.msk [vmem:[#allocation2 + $0x10] sm:$0xff] %vm1395, %v1376
          %1399 = vst.msk [vmem:[#allocation2 + $0x18] sm:$0xff] %vm1395, %v1378
          %1400 = vst.msk [vmem:[#allocation2 + $0x20] sm:$0xff] %vm1395, %v1380
          %1401 = vst.msk [vmem:[#allocation2 + $0x28] sm:$0xff] %vm1395, %v1382
          %1402 = vst.msk [vmem:[#allocation2 + $0x30] sm:$0xff] %vm1395, %v1384
          %1403 = vst.msk [vmem:[#allocation2 + $0x38] sm:$0xff] %vm1395, %v1386
          %1404 = vrot.lane.b32.xlu0 %v769, 64
          %v1405 = vpop.permute.xlu0 %1404
          %1406 = vrot.lane.b32.xlu0 %v770, 64
          %v1407 = vpop.permute.xlu0 %1406
          %1408 = vrot.lane.b32.xlu0 %v771, 64
          %v1409 = vpop.permute.xlu0 %1408
          %1410 = vrot.lane.b32.xlu0 %v772, 64
          %v1411 = vpop.permute.xlu0 %1410
          %1412 = vrot.lane.b32.xlu0 %v773, 64
          %v1413 = vpop.permute.xlu0 %1412
          %1414 = vrot.lane.b32.xlu0 %v774, 64
          %v1415 = vpop.permute.xlu0 %1414
          %1416 = vrot.lane.b32.xlu0 %v775, 64
          %v1417 = vpop.permute.xlu0 %1416
          %1418 = vrot.lane.b32.xlu0 %v776, 64
          %v1419 = vpop.permute.xlu0 %1418
          %v1421 = vsel %vm781, %v1405, 0
          %v1424 = vsel %vm781, %v1407, 0
          %v1427 = vsel %vm781, %v1409, 0
          %v1430 = vsel %vm781, %v1411, 0
          %v1433 = vsel %vm781, %v1413, 0
          %v1436 = vsel %vm781, %v1415, 0
          %v1439 = vsel %vm781, %v1417, 0
          %v1442 = vsel %vm781, %v1419, 0
          %1444 = vmatprep.subr.bf16.mxu0 0
          %1445 = vmatpush1.bf16.xpose.msra.mxu0 %v1433
          %1446 = vmatprep.subr.bf16.mxu0 0
          %1447 = vmatpush1.bf16.xpose.msra.mxu0 %v1436
          %1448 = vmatprep.subr.bf16.mxu0 0
          %1449 = vmatpush1.bf16.xpose.msra.mxu0 %v1439
          %1450 = vmatprep.subr.bf16.mxu0 0
          %1451 = vmatpush1.bf16.xpose.msra.mxu0 %v1442
          %1452 = vmatprep.subr.bf16.mxu0 0
          %1453 = vmatpush1.bf16.xpose.msra.mxu0 0
          %1454 = vmatprep.subr.bf16.mxu0 0
          %1455 = vmatpush1.bf16.xpose.msra.mxu0 0
          %1456 = vmatprep.subr.bf16.mxu0 0
          %1457 = vmatpush1.bf16.xpose.msra.mxu0 0
          %1458 = vmatprep.subr.bf16.mxu0 0
          %1459 = vmatpush1.bf16.xpose.msra.mxu0 0
          %1460 = vmatprep.subr.bf16.mxu0 0
          %1461 = vmatpush1.bf16.xpose.msra.mxu0 0
          %1462 = vmatprep.subr.bf16.mxu0 0
          %1463 = vmatpush1.bf16.xpose.msra.mxu0 0
          %1464 = vmatprep.subr.bf16.mxu0 0
          %1465 = vmatpush1.bf16.xpose.msra.mxu0 0
          %1466 = vmatprep.subr.bf16.mxu0 0
          %1467 = vmatpush1.bf16.xpose.msra.mxu0 0
          %1468 = vmatprep.subr.bf16.mxu0 0
          %1469 = vmatpush1.bf16.xpose.msra.mxu0 0
          %1470 = vmatprep.subr.bf16.mxu0 0
          %1471 = vmatpush1.bf16.xpose.msra.mxu0 0
          %1472 = vmatprep.subr.bf16.mxu0 0
          %1473 = vmatpush1.bf16.xpose.msra.mxu0 0
          %1474 = vmatprep.subr.bf16.mxu0 0
          %1475 = vmatpush1.bf16.xpose.msra.mxu0 0
          %1476 = vmatprep.mubr.bf16.mxu0 0
          %1477 = vmatmul.mubr.bf16.gmra.mrb[0].mxu0 %v1421
          %v1478 = vpop.f32.mrb[0].mxu0
          %v1479 = vadd.f32 0.0, %v1478
          %v1480 = vpop.f32.mrb[0].mxu0
          %v1481 = vpop.f32.mrb[0].mxu0
          %v1482 = vadd.f32 0.0, %v1481
          %v1483 = vpop.f32.mrb[0].mxu0
          %1484 = vmatprep.mubr.bf16.mxu0 0
          %1485 = vmatmul.mubr.bf16.gmra.mrb[0].mxu0 %v1424
          %v1486 = vpop.f32.mrb[0].mxu0
          %v1487 = vadd.f32 0.0, %v1486
          %v1488 = vpop.f32.mrb[0].mxu0
          %v1489 = vpop.f32.mrb[0].mxu0
          %v1490 = vadd.f32 0.0, %v1489
          %v1491 = vpop.f32.mrb[0].mxu0
          %1492 = vmatprep.mubr.bf16.mxu0 0
          %1493 = vmatmul.mubr.bf16.gmra.mrb[0].mxu0 %v1427
          %v1494 = vpop.f32.mrb[0].mxu0
          %v1495 = vadd.f32 0.0, %v1494
          %v1496 = vpop.f32.mrb[0].mxu0
          %v1497 = vpop.f32.mrb[0].mxu0
          %v1498 = vadd.f32 0.0, %v1497
          %v1499 = vpop.f32.mrb[0].mxu0
          %1500 = vmatprep.mubr.bf16.mxu0 0
          %1501 = vmatmul.mubr.bf16.gmra.mrb[0].mxu0 %v1430
          %v1502 = vpop.f32.mrb[0].mxu0
          %v1503 = vadd.f32 0.0, %v1502
          %v1504 = vpop.f32.mrb[0].mxu0
          %v1505 = vpop.f32.mrb[0].mxu0
          %v1506 = vadd.f32 0.0, %v1505
          %v1507 = vpop.f32.mrb[0].mxu0
          %1508 = vdwg.mxu0
          %v1509 = vmul.f32 %v1479, 0.17677669
          %v1510 = vmul.f32 %v1482, 0.17677669
          %v1511 = vmul.f32 %v1487, 0.17677669
          %v1512 = vmul.f32 %v1490, 0.17677669
          %v1513 = vmul.f32 %v1495, 0.17677669
          %v1514 = vmul.f32 %v1498, 0.17677669
          %v1515 = vmul.f32 %v1503, 0.17677669
          %v1516 = vmul.f32 %v1506, 0.17677669
          %v1517 = vsel %vm879, %v1509, -inf
          %1518 = vmax.xlane.f32.xlu0 %v1517
          %v1519 = vpop.xlane.xlu0 %1518
          %v1520 = vsel %vm879, %v1510, -inf
          %1521 = vmax.xlane.f32.xlu0 %v1520
          %v1522 = vpop.xlane.xlu0 %1521
          %v1523 = vsel %vm879, %v1511, -inf
          %1524 = vmax.xlane.f32.xlu0 %v1523
          %v1525 = vpop.xlane.xlu0 %1524
          %v1526 = vsel %vm879, %v1512, -inf
          %1527 = vmax.xlane.f32.xlu0 %v1526
          %v1528 = vpop.xlane.xlu0 %1527
          %v1529 = vsel %vm879, %v1513, -inf
          %1530 = vmax.xlane.f32.xlu0 %v1529
          %v1531 = vpop.xlane.xlu0 %1530
          %v1532 = vsel %vm879, %v1514, -inf
          %1533 = vmax.xlane.f32.xlu0 %v1532
          %v1534 = vpop.xlane.xlu0 %1533
          %v1535 = vsel %vm879, %v1515, -inf
          %1536 = vmax.xlane.f32.xlu0 %v1535
          %v1537 = vpop.xlane.xlu0 %1536
          %v1538 = vsel %vm879, %v1516, -inf
          %1539 = vmax.xlane.f32.xlu0 %v1538
          %v1540 = vpop.xlane.xlu0 %1539
          %v1541 = vsub.f32 %v1509, %v1519
          %v1542 = vsub.f32 %v1510, %v1522
          %v1543 = vsub.f32 %v1511, %v1525
          %v1544 = vsub.f32 %v1512, %v1528
          %v1545 = vsub.f32 %v1513, %v1531
          %v1546 = vsub.f32 %v1514, %v1534
          %v1547 = vsub.f32 %v1515, %v1537
          %v1548 = vsub.f32 %v1516, %v1540
          %v1549 = vmul.f32 %v1541, 1.442695
          %v1550 = vpow.pop %v1549
          %v1551 = vmul.f32 %v1542, 1.442695
          %v1552 = vpow.pop %v1551
          %v1553 = vmul.f32 %v1543, 1.442695
          %v1554 = vpow.pop %v1553
          %v1555 = vmul.f32 %v1544, 1.442695
          %v1556 = vpow.pop %v1555
          %v1557 = vmul.f32 %v1545, 1.442695
          %v1558 = vpow.pop %v1557
          %v1559 = vmul.f32 %v1546, 1.442695
          %v1560 = vpow.pop %v1559
          %v1561 = vmul.f32 %v1547, 1.442695
          %v1562 = vpow.pop %v1561
          %v1563 = vmul.f32 %v1548, 1.442695
          %v1564 = vpow.pop %v1563
          %v1565 = vsel %vm879, %v1550, 0.0
          %1566 = vadd.xlane.f32.xlu0 %v1565
          %v1567 = vpop.xlane.xlu0 %1566
          %v1568 = vsel %vm879, %v1552, 0.0
          %1569 = vadd.xlane.f32.xlu0 %v1568
          %v1570 = vpop.xlane.xlu0 %1569
          %v1571 = vsel %vm879, %v1554, 0.0
          %1572 = vadd.xlane.f32.xlu0 %v1571
          %v1573 = vpop.xlane.xlu0 %1572
          %v1574 = vsel %vm879, %v1556, 0.0
          %1575 = vadd.xlane.f32.xlu0 %v1574
          %v1576 = vpop.xlane.xlu0 %1575
          %v1577 = vsel %vm879, %v1558, 0.0
          %1578 = vadd.xlane.f32.xlu0 %v1577
          %v1579 = vpop.xlane.xlu0 %1578
          %v1580 = vsel %vm879, %v1560, 0.0
          %1581 = vadd.xlane.f32.xlu0 %v1580
          %v1582 = vpop.xlane.xlu0 %1581
          %v1583 = vsel %vm879, %v1562, 0.0
          %1584 = vadd.xlane.f32.xlu0 %v1583
          %v1585 = vpop.xlane.xlu0 %1584
          %v1586 = vsel %vm879, %v1564, 0.0
          %1587 = vadd.xlane.f32.xlu0 %v1586
          %v1588 = vpop.xlane.xlu0 %1587
          %v1589 = vrcp.pop %v1567
          %v1590 = vrcp.pop %v1570
          %v1591 = vrcp.pop %v1573
          %v1592 = vrcp.pop %v1576
          %v1593 = vrcp.pop %v1579
          %v1594 = vrcp.pop %v1582
          %v1595 = vrcp.pop %v1585
          %v1596 = vrcp.pop %v1588
          %v1597 = vmul.f32 %v1550, %v1589
          %v1598 = vmul.f32 %v1552, %v1590
          %v1599 = vmul.f32 %v1554, %v1591
          %v1600 = vmul.f32 %v1556, %v1592
          %v1601 = vmul.f32 %v1558, %v1593
          %v1602 = vmul.f32 %v1560, %v1594
          %v1603 = vmul.f32 %v1562, %v1595
          %v1604 = vmul.f32 %v1564, %v1596
          %v1605 = vpack.c.bf16 %v1598, %v1597
          %v1606 = vpack.c.bf16 %v1600, %v1599
          %v1607 = vpack.c.bf16 %v1602, %v1601
          %v1608 = vpack.c.bf16 %v1604, %v1603
          %1609 = vrot.lane.b32.xlu0 %v777, 64
          %v1610 = vpop.permute.xlu0 %1609
          %1611 = vrot.lane.b32.xlu0 %v778, 64
          %v1612 = vpop.permute.xlu0 %1611
          %1613 = vrot.lane.b32.xlu0 %v779, 64
          %v1614 = vpop.permute.xlu0 %1613
          %1615 = vrot.lane.b32.xlu0 %v780, 64
          %v1616 = vpop.permute.xlu0 %1615
          %v1622 = vsel %vm879, %v1605, 0
          %v1625 = vsel %vm879, %v1606, 0
          %v1628 = vsel %vm879, %v1607, 0
          %v1631 = vsel %vm879, %v1608, 0
          %1633 = vmatprep.subr.bf16.mxu0 0
          %1634 = vmatpush1.bf16.msra.mxu0 %v1610
          %1635 = vmatprep.subr.bf16.mxu0 0
          %1636 = vmatpush1.bf16.msra.mxu0 %v1612
          %1637 = vmatprep.subr.bf16.mxu0 0
          %1638 = vmatpush1.bf16.msra.mxu0 %v1614
          %1639 = vmatprep.subr.bf16.mxu0 0
          %1640 = vmatpush1.bf16.msra.mxu0 %v1616
          %1641 = vmatprep.subr.bf16.mxu0 0
          %1642 = vmatpush1.bf16.msra.mxu0 0
          %1643 = vmatprep.subr.bf16.mxu0 0
          %1644 = vmatpush1.bf16.msra.mxu0 0
          %1645 = vmatprep.subr.bf16.mxu0 0
          %1646 = vmatpush1.bf16.msra.mxu0 0
          %1647 = vmatprep.subr.bf16.mxu0 0
          %1648 = vmatpush1.bf16.msra.mxu0 0
          %1649 = vmatprep.subr.bf16.mxu0 0
          %1650 = vmatpush1.bf16.msra.mxu0 0
          %1651 = vmatprep.subr.bf16.mxu0 0
          %1652 = vmatpush1.bf16.msra.mxu0 0
          %1653 = vmatprep.subr.bf16.mxu0 0
          %1654 = vmatpush1.bf16.msra.mxu0 0
          %1655 = vmatprep.subr.bf16.mxu0 0
          %1656 = vmatpush1.bf16.msra.mxu0 0
          %1657 = vmatprep.subr.bf16.mxu0 0
          %1658 = vmatpush1.bf16.msra.mxu0 0
          %1659 = vmatprep.subr.bf16.mxu0 0
          %1660 = vmatpush1.bf16.msra.mxu0 0
          %1661 = vmatprep.subr.bf16.mxu0 0
          %1662 = vmatpush1.bf16.msra.mxu0 0
          %1663 = vmatprep.subr.bf16.mxu0 0
          %1664 = vmatpush1.bf16.msra.mxu0 0
          %1665 = vmatprep.mubr.bf16.mxu0 0
          %1666 = vmatmul.mubr.bf16.gmra.mrb[0].mxu0 %v1622
          %v1667 = vpop.f32.mrb[0].mxu0
          %v1668 = vadd.f32 0.0, %v1667
          %v1669 = vpop.f32.mrb[0].mxu0
          %v1670 = vpop.f32.mrb[0].mxu0
          %v1671 = vadd.f32 0.0, %v1670
          %v1672 = vpop.f32.mrb[0].mxu0
          %1673 = vmatprep.mubr.bf16.mxu0 0
          %1674 = vmatmul.mubr.bf16.gmra.mrb[0].mxu0 %v1625
          %v1675 = vpop.f32.mrb[0].mxu0
          %v1676 = vadd.f32 0.0, %v1675
          %v1677 = vpop.f32.mrb[0].mxu0
          %v1678 = vpop.f32.mrb[0].mxu0
          %v1679 = vadd.f32 0.0, %v1678
          %v1680 = vpop.f32.mrb[0].mxu0
          %1681 = vmatprep.mubr.bf16.mxu0 0
          %1682 = vmatmul.mubr.bf16.gmra.mrb[0].mxu0 %v1628
          %v1683 = vpop.f32.mrb[0].mxu0
          %v1684 = vadd.f32 0.0, %v1683
          %v1685 = vpop.f32.mrb[0].mxu0
          %v1686 = vpop.f32.mrb[0].mxu0
          %v1687 = vadd.f32 0.0, %v1686
          %v1688 = vpop.f32.mrb[0].mxu0
          %1689 = vmatprep.mubr.bf16.mxu0 0
          %1690 = vmatmul.mubr.bf16.gmra.mrb[0].mxu0 %v1631
          %v1691 = vpop.f32.mrb[0].mxu0
          %v1692 = vadd.f32 0.0, %v1691
          %v1693 = vpop.f32.mrb[0].mxu0
          %v1694 = vpop.f32.mrb[0].mxu0
          %v1695 = vadd.f32 0.0, %v1694
          %v1696 = vpop.f32.mrb[0].mxu0
          %1697 = vdwg.mxu0
          %1706 = vrot.lane.b32.xlu0 %v1668, 64
          %v1707 = vpop.permute.xlu0 %1706
          %1708 = vrot.lane.b32.xlu0 %v1671, 64
          %v1709 = vpop.permute.xlu0 %1708
          %1710 = vrot.lane.b32.xlu0 %v1676, 64
          %v1711 = vpop.permute.xlu0 %1710
          %1712 = vrot.lane.b32.xlu0 %v1679, 64
          %v1713 = vpop.permute.xlu0 %1712
          %1714 = vrot.lane.b32.xlu0 %v1684, 64
          %v1715 = vpop.permute.xlu0 %1714
          %1716 = vrot.lane.b32.xlu0 %v1687, 64
          %v1717 = vpop.permute.xlu0 %1716
          %1718 = vrot.lane.b32.xlu0 %v1692, 64
          %v1719 = vpop.permute.xlu0 %1718
          %1720 = vrot.lane.b32.xlu0 %v1695, 64
          %v1721 = vpop.permute.xlu0 %1720
          %vm1730 = vcmask 785920
          %1731 = vst.msk [vmem:[#allocation2] sm:$0xff] %vm1730, %v1707
          %1732 = vst.msk [vmem:[#allocation2 + $0x8] sm:$0xff] %vm1730, %v1709
          %1733 = vst.msk [vmem:[#allocation2 + $0x10] sm:$0xff] %vm1730, %v1711
          %1734 = vst.msk [vmem:[#allocation2 + $0x18] sm:$0xff] %vm1730, %v1713
          %1735 = vst.msk [vmem:[#allocation2 + $0x20] sm:$0xff] %vm1730, %v1715
          %1736 = vst.msk [vmem:[#allocation2 + $0x28] sm:$0xff] %vm1730, %v1717
          %1737 = vst.msk [vmem:[#allocation2 + $0x30] sm:$0xff] %vm1730, %v1719
          %1738 = vst.msk [vmem:[#allocation2 + $0x38] sm:$0xff] %vm1730, %v1721
          %1739 = vrot.lane.b32.xlu0 %v769, 32
          %v1740 = vpop.permute.xlu0 %1739
          %1741 = vrot.lane.b32.xlu0 %v770, 32
          %v1742 = vpop.permute.xlu0 %1741
          %1743 = vrot.lane.b32.xlu0 %v771, 32
          %v1744 = vpop.permute.xlu0 %1743
          %1745 = vrot.lane.b32.xlu0 %v772, 32
          %v1746 = vpop.permute.xlu0 %1745
          %1747 = vrot.lane.b32.xlu0 %v773, 32
          %v1748 = vpop.permute.xlu0 %1747
          %1749 = vrot.lane.b32.xlu0 %v774, 32
          %v1750 = vpop.permute.xlu0 %1749
          %1751 = vrot.lane.b32.xlu0 %v775, 32
          %v1752 = vpop.permute.xlu0 %1751
          %1753 = vrot.lane.b32.xlu0 %v776, 32
          %v1754 = vpop.permute.xlu0 %1753
          %v1756 = vsel %vm781, %v1740, 0
          %v1759 = vsel %vm781, %v1742, 0
          %v1762 = vsel %vm781, %v1744, 0
          %v1765 = vsel %vm781, %v1746, 0
          %v1768 = vsel %vm781, %v1748, 0
          %v1771 = vsel %vm781, %v1750, 0
          %v1774 = vsel %vm781, %v1752, 0
          %v1777 = vsel %vm781, %v1754, 0
          %1779 = vmatprep.subr.bf16.mxu0 0
          %1780 = vmatpush1.bf16.xpose.msra.mxu0 %v1768
          %1781 = vmatprep.subr.bf16.mxu0 0
          %1782 = vmatpush1.bf16.xpose.msra.mxu0 %v1771
          %1783 = vmatprep.subr.bf16.mxu0 0
          %1784 = vmatpush1.bf16.xpose.msra.mxu0 %v1774
          %1785 = vmatprep.subr.bf16.mxu0 0
          %1786 = vmatpush1.bf16.xpose.msra.mxu0 %v1777
          %1787 = vmatprep.subr.bf16.mxu0 0
          %1788 = vmatpush1.bf16.xpose.msra.mxu0 0
          %1789 = vmatprep.subr.bf16.mxu0 0
          %1790 = vmatpush1.bf16.xpose.msra.mxu0 0
          %1791 = vmatprep.subr.bf16.mxu0 0
          %1792 = vmatpush1.bf16.xpose.msra.mxu0 0
          %1793 = vmatprep.subr.bf16.mxu0 0
          %1794 = vmatpush1.bf16.xpose.msra.mxu0 0
          %1795 = vmatprep.subr.bf16.mxu0 0
          %1796 = vmatpush1.bf16.xpose.msra.mxu0 0
          %1797 = vmatprep.subr.bf16.mxu0 0
          %1798 = vmatpush1.bf16.xpose.msra.mxu0 0
          %1799 = vmatprep.subr.bf16.mxu0 0
          %1800 = vmatpush1.bf16.xpose.msra.mxu0 0
          %1801 = vmatprep.subr.bf16.mxu0 0
          %1802 = vmatpush1.bf16.xpose.msra.mxu0 0
          %1803 = vmatprep.subr.bf16.mxu0 0
          %1804 = vmatpush1.bf16.xpose.msra.mxu0 0
          %1805 = vmatprep.subr.bf16.mxu0 0
          %1806 = vmatpush1.bf16.xpose.msra.mxu0 0
          %1807 = vmatprep.subr.bf16.mxu0 0
          %1808 = vmatpush1.bf16.xpose.msra.mxu0 0
          %1809 = vmatprep.subr.bf16.mxu0 0
          %1810 = vmatpush1.bf16.xpose.msra.mxu0 0
          %1811 = vmatprep.mubr.bf16.mxu0 0
          %1812 = vmatmul.mubr.bf16.gmra.mrb[0].mxu0 %v1756
          %v1813 = vpop.f32.mrb[0].mxu0
          %v1814 = vadd.f32 0.0, %v1813
          %v1815 = vpop.f32.mrb[0].mxu0
          %v1816 = vpop.f32.mrb[0].mxu0
          %v1817 = vadd.f32 0.0, %v1816
          %v1818 = vpop.f32.mrb[0].mxu0
          %1819 = vmatprep.mubr.bf16.mxu0 0
          %1820 = vmatmul.mubr.bf16.gmra.mrb[0].mxu0 %v1759
          %v1821 = vpop.f32.mrb[0].mxu0
          %v1822 = vadd.f32 0.0, %v1821
          %v1823 = vpop.f32.mrb[0].mxu0
          %v1824 = vpop.f32.mrb[0].mxu0
          %v1825 = vadd.f32 0.0, %v1824
          %v1826 = vpop.f32.mrb[0].mxu0
          %1827 = vmatprep.mubr.bf16.mxu0 0
          %1828 = vmatmul.mubr.bf16.gmra.mrb[0].mxu0 %v1762
          %v1829 = vpop.f32.mrb[0].mxu0
          %v1830 = vadd.f32 0.0, %v1829
          %v1831 = vpop.f32.mrb[0].mxu0
          %v1832 = vpop.f32.mrb[0].mxu0
          %v1833 = vadd.f32 0.0, %v1832
          %v1834 = vpop.f32.mrb[0].mxu0
          %1835 = vmatprep.mubr.bf16.mxu0 0
          %1836 = vmatmul.mubr.bf16.gmra.mrb[0].mxu0 %v1765
          %v1837 = vpop.f32.mrb[0].mxu0
          %v1838 = vadd.f32 0.0, %v1837
          %v1839 = vpop.f32.mrb[0].mxu0
          %v1840 = vpop.f32.mrb[0].mxu0
          %v1841 = vadd.f32 0.0, %v1840
          %v1842 = vpop.f32.mrb[0].mxu0
          %1843 = vdwg.mxu0
          %v1844 = vmul.f32 %v1814, 0.17677669
          %v1845 = vmul.f32 %v1817, 0.17677669
          %v1846 = vmul.f32 %v1822, 0.17677669
          %v1847 = vmul.f32 %v1825, 0.17677669
          %v1848 = vmul.f32 %v1830, 0.17677669
          %v1849 = vmul.f32 %v1833, 0.17677669
          %v1850 = vmul.f32 %v1838, 0.17677669
          %v1851 = vmul.f32 %v1841, 0.17677669
          %v1852 = vsel %vm879, %v1844, -inf
          %1853 = vmax.xlane.f32.xlu0 %v1852
          %v1854 = vpop.xlane.xlu0 %1853
          %v1855 = vsel %vm879, %v1845, -inf
          %1856 = vmax.xlane.f32.xlu0 %v1855
          %v1857 = vpop.xlane.xlu0 %1856
          %v1858 = vsel %vm879, %v1846, -inf
          %1859 = vmax.xlane.f32.xlu0 %v1858
          %v1860 = vpop.xlane.xlu0 %1859
          %v1861 = vsel %vm879, %v1847, -inf
          %1862 = vmax.xlane.f32.xlu0 %v1861
          %v1863 = vpop.xlane.xlu0 %1862
          %v1864 = vsel %vm879, %v1848, -inf
          %1865 = vmax.xlane.f32.xlu0 %v1864
          %v1866 = vpop.xlane.xlu0 %1865
          %v1867 = vsel %vm879, %v1849, -inf
          %1868 = vmax.xlane.f32.xlu0 %v1867
          %v1869 = vpop.xlane.xlu0 %1868
          %v1870 = vsel %vm879, %v1850, -inf
          %1871 = vmax.xlane.f32.xlu0 %v1870
          %v1872 = vpop.xlane.xlu0 %1871
          %v1873 = vsel %vm879, %v1851, -inf
          %1874 = vmax.xlane.f32.xlu0 %v1873
          %v1875 = vpop.xlane.xlu0 %1874
          %v1876 = vsub.f32 %v1844, %v1854
          %v1877 = vsub.f32 %v1845, %v1857
          %v1878 = vsub.f32 %v1846, %v1860
          %v1879 = vsub.f32 %v1847, %v1863
          %v1880 = vsub.f32 %v1848, %v1866
          %v1881 = vsub.f32 %v1849, %v1869
          %v1882 = vsub.f32 %v1850, %v1872
          %v1883 = vsub.f32 %v1851, %v1875
          %v1884 = vmul.f32 %v1876, 1.442695
          %v1885 = vpow.pop %v1884
          %v1886 = vmul.f32 %v1877, 1.442695
          %v1887 = vpow.pop %v1886
          %v1888 = vmul.f32 %v1878, 1.442695
          %v1889 = vpow.pop %v1888
          %v1890 = vmul.f32 %v1879, 1.442695
          %v1891 = vpow.pop %v1890
          %v1892 = vmul.f32 %v1880, 1.442695
          %v1893 = vpow.pop %v1892
          %v1894 = vmul.f32 %v1881, 1.442695
          %v1895 = vpow.pop %v1894
          %v1896 = vmul.f32 %v1882, 1.442695
          %v1897 = vpow.pop %v1896
          %v1898 = vmul.f32 %v1883, 1.442695
          %v1899 = vpow.pop %v1898
          %v1900 = vsel %vm879, %v1885, 0.0
          %1901 = vadd.xlane.f32.xlu0 %v1900
          %v1902 = vpop.xlane.xlu0 %1901
          %v1903 = vsel %vm879, %v1887, 0.0
          %1904 = vadd.xlane.f32.xlu0 %v1903
          %v1905 = vpop.xlane.xlu0 %1904
          %v1906 = vsel %vm879, %v1889, 0.0
          %1907 = vadd.xlane.f32.xlu0 %v1906
          %v1908 = vpop.xlane.xlu0 %1907
          %v1909 = vsel %vm879, %v1891, 0.0
          %1910 = vadd.xlane.f32.xlu0 %v1909
          %v1911 = vpop.xlane.xlu0 %1910
          %v1912 = vsel %vm879, %v1893, 0.0
          %1913 = vadd.xlane.f32.xlu0 %v1912
          %v1914 = vpop.xlane.xlu0 %1913
          %v1915 = vsel %vm879, %v1895, 0.0
          %1916 = vadd.xlane.f32.xlu0 %v1915
          %v1917 = vpop.xlane.xlu0 %1916
          %v1918 = vsel %vm879, %v1897, 0.0
          %1919 = vadd.xlane.f32.xlu0 %v1918
          %v1920 = vpop.xlane.xlu0 %1919
          %v1921 = vsel %vm879, %v1899, 0.0
          %1922 = vadd.xlane.f32.xlu0 %v1921
          %v1923 = vpop.xlane.xlu0 %1922
          %v1924 = vrcp.pop %v1902
          %v1925 = vrcp.pop %v1905
          %v1926 = vrcp.pop %v1908
          %v1927 = vrcp.pop %v1911
          %v1928 = vrcp.pop %v1914
          %v1929 = vrcp.pop %v1917
          %v1930 = vrcp.pop %v1920
          %v1931 = vrcp.pop %v1923
          %v1932 = vmul.f32 %v1885, %v1924
          %v1933 = vmul.f32 %v1887, %v1925
          %v1934 = vmul.f32 %v1889, %v1926
          %v1935 = vmul.f32 %v1891, %v1927
          %v1936 = vmul.f32 %v1893, %v1928
          %v1937 = vmul.f32 %v1895, %v1929
          %v1938 = vmul.f32 %v1897, %v1930
          %v1939 = vmul.f32 %v1899, %v1931
          %v1940 = vpack.c.bf16 %v1933, %v1932
          %v1941 = vpack.c.bf16 %v1935, %v1934
          %v1942 = vpack.c.bf16 %v1937, %v1936
          %v1943 = vpack.c.bf16 %v1939, %v1938
          %1944 = vrot.lane.b32.xlu0 %v777, 32
          %v1945 = vpop.permute.xlu0 %1944
          %1946 = vrot.lane.b32.xlu0 %v778, 32
          %v1947 = vpop.permute.xlu0 %1946
          %1948 = vrot.lane.b32.xlu0 %v779, 32
          %v1949 = vpop.permute.xlu0 %1948
          %1950 = vrot.lane.b32.xlu0 %v780, 32
          %v1951 = vpop.permute.xlu0 %1950
          %v1957 = vsel %vm879, %v1940, 0
          %v1960 = vsel %vm879, %v1941, 0
          %v1963 = vsel %vm879, %v1942, 0
          %v1966 = vsel %vm879, %v1943, 0
          %1968 = vmatprep.subr.bf16.mxu0 0
          %1969 = vmatpush1.bf16.msra.mxu0 %v1945
          %1970 = vmatprep.subr.bf16.mxu0 0
          %1971 = vmatpush1.bf16.msra.mxu0 %v1947
          %1972 = vmatprep.subr.bf16.mxu0 0
          %1973 = vmatpush1.bf16.msra.mxu0 %v1949
          %1974 = vmatprep.subr.bf16.mxu0 0
          %1975 = vmatpush1.bf16.msra.mxu0 %v1951
          %1976 = vmatprep.subr.bf16.mxu0 0
          %1977 = vmatpush1.bf16.msra.mxu0 0
          %1978 = vmatprep.subr.bf16.mxu0 0
          %1979 = vmatpush1.bf16.msra.mxu0 0
          %1980 = vmatprep.subr.bf16.mxu0 0
          %1981 = vmatpush1.bf16.msra.mxu0 0
          %1982 = vmatprep.subr.bf16.mxu0 0
          %1983 = vmatpush1.bf16.msra.mxu0 0
          %1984 = vmatprep.subr.bf16.mxu0 0
          %1985 = vmatpush1.bf16.msra.mxu0 0
          %1986 = vmatprep.subr.bf16.mxu0 0
          %1987 = vmatpush1.bf16.msra.mxu0 0
          %1988 = vmatprep.subr.bf16.mxu0 0
          %1989 = vmatpush1.bf16.msra.mxu0 0
          %1990 = vmatprep.subr.bf16.mxu0 0
          %1991 = vmatpush1.bf16.msra.mxu0 0
          %1992 = vmatprep.subr.bf16.mxu0 0
          %1993 = vmatpush1.bf16.msra.mxu0 0
          %1994 = vmatprep.subr.bf16.mxu0 0
          %1995 = vmatpush1.bf16.msra.mxu0 0
          %1996 = vmatprep.subr.bf16.mxu0 0
          %1997 = vmatpush1.bf16.msra.mxu0 0
          %1998 = vmatprep.subr.bf16.mxu0 0
          %1999 = vmatpush1.bf16.msra.mxu0 0
          %2000 = vmatprep.mubr.bf16.mxu0 0
          %2001 = vmatmul.mubr.bf16.gmra.mrb[0].mxu0 %v1957
          %v2002 = vpop.f32.mrb[0].mxu0
          %v2003 = vadd.f32 0.0, %v2002
          %v2004 = vpop.f32.mrb[0].mxu0
          %v2005 = vpop.f32.mrb[0].mxu0
          %v2006 = vadd.f32 0.0, %v2005
          %v2007 = vpop.f32.mrb[0].mxu0
          %2008 = vmatprep.mubr.bf16.mxu0 0
          %2009 = vmatmul.mubr.bf16.gmra.mrb[0].mxu0 %v1960
          %v2010 = vpop.f32.mrb[0].mxu0
          %v2011 = vadd.f32 0.0, %v2010
          %v2012 = vpop.f32.mrb[0].mxu0
          %v2013 = vpop.f32.mrb[0].mxu0
          %v2014 = vadd.f32 0.0, %v2013
          %v2015 = vpop.f32.mrb[0].mxu0
          %2016 = vmatprep.mubr.bf16.mxu0 0
          %2017 = vmatmul.mubr.bf16.gmra.mrb[0].mxu0 %v1963
          %v2018 = vpop.f32.mrb[0].mxu0
          %v2019 = vadd.f32 0.0, %v2018
          %v2020 = vpop.f32.mrb[0].mxu0
          %v2021 = vpop.f32.mrb[0].mxu0
          %v2022 = vadd.f32 0.0, %v2021
          %v2023 = vpop.f32.mrb[0].mxu0
          %2024 = vmatprep.mubr.bf16.mxu0 0
          %2025 = vmatmul.mubr.bf16.gmra.mrb[0].mxu0 %v1966
          %v2026 = vpop.f32.mrb[0].mxu0
          %v2027 = vadd.f32 0.0, %v2026
          %v2028 = vpop.f32.mrb[0].mxu0
          %v2029 = vpop.f32.mrb[0].mxu0
          %v2030 = vadd.f32 0.0, %v2029
          %v2031 = vpop.f32.mrb[0].mxu0
          %2032 = vdwg.mxu0
          %2041 = vrot.lane.b32.xlu0 %v2003, 96
          %v2042 = vpop.permute.xlu0 %2041
          %2043 = vrot.lane.b32.xlu0 %v2006, 96
          %v2044 = vpop.permute.xlu0 %2043
          %2045 = vrot.lane.b32.xlu0 %v2011, 96
          %v2046 = vpop.permute.xlu0 %2045
          %2047 = vrot.lane.b32.xlu0 %v2014, 96
          %v2048 = vpop.permute.xlu0 %2047
          %2049 = vrot.lane.b32.xlu0 %v2019, 96
          %v2050 = vpop.permute.xlu0 %2049
          %2051 = vrot.lane.b32.xlu0 %v2022, 96
          %v2052 = vpop.permute.xlu0 %2051
          %2053 = vrot.lane.b32.xlu0 %v2027, 96
          %v2054 = vpop.permute.xlu0 %2053
          %2055 = vrot.lane.b32.xlu0 %v2030, 96
          %v2056 = vpop.permute.xlu0 %2055
          %vm2065 = vcmask 1048320
          %2066 = vst.msk [vmem:[#allocation2] sm:$0xff] %vm2065, %v2042
          %2067 = vst.msk [vmem:[#allocation2 + $0x8] sm:$0xff] %vm2065, %v2044
          %2068 = vst.msk [vmem:[#allocation2 + $0x10] sm:$0xff] %vm2065, %v2046
          %2069 = vst.msk [vmem:[#allocation2 + $0x18] sm:$0xff] %vm2065, %v2048
          %2070 = vst.msk [vmem:[#allocation2 + $0x20] sm:$0xff] %vm2065, %v2050
          %2071 = vst.msk [vmem:[#allocation2 + $0x28] sm:$0xff] %vm2065, %v2052
          %2072 = vst.msk [vmem:[#allocation2 + $0x30] sm:$0xff] %vm2065, %v2054
          %2073 = vst.msk [vmem:[#allocation2 + $0x38] sm:$0xff] %vm2065, %v2056
          %v2074 = vld [vmem:[#allocation2] sm:$0xff]
          %v2075 = vld [vmem:[#allocation2 + $0x8] sm:$0xff]
          %v2076 = vld [vmem:[#allocation2 + $0x10] sm:$0xff]
          %v2077 = vld [vmem:[#allocation2 + $0x18] sm:$0xff]
          %v2078 = vld [vmem:[#allocation2 + $0x20] sm:$0xff]
          %v2079 = vld [vmem:[#allocation2 + $0x28] sm:$0xff]
          %v2080 = vld [vmem:[#allocation2 + $0x30] sm:$0xff]
          %v2081 = vld [vmem:[#allocation2 + $0x38] sm:$0xff]
          %v2082 = vpack.c.bf16 %v2075, %v2074
          %v2083 = vpack.c.bf16 %v2077, %v2076
          %v2084 = vpack.c.bf16 %v2079, %v2078
          %v2085 = vpack.c.bf16 %v2081, %v2080
          %v2086 = vld [vmem:[%s3] sm:$0xf]
          %v2087 = vld [vmem:[%s3 + $0x4] sm:$0xf]
          %v2088 = vld [vmem:[%s3 + $0x8] sm:$0xf]
          %v2089 = vld [vmem:[%s3 + $0xc] sm:$0xf]
          %v2090 = vld [vmem:[%s3 + $0x10] sm:$0xf]
          %v2091 = vld [vmem:[%s3 + $0x14] sm:$0xf]
          %v2092 = vld [vmem:[%s3 + $0x18] sm:$0xf]
          %v2093 = vld [vmem:[%s3 + $0x1c] sm:$0xf]
          %v2094 = vld [vmem:[%s3 + $0x20] sm:$0xf]
          %v2095 = vld [vmem:[%s3 + $0x24] sm:$0xf]
          %v2096 = vld [vmem:[%s3 + $0x28] sm:$0xf]
          %v2097 = vld [vmem:[%s3 + $0x2c] sm:$0xf]
          %v2098 = vld [vmem:[%s3 + $0x30] sm:$0xf]
          %v2099 = vld [vmem:[%s3 + $0x34] sm:$0xf]
          %v2100 = vld [vmem:[%s3 + $0x38] sm:$0xf]
          %v2101 = vld [vmem:[%s3 + $0x3c] sm:$0xf]
          %v2118 = vunpack.c.l.b16 %v2086
          %v2119 = vunpack.c.l.b16 %v2087
          %v2120 = vunpack.c.l.b16 %v2088
          %v2121 = vunpack.c.l.b16 %v2089
          %v2122 = vunpack.c.l.b16 %v2090
          %v2123 = vunpack.c.l.b16 %v2091
          %v2124 = vunpack.c.l.b16 %v2092
          %v2125 = vunpack.c.l.b16 %v2093
          %v2126 = vunpack.c.l.b16 %v2094
          %v2127 = vunpack.c.l.b16 %v2095
          %v2128 = vunpack.c.l.b16 %v2096
          %v2129 = vunpack.c.l.b16 %v2097
          %v2130 = vunpack.c.l.b16 %v2098
          %v2131 = vunpack.c.l.b16 %v2099
          %v2132 = vunpack.c.l.b16 %v2100
          %v2133 = vunpack.c.l.b16 %v2101
          %v2134 = vpack.c.b16 %v2119, %v2118
          %v2135 = vpack.c.b16 %v2121, %v2120
          %v2136 = vpack.c.b16 %v2123, %v2122
          %v2137 = vpack.c.b16 %v2125, %v2124
          %v2138 = vpack.c.b16 %v2127, %v2126
          %v2139 = vpack.c.b16 %v2129, %v2128
          %v2140 = vpack.c.b16 %v2131, %v2130
          %v2141 = vpack.c.b16 %v2133, %v2132
          %2150 = vmatprep.subr.bf16.mxu0 0
          %2151 = vmatpush1.bf16.msra.mxu0 %v2134
          %2152 = vmatprep.subr.bf16.mxu0 0
          %2153 = vmatpush1.bf16.msra.mxu0 %v2135
          %2154 = vmatprep.subr.bf16.mxu0 0
          %2155 = vmatpush1.bf16.msra.mxu0 %v2136
          %2156 = vmatprep.subr.bf16.mxu0 0
          %2157 = vmatpush1.bf16.msra.mxu0 %v2137
          %2158 = vmatprep.subr.bf16.mxu0 0
          %2159 = vmatpush1.bf16.msra.mxu0 %v2138
          %2160 = vmatprep.subr.bf16.mxu0 0
          %2161 = vmatpush1.bf16.msra.mxu0 %v2139
          %2162 = vmatprep.subr.bf16.mxu0 0
          %2163 = vmatpush1.bf16.msra.mxu0 %v2140
          %2164 = vmatprep.subr.bf16.mxu0 0
          %2165 = vmatpush1.bf16.msra.mxu0 %v2141
          %2166 = vmatprep.subr.bf16.mxu0 0
          %2167 = vmatpush1.bf16.msra.mxu0 0
          %2168 = vmatprep.subr.bf16.mxu0 0
          %2169 = vmatpush1.bf16.msra.mxu0 0
          %2170 = vmatprep.subr.bf16.mxu0 0
          %2171 = vmatpush1.bf16.msra.mxu0 0
          %2172 = vmatprep.subr.bf16.mxu0 0
          %2173 = vmatpush1.bf16.msra.mxu0 0
          %2174 = vmatprep.subr.bf16.mxu0 0
          %2175 = vmatpush1.bf16.msra.mxu0 0
          %2176 = vmatprep.subr.bf16.mxu0 0
          %2177 = vmatpush1.bf16.msra.mxu0 0
          %2178 = vmatprep.subr.bf16.mxu0 0
          %2179 = vmatpush1.bf16.msra.mxu0 0
          %2180 = vmatprep.subr.bf16.mxu0 0
          %2181 = vmatpush1.bf16.msra.mxu0 0
          %2182 = vmatprep.mubr.bf16.mxu0 0
          %2183 = vmatmul.mubr.bf16.gmra.mrb[0].mxu0 %v2082
          %v2184 = vpop.f32.mrb[0].mxu0
          %v2185 = vadd.f32 0.0, %v2184
          %v2186 = vpop.f32.mrb[0].mxu0
          %v2187 = vpop.f32.mrb[0].mxu0
          %v2188 = vadd.f32 0.0, %v2187
          %v2189 = vpop.f32.mrb[0].mxu0
          %2190 = vmatprep.mubr.bf16.mxu0 0
          %2191 = vmatmul.mubr.bf16.gmra.mrb[0].mxu0 %v2083
          %v2192 = vpop.f32.mrb[0].mxu0
          %v2193 = vadd.f32 0.0, %v2192
          %v2194 = vpop.f32.mrb[0].mxu0
          %v2195 = vpop.f32.mrb[0].mxu0
          %v2196 = vadd.f32 0.0, %v2195
          %v2197 = vpop.f32.mrb[0].mxu0
          %2198 = vmatprep.mubr.bf16.mxu0 0
          %2199 = vmatmul.mubr.bf16.gmra.mrb[0].mxu0 %v2084
          %v2200 = vpop.f32.mrb[0].mxu0
          %v2201 = vadd.f32 0.0, %v2200
          %v2202 = vpop.f32.mrb[0].mxu0
          %v2203 = vpop.f32.mrb[0].mxu0
          %v2204 = vadd.f32 0.0, %v2203
          %v2205 = vpop.f32.mrb[0].mxu0
          %2206 = vmatprep.mubr.bf16.mxu0 0
          %2207 = vmatmul.mubr.bf16.gmra.mrb[0].mxu0 %v2085
          %v2208 = vpop.f32.mrb[0].mxu0
          %v2209 = vadd.f32 0.0, %v2208
          %v2210 = vpop.f32.mrb[0].mxu0
          %v2211 = vpop.f32.mrb[0].mxu0
          %v2212 = vadd.f32 0.0, %v2211
          %v2213 = vpop.f32.mrb[0].mxu0
          %2214 = vdwg.mxu0
          %v2215 = vadd.f32 %v442, %v2185
          %v2216 = vadd.f32 %v443, %v2188
          %v2217 = vadd.f32 %v444, %v2193
          %v2218 = vadd.f32 %v445, %v2196
          %v2219 = vadd.f32 %v446, %v2201
          %v2220 = vadd.f32 %v447, %v2204
          %v2221 = vadd.f32 %v448, %v2209
          %v2222 = vadd.f32 %v449, %v2212
          %v2223 = vld [vmem:[%s4] sm:$0x1]
          %v2225 = vlaneseq
          %v2226 = vshrl.u32 %v2225, 7
          %v2227 = vsub.s32 0, %v2226
          %v2228 = vrot.slane %v2223, %v2227
          %v2230 = vadd.f32 %v2215, %v2228
          %v2231 = vadd.f32 %v2216, %v2228
          %v2232 = vadd.f32 %v2217, %v2228
          %v2233 = vadd.f32 %v2218, %v2228
          %v2234 = vadd.f32 %v2219, %v2228
          %v2235 = vadd.f32 %v2220, %v2228
          %v2236 = vadd.f32 %v2221, %v2228
          %v2237 = vadd.f32 %v2222, %v2228
          %v2238 = vpack.c.bf16 %v2231, %v2230
          %v2239 = vpack.c.bf16 %v2233, %v2232
          %v2240 = vpack.c.bf16 %v2235, %v2234
          %v2241 = vpack.c.bf16 %v2237, %v2236
          %v2242 = vld [vmem:[%s5] sm:$0xff]
          %v2243 = vld [vmem:[%s5 + $0x8] sm:$0xff]
          %v2244 = vld [vmem:[%s5 + $0x10] sm:$0xff]
          %v2245 = vld [vmem:[%s5 + $0x18] sm:$0xff]
          %v2246 = vld [vmem:[%s5 + $0x20] sm:$0xff]
          %v2247 = vld [vmem:[%s5 + $0x28] sm:$0xff]
          %v2248 = vld [vmem:[%s5 + $0x30] sm:$0xff]
          %v2249 = vld [vmem:[%s5 + $0x38] sm:$0xff]
          %v2250 = vld [vmem:[%s5 + $0x40] sm:$0xff]
          %v2251 = vld [vmem:[%s5 + $0x48] sm:$0xff]
          %v2252 = vld [vmem:[%s5 + $0x50] sm:$0xff]
          %v2253 = vld [vmem:[%s5 + $0x58] sm:$0xff]
          %v2254 = vld [vmem:[%s5 + $0x60] sm:$0xff]
          %v2255 = vld [vmem:[%s5 + $0x68] sm:$0xff]
          %v2256 = vld [vmem:[%s5 + $0x70] sm:$0xff]
          %v2257 = vld [vmem:[%s5 + $0x78] sm:$0xff]
          %v2258 = vld [vmem:[%s6] sm:$0x3]
          %v2260 = vlaneseq
          %v2261 = vshrl.u32 %v2260, 7
          %v2262 = vsub.s32 0, %v2261
          %v2263 = vrot.slane %v2258, %v2262
          %v2264 = vlaneseq
          %v2265 = vshrl.u32 %v2264, 7
          %v2266 = vsub.s32 1, %v2265
          %v2267 = vrot.slane %v2258, %v2266
          %v2286 = vunpack.c.l.b16 %v2242
          %v2287 = vunpack.c.h.b16 %v2242
          %v2288 = vunpack.c.l.b16 %v2243
          %v2289 = vunpack.c.h.b16 %v2243
          %v2290 = vunpack.c.l.b16 %v2244
          %v2291 = vunpack.c.h.b16 %v2244
          %v2292 = vunpack.c.l.b16 %v2245
          %v2293 = vunpack.c.h.b16 %v2245
          %v2294 = vunpack.c.l.b16 %v2246
          %v2295 = vunpack.c.h.b16 %v2246
          %v2296 = vunpack.c.l.b16 %v2247
          %v2297 = vunpack.c.h.b16 %v2247
          %v2298 = vunpack.c.l.b16 %v2248
          %v2299 = vunpack.c.h.b16 %v2248
          %v2300 = vunpack.c.l.b16 %v2249
          %v2301 = vunpack.c.h.b16 %v2249
          %v2302 = vunpack.c.l.b16 %v2250
          %v2303 = vunpack.c.h.b16 %v2250
          %v2304 = vunpack.c.l.b16 %v2251
          %v2305 = vunpack.c.h.b16 %v2251
          %v2306 = vunpack.c.l.b16 %v2252
          %v2307 = vunpack.c.h.b16 %v2252
          %v2308 = vunpack.c.l.b16 %v2253
          %v2309 = vunpack.c.h.b16 %v2253
          %v2310 = vunpack.c.l.b16 %v2254
          %v2311 = vunpack.c.h.b16 %v2254
          %v2312 = vunpack.c.l.b16 %v2255
          %v2313 = vunpack.c.h.b16 %v2255
          %v2314 = vunpack.c.l.b16 %v2256
          %v2315 = vunpack.c.h.b16 %v2256
          %v2316 = vunpack.c.l.b16 %v2257
          %v2317 = vunpack.c.h.b16 %v2257
          %v2318 = vpack.c.b16 %v2288, %v2286
          %v2319 = vpack.c.b16 %v2289, %v2287
          %v2320 = vpack.c.b16 %v2292, %v2290
          %v2321 = vpack.c.b16 %v2293, %v2291
          %v2322 = vpack.c.b16 %v2296, %v2294
          %v2323 = vpack.c.b16 %v2297, %v2295
          %v2324 = vpack.c.b16 %v2300, %v2298
          %v2325 = vpack.c.b16 %v2301, %v2299
          %v2326 = vpack.c.b16 %v2304, %v2302
          %v2327 = vpack.c.b16 %v2305, %v2303
          %v2328 = vpack.c.b16 %v2308, %v2306
          %v2329 = vpack.c.b16 %v2309, %v2307
          %v2330 = vpack.c.b16 %v2312, %v2310
          %v2331 = vpack.c.b16 %v2313, %v2311
          %v2332 = vpack.c.b16 %v2316, %v2314
          %v2333 = vpack.c.b16 %v2317, %v2315
          %2350 = vmatprep.subr.bf16.mxu0 %v2319
          %2351 = vmatpush1.bf16.msra.mxu0 %v2318
          %2352 = vmatprep.subr.bf16.mxu0 %v2321
          %2353 = vmatpush1.bf16.msra.mxu0 %v2320
          %2354 = vmatprep.subr.bf16.mxu0 %v2323
          %2355 = vmatpush1.bf16.msra.mxu0 %v2322
          %2356 = vmatprep.subr.bf16.mxu0 %v2325
          %2357 = vmatpush1.bf16.msra.mxu0 %v2324
          %2358 = vmatprep.subr.bf16.mxu0 %v2327
          %2359 = vmatpush1.bf16.msra.mxu0 %v2326
          %2360 = vmatprep.subr.bf16.mxu0 %v2329
          %2361 = vmatpush1.bf16.msra.mxu0 %v2328
          %2362 = vmatprep.subr.bf16.mxu0 %v2331
          %2363 = vmatpush1.bf16.msra.mxu0 %v2330
          %2364 = vmatprep.subr.bf16.mxu0 %v2333
          %2365 = vmatpush1.bf16.msra.mxu0 %v2332
          %2366 = vmatprep.subr.bf16.mxu0 0
          %2367 = vmatpush1.bf16.msra.mxu0 0
          %2368 = vmatprep.subr.bf16.mxu0 0
          %2369 = vmatpush1.bf16.msra.mxu0 0
          %2370 = vmatprep.subr.bf16.mxu0 0
          %2371 = vmatpush1.bf16.msra.mxu0 0
          %2372 = vmatprep.subr.bf16.mxu0 0
          %2373 = vmatpush1.bf16.msra.mxu0 0
          %2374 = vmatprep.subr.bf16.mxu0 0
          %2375 = vmatpush1.bf16.msra.mxu0 0
          %2376 = vmatprep.subr.bf16.mxu0 0
          %2377 = vmatpush1.bf16.msra.mxu0 0
          %2378 = vmatprep.subr.bf16.mxu0 0
          %2379 = vmatpush1.bf16.msra.mxu0 0
          %2380 = vmatprep.subr.bf16.mxu0 0
          %2381 = vmatpush1.bf16.msra.mxu0 0
          %2382 = vmatprep.mubr.bf16.mxu0 0
          %2383 = vmatmul.mubr.bf16.gmra.mrb[0].mxu0 %v2238
          %v2384 = vpop.f32.mrb[0].mxu0
          %v2385 = vadd.f32 %v2263, %v2384
          %v2386 = vpop.f32.mrb[0].mxu0
          %v2387 = vadd.f32 %v2267, %v2386
          %v2388 = vpop.f32.mrb[0].mxu0
          %v2389 = vadd.f32 %v2263, %v2388
          %v2390 = vpop.f32.mrb[0].mxu0
          %v2391 = vadd.f32 %v2267, %v2390
          %2392 = vmatprep.mubr.bf16.mxu0 0
          %2393 = vmatmul.mubr.bf16.gmra.mrb[0].mxu0 %v2239
          %v2394 = vpop.f32.mrb[0].mxu0
          %v2395 = vadd.f32 %v2263, %v2394
          %v2396 = vpop.f32.mrb[0].mxu0
          %v2397 = vadd.f32 %v2267, %v2396
          %v2398 = vpop.f32.mrb[0].mxu0
          %v2399 = vadd.f32 %v2263, %v2398
          %v2400 = vpop.f32.mrb[0].mxu0
          %v2401 = vadd.f32 %v2267, %v2400
          %2402 = vmatprep.mubr.bf16.mxu0 0
          %2403 = vmatmul.mubr.bf16.gmra.mrb[0].mxu0 %v2240
          %v2404 = vpop.f32.mrb[0].mxu0
          %v2405 = vadd.f32 %v2263, %v2404
          %v2406 = vpop.f32.mrb[0].mxu0
          %v2407 = vadd.f32 %v2267, %v2406
          %v2408 = vpop.f32.mrb[0].mxu0
          %v2409 = vadd.f32 %v2263, %v2408
          %v2410 = vpop.f32.mrb[0].mxu0
          %v2411 = vadd.f32 %v2267, %v2410
          %2412 = vmatprep.mubr.bf16.mxu0 0
          %2413 = vmatmul.mubr.bf16.gmra.mrb[0].mxu0 %v2241
          %v2414 = vpop.f32.mrb[0].mxu0
          %v2415 = vadd.f32 %v2263, %v2414
          %v2416 = vpop.f32.mrb[0].mxu0
          %v2417 = vadd.f32 %v2267, %v2416
          %v2418 = vpop.f32.mrb[0].mxu0
          %v2419 = vadd.f32 %v2263, %v2418
          %v2420 = vpop.f32.mrb[0].mxu0
          %v2421 = vadd.f32 %v2267, %v2420
          %2422 = vdwg.mxu0
          %v2423 = vadd.f32 %v2385, 3.0
          %v2424 = vadd.f32 %v2387, 3.0
          %v2425 = vadd.f32 %v2389, 3.0
          %v2426 = vadd.f32 %v2391, 3.0
          %v2427 = vadd.f32 %v2395, 3.0
          %v2428 = vadd.f32 %v2397, 3.0
          %v2429 = vadd.f32 %v2399, 3.0
          %v2430 = vadd.f32 %v2401, 3.0
          %v2431 = vadd.f32 %v2405, 3.0
          %v2432 = vadd.f32 %v2407, 3.0
          %v2433 = vadd.f32 %v2409, 3.0
          %v2434 = vadd.f32 %v2411, 3.0
          %v2435 = vadd.f32 %v2415, 3.0
          %v2436 = vadd.f32 %v2417, 3.0
          %v2437 = vadd.f32 %v2419, 3.0
          %v2438 = vadd.f32 %v2421, 3.0
          %v2439 = vmax.f32 %v2423, 0.0
          %v2440 = vmax.f32 %v2424, 0.0
          %v2441 = vmax.f32 %v2425, 0.0
          %v2442 = vmax.f32 %v2426, 0.0
          %v2443 = vmax.f32 %v2427, 0.0
          %v2444 = vmax.f32 %v2428, 0.0
          %v2445 = vmax.f32 %v2429, 0.0
          %v2446 = vmax.f32 %v2430, 0.0
          %v2447 = vmax.f32 %v2431, 0.0
          %v2448 = vmax.f32 %v2432, 0.0
          %v2449 = vmax.f32 %v2433, 0.0
          %v2450 = vmax.f32 %v2434, 0.0
          %v2451 = vmax.f32 %v2435, 0.0
          %v2452 = vmax.f32 %v2436, 0.0
          %v2453 = vmax.f32 %v2437, 0.0
          %v2454 = vmax.f32 %v2438, 0.0
          %v2455 = vmin.f32 %v2439, 6.0
          %v2456 = vmin.f32 %v2440, 6.0
          %v2457 = vmin.f32 %v2441, 6.0
          %v2458 = vmin.f32 %v2442, 6.0
          %v2459 = vmin.f32 %v2443, 6.0
          %v2460 = vmin.f32 %v2444, 6.0
          %v2461 = vmin.f32 %v2445, 6.0
          %v2462 = vmin.f32 %v2446, 6.0
          %v2463 = vmin.f32 %v2447, 6.0
          %v2464 = vmin.f32 %v2448, 6.0
          %v2465 = vmin.f32 %v2449, 6.0
          %v2466 = vmin.f32 %v2450, 6.0
          %v2467 = vmin.f32 %v2451, 6.0
          %v2468 = vmin.f32 %v2452, 6.0
          %v2469 = vmin.f32 %v2453, 6.0
          %v2470 = vmin.f32 %v2454, 6.0
          %v2471 = vmul.f32 %v2385, %v2455
          %v2472 = vmul.f32 %v2387, %v2456
          %v2473 = vmul.f32 %v2389, %v2457
          %v2474 = vmul.f32 %v2391, %v2458
          %v2475 = vmul.f32 %v2395, %v2459
          %v2476 = vmul.f32 %v2397, %v2460
          %v2477 = vmul.f32 %v2399, %v2461
          %v2478 = vmul.f32 %v2401, %v2462
          %v2479 = vmul.f32 %v2405, %v2463
          %v2480 = vmul.f32 %v2407, %v2464
          %v2481 = vmul.f32 %v2409, %v2465
          %v2482 = vmul.f32 %v2411, %v2466
          %v2483 = vmul.f32 %v2415, %v2467
          %v2484 = vmul.f32 %v2417, %v2468
          %v2485 = vmul.f32 %v2419, %v2469
          %v2486 = vmul.f32 %v2421, %v2470
          %v2487 = vmul.f32 %v2471, 0.16666667
          %v2488 = vmul.f32 %v2472, 0.16666667
          %v2489 = vmul.f32 %v2473, 0.16666667
          %v2490 = vmul.f32 %v2474, 0.16666667
          %v2491 = vmul.f32 %v2475, 0.16666667
          %v2492 = vmul.f32 %v2476, 0.16666667
          %v2493 = vmul.f32 %v2477, 0.16666667
          %v2494 = vmul.f32 %v2478, 0.16666667
          %v2495 = vmul.f32 %v2479, 0.16666667
          %v2496 = vmul.f32 %v2480, 0.16666667
          %v2497 = vmul.f32 %v2481, 0.16666667
          %v2498 = vmul.f32 %v2482, 0.16666667
          %v2499 = vmul.f32 %v2483, 0.16666667
          %v2500 = vmul.f32 %v2484, 0.16666667
          %v2501 = vmul.f32 %v2485, 0.16666667
          %v2502 = vmul.f32 %v2486, 0.16666667
          %v2503 = vpack.c.bf16 %v2489, %v2487
          %v2504 = vpack.c.bf16 %v2490, %v2488
          %v2505 = vpack.c.bf16 %v2493, %v2491
          %v2506 = vpack.c.bf16 %v2494, %v2492
          %v2507 = vpack.c.bf16 %v2497, %v2495
          %v2508 = vpack.c.bf16 %v2498, %v2496
          %v2509 = vpack.c.bf16 %v2501, %v2499
          %v2510 = vpack.c.bf16 %v2502, %v2500
          %v2511 = vld [vmem:[%s7] sm:$0xf]
          %v2512 = vld [vmem:[%s7 + $0x4] sm:$0xf]
          %v2513 = vld [vmem:[%s7 + $0x8] sm:$0xf]
          %v2514 = vld [vmem:[%s7 + $0xc] sm:$0xf]
          %v2515 = vld [vmem:[%s7 + $0x10] sm:$0xf]
          %v2516 = vld [vmem:[%s7 + $0x14] sm:$0xf]
          %v2517 = vld [vmem:[%s7 + $0x18] sm:$0xf]
          %v2518 = vld [vmem:[%s7 + $0x1c] sm:$0xf]
          %v2519 = vld [vmem:[%s7 + $0x20] sm:$0xf]
          %v2520 = vld [vmem:[%s7 + $0x24] sm:$0xf]
          %v2521 = vld [vmem:[%s7 + $0x28] sm:$0xf]
          %v2522 = vld [vmem:[%s7 + $0x2c] sm:$0xf]
          %v2523 = vld [vmem:[%s7 + $0x30] sm:$0xf]
          %v2524 = vld [vmem:[%s7 + $0x34] sm:$0xf]
          %v2525 = vld [vmem:[%s7 + $0x38] sm:$0xf]
          %v2526 = vld [vmem:[%s7 + $0x3c] sm:$0xf]
          %v2527 = vld [vmem:[%s7 + $0x40] sm:$0xf]
          %v2528 = vld [vmem:[%s7 + $0x44] sm:$0xf]
          %v2529 = vld [vmem:[%s7 + $0x48] sm:$0xf]
          %v2530 = vld [vmem:[%s7 + $0x4c] sm:$0xf]
          %v2531 = vld [vmem:[%s7 + $0x50] sm:$0xf]
          %v2532 = vld [vmem:[%s7 + $0x54] sm:$0xf]
          %v2533 = vld [vmem:[%s7 + $0x58] sm:$0xf]
          %v2534 = vld [vmem:[%s7 + $0x5c] sm:$0xf]
          %v2535 = vld [vmem:[%s7 + $0x60] sm:$0xf]
          %v2536 = vld [vmem:[%s7 + $0x64] sm:$0xf]
          %v2537 = vld [vmem:[%s7 + $0x68] sm:$0xf]
          %v2538 = vld [vmem:[%s7 + $0x6c] sm:$0xf]
          %v2539 = vld [vmem:[%s7 + $0x70] sm:$0xf]
          %v2540 = vld [vmem:[%s7 + $0x74] sm:$0xf]
          %v2541 = vld [vmem:[%s7 + $0x78] sm:$0xf]
          %v2542 = vld [vmem:[%s7 + $0x7c] sm:$0xf]
          %v2575 = vunpack.c.l.b16 %v2511
          %v2576 = vunpack.c.l.b16 %v2512
          %v2577 = vunpack.c.l.b16 %v2513
          %v2578 = vunpack.c.l.b16 %v2514
          %v2579 = vunpack.c.l.b16 %v2515
          %v2580 = vunpack.c.l.b16 %v2516
          %v2581 = vunpack.c.l.b16 %v2517
          %v2582 = vunpack.c.l.b16 %v2518
          %v2583 = vunpack.c.l.b16 %v2519
          %v2584 = vunpack.c.l.b16 %v2520
          %v2585 = vunpack.c.l.b16 %v2521
          %v2586 = vunpack.c.l.b16 %v2522
          %v2587 = vunpack.c.l.b16 %v2523
          %v2588 = vunpack.c.l.b16 %v2524
          %v2589 = vunpack.c.l.b16 %v2525
          %v2590 = vunpack.c.l.b16 %v2526
          %v2591 = vunpack.c.l.b16 %v2527
          %v2592 = vunpack.c.l.b16 %v2528
          %v2593 = vunpack.c.l.b16 %v2529
          %v2594 = vunpack.c.l.b16 %v2530
          %v2595 = vunpack.c.l.b16 %v2531
          %v2596 = vunpack.c.l.b16 %v2532
          %v2597 = vunpack.c.l.b16 %v2533
          %v2598 = vunpack.c.l.b16 %v2534
          %v2599 = vunpack.c.l.b16 %v2535
          %v2600 = vunpack.c.l.b16 %v2536
          %v2601 = vunpack.c.l.b16 %v2537
          %v2602 = vunpack.c.l.b16 %v2538
          %v2603 = vunpack.c.l.b16 %v2539
          %v2604 = vunpack.c.l.b16 %v2540
          %v2605 = vunpack.c.l.b16 %v2541
          %v2606 = vunpack.c.l.b16 %v2542
          %v2607 = vpack.c.b16 %v2576, %v2575
          %v2608 = vpack.c.b16 %v2578, %v2577
          %v2609 = vpack.c.b16 %v2580, %v2579
          %v2610 = vpack.c.b16 %v2582, %v2581
          %v2611 = vpack.c.b16 %v2584, %v2583
          %v2612 = vpack.c.b16 %v2586, %v2585
          %v2613 = vpack.c.b16 %v2588, %v2587
          %v2614 = vpack.c.b16 %v2590, %v2589
          %v2615 = vpack.c.b16 %v2592, %v2591
          %v2616 = vpack.c.b16 %v2594, %v2593
          %v2617 = vpack.c.b16 %v2596, %v2595
          %v2618 = vpack.c.b16 %v2598, %v2597
          %v2619 = vpack.c.b16 %v2600, %v2599
          %v2620 = vpack.c.b16 %v2602, %v2601
          %v2621 = vpack.c.b16 %v2604, %v2603
          %v2622 = vpack.c.b16 %v2606, %v2605
          %2639 = vmatprep.subr.bf16.mxu0 0
          %2640 = vmatpush1.bf16.msra.mxu0 %v2607
          %2641 = vmatprep.subr.bf16.mxu0 0
          %2642 = vmatpush1.bf16.msra.mxu0 %v2608
          %2643 = vmatprep.subr.bf16.mxu0 0
          %2644 = vmatpush1.bf16.msra.mxu0 %v2609
          %2645 = vmatprep.subr.bf16.mxu0 0
          %2646 = vmatpush1.bf16.msra.mxu0 %v2610
          %2647 = vmatprep.subr.bf16.mxu0 0
          %2648 = vmatpush1.bf16.msra.mxu0 %v2611
          %2649 = vmatprep.subr.bf16.mxu0 0
          %2650 = vmatpush1.bf16.msra.mxu0 %v2612
          %2651 = vmatprep.subr.bf16.mxu0 0
          %2652 = vmatpush1.bf16.msra.mxu0 %v2613
          %2653 = vmatprep.subr.bf16.mxu0 0
          %2654 = vmatpush1.bf16.msra.mxu0 %v2614
          %2655 = vmatprep.subr.bf16.mxu0 0
          %2656 = vmatpush1.bf16.msra.mxu0 %v2615
          %2657 = vmatprep.subr.bf16.mxu0 0
          %2658 = vmatpush1.bf16.msra.mxu0 %v2616
          %2659 = vmatprep.subr.bf16.mxu0 0
          %2660 = vmatpush1.bf16.msra.mxu0 %v2617
          %2661 = vmatprep.subr.bf16.mxu0 0
          %2662 = vmatpush1.bf16.msra.mxu0 %v2618
          %2663 = vmatprep.subr.bf16.mxu0 0
          %2664 = vmatpush1.bf16.msra.mxu0 %v2619
          %2665 = vmatprep.subr.bf16.mxu0 0
          %2666 = vmatpush1.bf16.msra.mxu0 %v2620
          %2667 = vmatprep.subr.bf16.mxu0 0
          %2668 = vmatpush1.bf16.msra.mxu0 %v2621
          %2669 = vmatprep.subr.bf16.mxu0 0
          %2670 = vmatpush1.bf16.msra.mxu0 %v2622
          %2671 = vmatprep.mubr.bf16.mxu0 %v2504
          %2672 = vmatmul.mubr.bf16.gmra.mrb[0].mxu0 %v2503
          %v2673 = vpop.f32.mrb[0].mxu0
          %v2674 = vadd.f32 0.0, %v2673
          %v2675 = vpop.f32.mrb[0].mxu0
          %v2676 = vpop.f32.mrb[0].mxu0
          %v2677 = vadd.f32 0.0, %v2676
          %v2678 = vpop.f32.mrb[0].mxu0
          %2679 = vmatprep.mubr.bf16.mxu0 %v2506
          %2680 = vmatmul.mubr.bf16.gmra.mrb[0].mxu0 %v2505
          %v2681 = vpop.f32.mrb[0].mxu0
          %v2682 = vadd.f32 0.0, %v2681
          %v2683 = vpop.f32.mrb[0].mxu0
          %v2684 = vpop.f32.mrb[0].mxu0
          %v2685 = vadd.f32 0.0, %v2684
          %v2686 = vpop.f32.mrb[0].mxu0
          %2687 = vmatprep.mubr.bf16.mxu0 %v2508
          %2688 = vmatmul.mubr.bf16.gmra.mrb[0].mxu0 %v2507
          %v2689 = vpop.f32.mrb[0].mxu0
          %v2690 = vadd.f32 0.0, %v2689
          %v2691 = vpop.f32.mrb[0].mxu0
          %v2692 = vpop.f32.mrb[0].mxu0
          %v2693 = vadd.f32 0.0, %v2692
          %v2694 = vpop.f32.mrb[0].mxu0
          %2695 = vmatprep.mubr.bf16.mxu0 %v2510
          %2696 = vmatmul.mubr.bf16.gmra.mrb[0].mxu0 %v2509
          %v2697 = vpop.f32.mrb[0].mxu0
          %v2698 = vadd.f32 0.0, %v2697
          %v2699 = vpop.f32.mrb[0].mxu0
          %v2700 = vpop.f32.mrb[0].mxu0
          %v2701 = vadd.f32 0.0, %v2700
          %v2702 = vpop.f32.mrb[0].mxu0
          %2703 = vdwg.mxu0
          %v2704 = vadd.f32 %v2230, %v2674
          %v2705 = vadd.f32 %v2231, %v2677
          %v2706 = vadd.f32 %v2232, %v2682
          %v2707 = vadd.f32 %v2233, %v2685
          %v2708 = vadd.f32 %v2234, %v2690
          %v2709 = vadd.f32 %v2235, %v2693
          %v2710 = vadd.f32 %v2236, %v2698
          %v2711 = vadd.f32 %v2237, %v2701
          %v2712 = vld [vmem:[%s8] sm:$0x1]
          %v2714 = vlaneseq
          %v2715 = vshrl.u32 %v2714, 7
          %v2716 = vsub.s32 0, %v2715
          %v2717 = vrot.slane %v2712, %v2716
          %v2719 = vadd.f32 %v2704, %v2717
          %v2720 = vadd.f32 %v2705, %v2717
          %v2721 = vadd.f32 %v2706, %v2717
          %v2722 = vadd.f32 %v2707, %v2717
          %v2723 = vadd.f32 %v2708, %v2717
          %v2724 = vadd.f32 %v2709, %v2717
          %v2725 = vadd.f32 %v2710, %v2717
          %v2726 = vadd.f32 %v2711, %v2717
          %s2727 = sld [smem:[#allocation3]]
          %v2728 = vstv %s2727
          %v2729 = vmul.f32 %v2728, %v2719
          %v2730 = vmul.f32 %v2728, %v2720
          %v2731 = vmul.f32 %v2728, %v2721
          %v2732 = vmul.f32 %v2728, %v2722
          %v2733 = vmul.f32 %v2728, %v2723
          %v2734 = vmul.f32 %v2728, %v2724
          %v2735 = vmul.f32 %v2728, %v2725
          %v2736 = vmul.f32 %v2728, %v2726
          %v2737 = vadd.f32 %v442, %v2729
          %v2738 = vadd.f32 %v443, %v2730
          %v2739 = vadd.f32 %v444, %v2731
          %v2740 = vadd.f32 %v445, %v2732
          %v2741 = vadd.f32 %v446, %v2733
          %v2742 = vadd.f32 %v447, %v2734
          %v2743 = vadd.f32 %v448, %v2735
          %v2744 = vadd.f32 %v449, %v2736
          %2745 = vst [vmem:[%s406] sm:$0xff] %v2737
          %2746 = vst [vmem:[%s406 + $0x8] sm:$0xff] %v2738
          %2747 = vst [vmem:[%s406 + $0x10] sm:$0xff] %v2739
          %2748 = vst [vmem:[%s406 + $0x18] sm:$0xff] %v2740
          %2749 = vst [vmem:[%s406 + $0x20] sm:$0xff] %v2741
          %2750 = vst [vmem:[%s406 + $0x28] sm:$0xff] %v2742
          %2751 = vst [vmem:[%s406 + $0x30] sm:$0xff] %v2743
          %2752 = vst [vmem:[%s406 + $0x38] sm:$0xff] %v2744
        $region76: #{levit_stage_tinyfusion.3} parent=63 // pred_fallthru
          _
        %s2753 = sld [smem:[#allocation6 + $0x1]]
        %p2754 = scmp.ne.s32.totalorder %s2753, 0
        // Predicated region
        $region77: #{levit_stage_tinyfusion.3} parent=63 // pred_check
          %p2755 = pneg %p2754
        $region78: #{levit_stage_tinyfusion.3} parent=63 // pred_check_branch
          %2757 = sbr.rel (%p2755) target = $region80
        $region79: #{levit_stage_tinyfusion.3} parent=63 // pred_region
          %v2758 = vld [vmem:[%s406] sm:$0xff]
          %v2759 = vld [vmem:[%s406 + $0x8] sm:$0xff]
          %v2760 = vld [vmem:[%s406 + $0x10] sm:$0xff]
          %v2761 = vld [vmem:[%s406 + $0x18] sm:$0xff]
          %v2762 = vld [vmem:[%s406 + $0x20] sm:$0xff]
          %v2763 = vld [vmem:[%s406 + $0x28] sm:$0xff]
          %v2764 = vld [vmem:[%s406 + $0x30] sm:$0xff]
          %v2765 = vld [vmem:[%s406 + $0x38] sm:$0xff]
          %v2766 = vpack.c.bf16 %v2759, %v2758
          %v2767 = vpack.c.bf16 %v2761, %v2760
          %v2768 = vpack.c.bf16 %v2763, %v2762
          %v2769 = vpack.c.bf16 %v2765, %v2764
          %s2770 = scalar_lea.vmem %s1, 192
          %v2771 = vld [vmem:[%s2770] sm:$0xff]
          %v2772 = vld [vmem:[%s2770 + $0x8] sm:$0xf]
          %v2773 = vld [vmem:[%s2770 + $0xc] sm:$0xff]
          %v2774 = vld [vmem:[%s2770 + $0x14] sm:$0xf]
          %v2775 = vld [vmem:[%s2770 + $0x18] sm:$0xff]
          %v2776 = vld [vmem:[%s2770 + $0x20] sm:$0xf]
          %v2777 = vld [vmem:[%s2770 + $0x24] sm:$0xff]
          %v2778 = vld [vmem:[%s2770 + $0x2c] sm:$0xf]
          %v2779 = vld [vmem:[%s2770 + $0x30] sm:$0xff]
          %v2780 = vld [vmem:[%s2770 + $0x38] sm:$0xf]
          %v2781 = vld [vmem:[%s2770 + $0x3c] sm:$0xff]
          %v2782 = vld [vmem:[%s2770 + $0x44] sm:$0xf]
          %v2783 = vld [vmem:[%s2770 + $0x48] sm:$0xff]
          %v2784 = vld [vmem:[%s2770 + $0x50] sm:$0xf]
          %v2785 = vld [vmem:[%s2770 + $0x54] sm:$0xff]
          %v2786 = vld [vmem:[%s2770 + $0x5c] sm:$0xf]
          %v2787 = vld [vmem:[%s2770 + $0x60] sm:$0xff]
          %v2788 = vld [vmem:[%s2770 + $0x68] sm:$0xf]
          %v2789 = vld [vmem:[%s2770 + $0x6c] sm:$0xff]
          %v2790 = vld [vmem:[%s2770 + $0x74] sm:$0xf]
          %v2791 = vld [vmem:[%s2770 + $0x78] sm:$0xff]
          %v2792 = vld [vmem:[%s2770 + $0x80] sm:$0xf]
          %v2793 = vld [vmem:[%s2770 + $0x84] sm:$0xff]
          %v2794 = vld [vmem:[%s2770 + $0x8c] sm:$0xf]
          %v2795 = vld [vmem:[%s2770 + $0x90] sm:$0xff]
          %v2796 = vld [vmem:[%s2770 + $0x98] sm:$0xf]
          %v2797 = vld [vmem:[%s2770 + $0x9c] sm:$0xff]
          %v2798 = vld [vmem:[%s2770 + $0xa4] sm:$0xf]
          %v2799 = vld [vmem:[%s2770 + $0xa8] sm:$0xff]
          %v2800 = vld [vmem:[%s2770 + $0xb0] sm:$0xf]
          %v2801 = vld [vmem:[%s2770 + $0xb4] sm:$0xff]
          %v2802 = vld [vmem:[%s2770 + $0xbc] sm:$0xf]
          %s2803 = scalar_lea.vmem %s2, 3
          %v2804 = vld [vmem:[%s2803] sm:$0x7]
          %v2806 = vlaneseq
          %v2807 = vshrl.u32 %v2806, 7
          %v2808 = vsub.s32 0, %v2807
          %v2809 = vrot.slane %v2804, %v2808
          %v2810 = vlaneseq
          %v2811 = vshrl.u32 %v2810, 7
          %v2812 = vsub.s32 1, %v2811
          %v2813 = vrot.slane %v2804, %v2812
          %v2814 = vlaneseq
          %v2815 = vshrl.u32 %v2814, 7
          %v2816 = vsub.s32 2, %v2815
          %v2817 = vrot.slane %v2804, %v2816
          %v2853 = vunpack.c.l.b16 %v2771
          %v2854 = vunpack.c.h.b16 %v2771
          %v2855 = vunpack.c.l.b16 %v2772
          %v2856 = vunpack.c.l.b16 %v2773
          %v2857 = vunpack.c.h.b16 %v2773
          %v2858 = vunpack.c.l.b16 %v2774
          %v2859 = vunpack.c.l.b16 %v2775
          %v2860 = vunpack.c.h.b16 %v2775
          %v2861 = vunpack.c.l.b16 %v2776
          %v2862 = vunpack.c.l.b16 %v2777
          %v2863 = vunpack.c.h.b16 %v2777
          %v2864 = vunpack.c.l.b16 %v2778
          %v2865 = vunpack.c.l.b16 %v2779
          %v2866 = vunpack.c.h.b16 %v2779
          %v2867 = vunpack.c.l.b16 %v2780
          %v2868 = vunpack.c.l.b16 %v2781
          %v2869 = vunpack.c.h.b16 %v2781
          %v2870 = vunpack.c.l.b16 %v2782
          %v2871 = vunpack.c.l.b16 %v2783
          %v2872 = vunpack.c.h.b16 %v2783
          %v2873 = vunpack.c.l.b16 %v2784
          %v2874 = vunpack.c.l.b16 %v2785
          %v2875 = vunpack.c.h.b16 %v2785
          %v2876 = vunpack.c.l.b16 %v2786
          %v2877 = vunpack.c.l.b16 %v2787
          %v2878 = vunpack.c.h.b16 %v2787
          %v2879 = vunpack.c.l.b16 %v2788
          %v2880 = vunpack.c.l.b16 %v2789
          %v2881 = vunpack.c.h.b16 %v2789
          %v2882 = vunpack.c.l.b16 %v2790
          %v2883 = vunpack.c.l.b16 %v2791
          %v2884 = vunpack.c.h.b16 %v2791
          %v2885 = vunpack.c.l.b16 %v2792
          %v2886 = vunpack.c.l.b16 %v2793
          %v2887 = vunpack.c.h.b16 %v2793
          %v2888 = vunpack.c.l.b16 %v2794
          %v2889 = vunpack.c.l.b16 %v2795
          %v2890 = vunpack.c.h.b16 %v2795
          %v2891 = vunpack.c.l.b16 %v2796
          %v2892 = vunpack.c.l.b16 %v2797
          %v2893 = vunpack.c.h.b16 %v2797
          %v2894 = vunpack.c.l.b16 %v2798
          %v2895 = vunpack.c.l.b16 %v2799
          %v2896 = vunpack.c.h.b16 %v2799
          %v2897 = vunpack.c.l.b16 %v2800
          %v2898 = vunpack.c.l.b16 %v2801
          %v2899 = vunpack.c.h.b16 %v2801
          %v2900 = vunpack.c.l.b16 %v2802
          %v2901 = vpack.c.b16 %v2856, %v2853
          %v2902 = vpack.c.b16 %v2857, %v2854
          %v2903 = vpack.c.b16 %v2858, %v2855
          %v2904 = vpack.c.b16 %v2862, %v2859
          %v2905 = vpack.c.b16 %v2863, %v2860
          %v2906 = vpack.c.b16 %v2864, %v2861
          %v2907 = vpack.c.b16 %v2868, %v2865
          %v2908 = vpack.c.b16 %v2869, %v2866
          %v2909 = vpack.c.b16 %v2870, %v2867
          %v2910 = vpack.c.b16 %v2874, %v2871
          %v2911 = vpack.c.b16 %v2875, %v2872
          %v2912 = vpack.c.b16 %v2876, %v2873
          %v2913 = vpack.c.b16 %v2880, %v2877
          %v2914 = vpack.c.b16 %v2881, %v2878
          %v2915 = vpack.c.b16 %v2882, %v2879
          %v2916 = vpack.c.b16 %v2886, %v2883
          %v2917 = vpack.c.b16 %v2887, %v2884
          %v2918 = vpack.c.b16 %v2888, %v2885
          %v2919 = vpack.c.b16 %v2892, %v2889
          %v2920 = vpack.c.b16 %v2893, %v2890
          %v2921 = vpack.c.b16 %v2894, %v2891
          %v2922 = vpack.c.b16 %v2898, %v2895
          %v2923 = vpack.c.b16 %v2899, %v2896
          %v2924 = vpack.c.b16 %v2900, %v2897
          %2949 = vmatprep.subr.bf16.mxu0 %v2902
          %2950 = vmatpush1.bf16.msra.mxu0 %v2901
          %2951 = vmatprep.subr.bf16.mxu0 %v2905
          %2952 = vmatpush1.bf16.msra.mxu0 %v2904
          %2953 = vmatprep.subr.bf16.mxu0 %v2908
          %2954 = vmatpush1.bf16.msra.mxu0 %v2907
          %2955 = vmatprep.subr.bf16.mxu0 %v2911
          %2956 = vmatpush1.bf16.msra.mxu0 %v2910
          %2957 = vmatprep.subr.bf16.mxu0 %v2914
          %2958 = vmatpush1.bf16.msra.mxu0 %v2913
          %2959 = vmatprep.subr.bf16.mxu0 %v2917
          %2960 = vmatpush1.bf16.msra.mxu0 %v2916
          %2961 = vmatprep.subr.bf16.mxu0 %v2920
          %2962 = vmatpush1.bf16.msra.mxu0 %v2919
          %2963 = vmatprep.subr.bf16.mxu0 %v2923
          %2964 = vmatpush1.bf16.msra.mxu0 %v2922
          %2965 = vmatprep.subr.bf16.mxu0 0
          %2966 = vmatpush1.bf16.msra.mxu0 0
          %2967 = vmatprep.subr.bf16.mxu0 0
          %2968 = vmatpush1.bf16.msra.mxu0 0
          %2969 = vmatprep.subr.bf16.mxu0 0
          %2970 = vmatpush1.bf16.msra.mxu0 0
          %2971 = vmatprep.subr.bf16.mxu0 0
          %2972 = vmatpush1.bf16.msra.mxu0 0
          %2973 = vmatprep.subr.bf16.mxu0 0
          %2974 = vmatpush1.bf16.msra.mxu0 0
          %2975 = vmatprep.subr.bf16.mxu0 0
          %2976 = vmatpush1.bf16.msra.mxu0 0
          %2977 = vmatprep.subr.bf16.mxu0 0
          %2978 = vmatpush1.bf16.msra.mxu0 0
          %2979 = vmatprep.subr.bf16.mxu0 0
          %2980 = vmatpush1.bf16.msra.mxu0 0
          %2981 = vmatprep.mubr.bf16.mxu0 0
          %2982 = vmatmul.mubr.bf16.gmra.mrb[0].mxu0 %v2766
          %v2983 = vpop.f32.mrb[0].mxu0
          %v2984 = vadd.f32 %v2809, %v2983
          %v2985 = vpop.f32.mrb[0].mxu0
          %v2986 = vadd.f32 %v2813, %v2985
          %v2987 = vpop.f32.mrb[0].mxu0
          %v2988 = vadd.f32 %v2809, %v2987
          %v2989 = vpop.f32.mrb[0].mxu0
          %v2990 = vadd.f32 %v2813, %v2989
          %2991 = vmatprep.mubr.bf16.mxu0 0
          %2992 = vmatmul.mubr.bf16.gmra.mrb[0].mxu0 %v2767
          %v2993 = vpop.f32.mrb[0].mxu0
          %v2994 = vadd.f32 %v2809, %v2993
          %v2995 = vpop.f32.mrb[0].mxu0
          %v2996 = vadd.f32 %v2813, %v2995
          %v2997 = vpop.f32.mrb[0].mxu0
          %v2998 = vadd.f32 %v2809, %v2997
          %v2999 = vpop.f32.mrb[0].mxu0
          %v3000 = vadd.f32 %v2813, %v2999
          %3001 = vmatprep.mubr.bf16.mxu0 0
          %3002 = vmatmul.mubr.bf16.gmra.mrb[0].mxu0 %v2768
          %v3003 = vpop.f32.mrb[0].mxu0
          %v3004 = vadd.f32 %v2809, %v3003
          %v3005 = vpop.f32.mrb[0].mxu0
          %v3006 = vadd.f32 %v2813, %v3005
          %v3007 = vpop.f32.mrb[0].mxu0
          %v3008 = vadd.f32 %v2809, %v3007
          %v3009 = vpop.f32.mrb[0].mxu0
          %v3010 = vadd.f32 %v2813, %v3009
          %3011 = vmatprep.mubr.bf16.mxu0 0
          %3012 = vmatmul.mubr.bf16.gmra.mrb[0].mxu0 %v2769
          %v3013 = vpop.f32.mrb[0].mxu0
          %v3014 = vadd.f32 %v2809, %v3013
          %v3015 = vpop.f32.mrb[0].mxu0
          %v3016 = vadd.f32 %v2813, %v3015
          %v3017 = vpop.f32.mrb[0].mxu0
          %v3018 = vadd.f32 %v2809, %v3017
          %v3019 = vpop.f32.mrb[0].mxu0
          %v3020 = vadd.f32 %v2813, %v3019
          %3021 = vdwg.mxu0
          %3022 = vmatprep.subr.bf16.mxu0 0
          %3023 = vmatpush1.bf16.msra.mxu0 %v2903
          %3024 = vmatprep.subr.bf16.mxu0 0
          %3025 = vmatpush1.bf16.msra.mxu0 %v2906
          %3026 = vmatprep.subr.bf16.mxu0 0
          %3027 = vmatpush1.bf16.msra.mxu0 %v2909
          %3028 = vmatprep.subr.bf16.mxu0 0
          %3029 = vmatpush1.bf16.msra.mxu0 %v2912
          %3030 = vmatprep.subr.bf16.mxu0 0
          %3031 = vmatpush1.bf16.msra.mxu0 %v2915
          %3032 = vmatprep.subr.bf16.mxu0 0
          %3033 = vmatpush1.bf16.msra.mxu0 %v2918
          %3034 = vmatprep.subr.bf16.mxu0 0
          %3035 = vmatpush1.bf16.msra.mxu0 %v2921
          %3036 = vmatprep.subr.bf16.mxu0 0
          %3037 = vmatpush1.bf16.msra.mxu0 %v2924
          %3038 = vmatprep.subr.bf16.mxu0 0
          %3039 = vmatpush1.bf16.msra.mxu0 0
          %3040 = vmatprep.subr.bf16.mxu0 0
          %3041 = vmatpush1.bf16.msra.mxu0 0
          %3042 = vmatprep.subr.bf16.mxu0 0
          %3043 = vmatpush1.bf16.msra.mxu0 0
          %3044 = vmatprep.subr.bf16.mxu0 0
          %3045 = vmatpush1.bf16.msra.mxu0 0
          %3046 = vmatprep.subr.bf16.mxu0 0
          %3047 = vmatpush1.bf16.msra.mxu0 0
          %3048 = vmatprep.subr.bf16.mxu0 0
          %3049 = vmatpush1.bf16.msra.mxu0 0
          %3050 = vmatprep.subr.bf16.mxu0 0
          %3051 = vmatpush1.bf16.msra.mxu0 0
          %3052 = vmatprep.subr.bf16.mxu0 0
          %3053 = vmatpush1.bf16.msra.mxu0 0
          %3054 = vmatprep.mubr.bf16.mxu0 0
          %3055 = vmatmul.mubr.bf16.gmra.mrb[0].mxu0 %v2766
          %v3056 = vpop.f32.mrb[0].mxu0
          %v3057 = vadd.f32 %v2817, %v3056
          %v3058 = vpop.f32.mrb[0].mxu0
          %v3059 = vpop.f32.mrb[0].mxu0
          %v3060 = vadd.f32 %v2817, %v3059
          %v3061 = vpop.f32.mrb[0].mxu0
          %3062 = vmatprep.mubr.bf16.mxu0 0
          %3063 = vmatmul.mubr.bf16.gmra.mrb[0].mxu0 %v2767
          %v3064 = vpop.f32.mrb[0].mxu0
          %v3065 = vadd.f32 %v2817, %v3064
          %v3066 = vpop.f32.mrb[0].mxu0
          %v3067 = vpop.f32.mrb[0].mxu0
          %v3068 = vadd.f32 %v2817, %v3067
          %v3069 = vpop.f32.mrb[0].mxu0
          %3070 = vmatprep.mubr.bf16.mxu0 0
          %3071 = vmatmul.mubr.bf16.gmra.mrb[0].mxu0 %v2768
          %v3072 = vpop.f32.mrb[0].mxu0
          %v3073 = vadd.f32 %v2817, %v3072
          %v3074 = vpop.f32.mrb[0].mxu0
          %v3075 = vpop.f32.mrb[0].mxu0
          %v3076 = vadd.f32 %v2817, %v3075
          %v3077 = vpop.f32.mrb[0].mxu0
          %3078 = vmatprep.mubr.bf16.mxu0 0
          %3079 = vmatmul.mubr.bf16.gmra.mrb[0].mxu0 %v2769
          %v3080 = vpop.f32.mrb[0].mxu0
          %v3081 = vadd.f32 %v2817, %v3080
          %v3082 = vpop.f32.mrb[0].mxu0
          %v3083 = vpop.f32.mrb[0].mxu0
          %v3084 = vadd.f32 %v2817, %v3083
          %v3085 = vpop.f32.mrb[0].mxu0
          %3086 = vdwg.mxu0
          %v3087 = vpack.c.bf16 %v2988, %v2984
          %v3088 = vpack.c.bf16 %v2998, %v2994
          %v3089 = vpack.c.bf16 %v3008, %v3004
          %v3090 = vpack.c.bf16 %v3018, %v3014
          %v3091 = vpack.c.bf16 %v2990, %v2986
          %v3092 = vpack.c.bf16 %v3000, %v2996
          %v3093 = vpack.c.bf16 %v3010, %v3006
          %v3094 = vpack.c.bf16 %v3020, %v3016
          %v3095 = vpack.c.bf16 %v3060, %v3057
          %v3096 = vpack.c.bf16 %v3068, %v3065
          %v3097 = vpack.c.bf16 %v3076, %v3073
          %v3098 = vpack.c.bf16 %v3084, %v3081
          %vm3099 = vcmask 261120
          %v3101 = vsel %vm3099, %v3087, 0
          %v3104 = vsel %vm3099, %v3088, 0
          %v3107 = vsel %vm3099, %v3089, 0
          %v3110 = vsel %vm3099, %v3090, 0
          %v3113 = vsel %vm3099, %v3091, 0
          %v3116 = vsel %vm3099, %v3092, 0
          %v3119 = vsel %vm3099, %v3093, 0
          %v3122 = vsel %vm3099, %v3094, 0
          %3124 = vmatprep.subr.bf16.mxu0 0
          %3125 = vmatpush1.bf16.xpose.msra.mxu0 %v3113
          %3126 = vmatprep.subr.bf16.mxu0 0
          %3127 = vmatpush1.bf16.xpose.msra.mxu0 %v3116
          %3128 = vmatprep.subr.bf16.mxu0 0
          %3129 = vmatpush1.bf16.xpose.msra.mxu0 %v3119
          %3130 = vmatprep.subr.bf16.mxu0 0
          %3131 = vmatpush1.bf16.xpose.msra.mxu0 %v3122
          %3132 = vmatprep.subr.bf16.mxu0 0
          %3133 = vmatpush1.bf16.xpose.msra.mxu0 0
          %3134 = vmatprep.subr.bf16.mxu0 0
          %3135 = vmatpush1.bf16.xpose.msra.mxu0 0
          %3136 = vmatprep.subr.bf16.mxu0 0
          %3137 = vmatpush1.bf16.xpose.msra.mxu0 0
          %3138 = vmatprep.subr.bf16.mxu0 0
          %3139 = vmatpush1.bf16.xpose.msra.mxu0 0
          %3140 = vmatprep.subr.bf16.mxu0 0
          %3141 = vmatpush1.bf16.xpose.msra.mxu0 0
          %3142 = vmatprep.subr.bf16.mxu0 0
          %3143 = vmatpush1.bf16.xpose.msra.mxu0 0
          %3144 = vmatprep.subr.bf16.mxu0 0
          %3145 = vmatpush1.bf16.xpose.msra.mxu0 0
          %3146 = vmatprep.subr.bf16.mxu0 0
          %3147 = vmatpush1.bf16.xpose.msra.mxu0 0
          %3148 = vmatprep.subr.bf16.mxu0 0
          %3149 = vmatpush1.bf16.xpose.msra.mxu0 0
          %3150 = vmatprep.subr.bf16.mxu0 0
          %3151 = vmatpush1.bf16.xpose.msra.mxu0 0
          %3152 = vmatprep.subr.bf16.mxu0 0
          %3153 = vmatpush1.bf16.xpose.msra.mxu0 0
          %3154 = vmatprep.subr.bf16.mxu0 0
          %3155 = vmatpush1.bf16.xpose.msra.mxu0 0
          %3156 = vmatprep.mubr.bf16.mxu0 0
          %3157 = vmatmul.mubr.bf16.gmra.mrb[0].mxu0 %v3101
          %v3158 = vpop.f32.mrb[0].mxu0
          %v3159 = vadd.f32 0.0, %v3158
          %v3160 = vpop.f32.mrb[0].mxu0
          %v3161 = vpop.f32.mrb[0].mxu0
          %v3162 = vadd.f32 0.0, %v3161
          %v3163 = vpop.f32.mrb[0].mxu0
          %3164 = vmatprep.mubr.bf16.mxu0 0
          %3165 = vmatmul.mubr.bf16.gmra.mrb[0].mxu0 %v3104
          %v3166 = vpop.f32.mrb[0].mxu0
          %v3167 = vadd.f32 0.0, %v3166
          %v3168 = vpop.f32.mrb[0].mxu0
          %v3169 = vpop.f32.mrb[0].mxu0
          %v3170 = vadd.f32 0.0, %v3169
          %v3171 = vpop.f32.mrb[0].mxu0
          %3172 = vmatprep.mubr.bf16.mxu0 0
          %3173 = vmatmul.mubr.bf16.gmra.mrb[0].mxu0 %v3107
          %v3174 = vpop.f32.mrb[0].mxu0
          %v3175 = vadd.f32 0.0, %v3174
          %v3176 = vpop.f32.mrb[0].mxu0
          %v3177 = vpop.f32.mrb[0].mxu0
          %v3178 = vadd.f32 0.0, %v3177
          %v3179 = vpop.f32.mrb[0].mxu0
          %3180 = vmatprep.mubr.bf16.mxu0 0
          %3181 = vmatmul.mubr.bf16.gmra.mrb[0].mxu0 %v3110
          %v3182 = vpop.f32.mrb[0].mxu0
          %v3183 = vadd.f32 0.0, %v3182
          %v3184 = vpop.f32.mrb[0].mxu0
          %v3185 = vpop.f32.mrb[0].mxu0
          %v3186 = vadd.f32 0.0, %v3185
          %v3187 = vpop.f32.mrb[0].mxu0
          %3188 = vdwg.mxu0
          %v3189 = vmul.f32 %v3159, 0.17677669
          %v3190 = vmul.f32 %v3162, 0.17677669
          %v3191 = vmul.f32 %v3167, 0.17677669
          %v3192 = vmul.f32 %v3170, 0.17677669
          %v3193 = vmul.f32 %v3175, 0.17677669
          %v3194 = vmul.f32 %v3178, 0.17677669
          %v3195 = vmul.f32 %v3183, 0.17677669
          %v3196 = vmul.f32 %v3186, 0.17677669
          %vm3197 = vcmask 523264
          %v3198 = vsel %vm3197, %v3189, -inf
          %3199 = vmax.xlane.f32.xlu0 %v3198
          %v3200 = vpop.xlane.xlu0 %3199
          %v3201 = vsel %vm3197, %v3190, -inf
          %3202 = vmax.xlane.f32.xlu0 %v3201
          %v3203 = vpop.xlane.xlu0 %3202
          %v3204 = vsel %vm3197, %v3191, -inf
          %3205 = vmax.xlane.f32.xlu0 %v3204
          %v3206 = vpop.xlane.xlu0 %3205
          %v3207 = vsel %vm3197, %v3192, -inf
          %3208 = vmax.xlane.f32.xlu0 %v3207
          %v3209 = vpop.xlane.xlu0 %3208
          %v3210 = vsel %vm3197, %v3193, -inf
          %3211 = vmax.xlane.f32.xlu0 %v3210
          %v3212 = vpop.xlane.xlu0 %3211
          %v3213 = vsel %vm3197, %v3194, -inf
          %3214 = vmax.xlane.f32.xlu0 %v3213
          %v3215 = vpop.xlane.xlu0 %3214
          %v3216 = vsel %vm3197, %v3195, -inf
          %3217 = vmax.xlane.f32.xlu0 %v3216
          %v3218 = vpop.xlane.xlu0 %3217
          %v3219 = vsel %vm3197, %v3196, -inf
          %3220 = vmax.xlane.f32.xlu0 %v3219
          %v3221 = vpop.xlane.xlu0 %3220
          %v3222 = vsub.f32 %v3189, %v3200
          %v3223 = vsub.f32 %v3190, %v3203
          %v3224 = vsub.f32 %v3191, %v3206
          %v3225 = vsub.f32 %v3192, %v3209
          %v3226 = vsub.f32 %v3193, %v3212
          %v3227 = vsub.f32 %v3194, %v3215
          %v3228 = vsub.f32 %v3195, %v3218
          %v3229 = vsub.f32 %v3196, %v3221
          %v3230 = vmul.f32 %v3222, 1.442695
          %v3231 = vpow.pop %v3230
          %v3232 = vmul.f32 %v3223, 1.442695
          %v3233 = vpow.pop %v3232
          %v3234 = vmul.f32 %v3224, 1.442695
          %v3235 = vpow.pop %v3234
          %v3236 = vmul.f32 %v3225, 1.442695
          %v3237 = vpow.pop %v3236
          %v3238 = vmul.f32 %v3226, 1.442695
          %v3239 = vpow.pop %v3238
          %v3240 = vmul.f32 %v3227, 1.442695
          %v3241 = vpow.pop %v3240
          %v3242 = vmul.f32 %v3228, 1.442695
          %v3243 = vpow.pop %v3242
          %v3244 = vmul.f32 %v3229, 1.442695
          %v3245 = vpow.pop %v3244
          %v3246 = vsel %vm3197, %v3231, 0.0
          %3247 = vadd.xlane.f32.xlu0 %v3246
          %v3248 = vpop.xlane.xlu0 %3247
          %v3249 = vsel %vm3197, %v3233, 0.0
          %3250 = vadd.xlane.f32.xlu0 %v3249
          %v3251 = vpop.xlane.xlu0 %3250
          %v3252 = vsel %vm3197, %v3235, 0.0
          %3253 = vadd.xlane.f32.xlu0 %v3252
          %v3254 = vpop.xlane.xlu0 %3253
          %v3255 = vsel %vm3197, %v3237, 0.0
          %3256 = vadd.xlane.f32.xlu0 %v3255
          %v3257 = vpop.xlane.xlu0 %3256
          %v3258 = vsel %vm3197, %v3239, 0.0
          %3259 = vadd.xlane.f32.xlu0 %v3258
          %v3260 = vpop.xlane.xlu0 %3259
          %v3261 = vsel %vm3197, %v3241, 0.0
          %3262 = vadd.xlane.f32.xlu0 %v3261
          %v3263 = vpop.xlane.xlu0 %3262
          %v3264 = vsel %vm3197, %v3243, 0.0
          %3265 = vadd.xlane.f32.xlu0 %v3264
          %v3266 = vpop.xlane.xlu0 %3265
          %v3267 = vsel %vm3197, %v3245, 0.0
          %3268 = vadd.xlane.f32.xlu0 %v3267
          %v3269 = vpop.xlane.xlu0 %3268
          %v3270 = vrcp.pop %v3248
          %v3271 = vrcp.pop %v3251
          %v3272 = vrcp.pop %v3254
          %v3273 = vrcp.pop %v3257
          %v3274 = vrcp.pop %v3260
          %v3275 = vrcp.pop %v3263
          %v3276 = vrcp.pop %v3266
          %v3277 = vrcp.pop %v3269
          %v3278 = vmul.f32 %v3231, %v3270
          %v3279 = vmul.f32 %v3233, %v3271
          %v3280 = vmul.f32 %v3235, %v3272
          %v3281 = vmul.f32 %v3237, %v3273
          %v3282 = vmul.f32 %v3239, %v3274
          %v3283 = vmul.f32 %v3241, %v3275
          %v3284 = vmul.f32 %v3243, %v3276
          %v3285 = vmul.f32 %v3245, %v3277
          %v3286 = vpack.c.bf16 %v3279, %v3278
          %v3287 = vpack.c.bf16 %v3281, %v3280
          %v3288 = vpack.c.bf16 %v3283, %v3282
          %v3289 = vpack.c.bf16 %v3285, %v3284
          %v3291 = vsel %vm3197, %v3286, 0
          %v3294 = vsel %vm3197, %v3287, 0
          %v3297 = vsel %vm3197, %v3288, 0
          %v3300 = vsel %vm3197, %v3289, 0
          %3302 = vmatprep.subr.bf16.mxu0 0
          %3303 = vmatpush1.bf16.msra.mxu0 %v3095
          %3304 = vmatprep.subr.bf16.mxu0 0
          %3305 = vmatpush1.bf16.msra.mxu0 %v3096
          %3306 = vmatprep.subr.bf16.mxu0 0
          %3307 = vmatpush1.bf16.msra.mxu0 %v3097
          %3308 = vmatprep.subr.bf16.mxu0 0
          %3309 = vmatpush1.bf16.msra.mxu0 %v3098
          %3310 = vmatprep.subr.bf16.mxu0 0
          %3311 = vmatpush1.bf16.msra.mxu0 0
          %3312 = vmatprep.subr.bf16.mxu0 0
          %3313 = vmatpush1.bf16.msra.mxu0 0
          %3314 = vmatprep.subr.bf16.mxu0 0
          %3315 = vmatpush1.bf16.msra.mxu0 0
          %3316 = vmatprep.subr.bf16.mxu0 0
          %3317 = vmatpush1.bf16.msra.mxu0 0
          %3318 = vmatprep.subr.bf16.mxu0 0
          %3319 = vmatpush1.bf16.msra.mxu0 0
          %3320 = vmatprep.subr.bf16.mxu0 0
          %3321 = vmatpush1.bf16.msra.mxu0 0
          %3322 = vmatprep.subr.bf16.mxu0 0
          %3323 = vmatpush1.bf16.msra.mxu0 0
          %3324 = vmatprep.subr.bf16.mxu0 0
          %3325 = vmatpush1.bf16.msra.mxu0 0
          %3326 = vmatprep.subr.bf16.mxu0 0
          %3327 = vmatpush1.bf16.msra.mxu0 0
          %3328 = vmatprep.subr.bf16.mxu0 0
          %3329 = vmatpush1.bf16.msra.mxu0 0
          %3330 = vmatprep.subr.bf16.mxu0 0
          %3331 = vmatpush1.bf16.msra.mxu0 0
          %3332 = vmatprep.subr.bf16.mxu0 0
          %3333 = vmatpush1.bf16.msra.mxu0 0
          %3334 = vmatprep.mubr.bf16.mxu0 0
          %3335 = vmatmul.mubr.bf16.gmra.mrb[0].mxu0 %v3291
          %v3336 = vpop.f32.mrb[0].mxu0
          %v3337 = vadd.f32 0.0, %v3336
          %v3338 = vpop.f32.mrb[0].mxu0
          %v3339 = vpop.f32.mrb[0].mxu0
          %v3340 = vadd.f32 0.0, %v3339
          %v3341 = vpop.f32.mrb[0].mxu0
          %3342 = vmatprep.mubr.bf16.mxu0 0
          %3343 = vmatmul.mubr.bf16.gmra.mrb[0].mxu0 %v3294
          %v3344 = vpop.f32.mrb[0].mxu0
          %v3345 = vadd.f32 0.0, %v3344
          %v3346 = vpop.f32.mrb[0].mxu0
          %v3347 = vpop.f32.mrb[0].mxu0
          %v3348 = vadd.f32 0.0, %v3347
          %v3349 = vpop.f32.mrb[0].mxu0
          %3350 = vmatprep.mubr.bf16.mxu0 0
          %3351 = vmatmul.mubr.bf16.gmra.mrb[0].mxu0 %v3297
          %v3352 = vpop.f32.mrb[0].mxu0
          %v3353 = vadd.f32 0.0, %v3352
          %v3354 = vpop.f32.mrb[0].mxu0
          %v3355 = vpop.f32.mrb[0].mxu0
          %v3356 = vadd.f32 0.0, %v3355
          %v3357 = vpop.f32.mrb[0].mxu0
          %3358 = vmatprep.mubr.bf16.mxu0 0
          %3359 = vmatmul.mubr.bf16.gmra.mrb[0].mxu0 %v3300
          %v3360 = vpop.f32.mrb[0].mxu0
          %v3361 = vadd.f32 0.0, %v3360
          %v3362 = vpop.f32.mrb[0].mxu0
          %v3363 = vpop.f32.mrb[0].mxu0
          %v3364 = vadd.f32 0.0, %v3363
          %v3365 = vpop.f32.mrb[0].mxu0
          %3366 = vdwg.mxu0
          %3367 = vst.msk [vmem:[#allocation2] sm:$0xff] %vm3099, %v3337
          %3368 = vst.msk [vmem:[#allocation2 + $0x8] sm:$0xff] %vm3099, %v3340
          %3369 = vst.msk [vmem:[#allocation2 + $0x10] sm:$0xff] %vm3099, %v3345
          %3370 = vst.msk [vmem:[#allocation2 + $0x18] sm:$0xff] %vm3099, %v3348
          %3371 = vst.msk [vmem:[#allocation2 + $0x20] sm:$0xff] %vm3099, %v3353
          %3372 = vst.msk [vmem:[#allocation2 + $0x28] sm:$0xff] %vm3099, %v3356
          %3373 = vst.msk [vmem:[#allocation2 + $0x30] sm:$0xff] %vm3099, %v3361
          %3374 = vst.msk [vmem:[#allocation2 + $0x38] sm:$0xff] %vm3099, %v3364
          %3379 = vrot.lane.b32.xlu0 %v3087, 96
          %v3380 = vpop.permute.xlu0 %3379
          %3381 = vrot.lane.b32.xlu0 %v3088, 96
          %v3382 = vpop.permute.xlu0 %3381
          %3383 = vrot.lane.b32.xlu0 %v3089, 96
          %v3384 = vpop.permute.xlu0 %3383
          %3385 = vrot.lane.b32.xlu0 %v3090, 96
          %v3386 = vpop.permute.xlu0 %3385
          %3391 = vrot.lane.b32.xlu0 %v3091, 96
          %v3392 = vpop.permute.xlu0 %3391
          %3393 = vrot.lane.b32.xlu0 %v3092, 96
          %v3394 = vpop.permute.xlu0 %3393
          %3395 = vrot.lane.b32.xlu0 %v3093, 96
          %v3396 = vpop.permute.xlu0 %3395
          %3397 = vrot.lane.b32.xlu0 %v3094, 96
          %v3398 = vpop.permute.xlu0 %3397
          %v3400 = vsel %vm3099, %v3380, 0
          %v3403 = vsel %vm3099, %v3382, 0
          %v3406 = vsel %vm3099, %v3384, 0
          %v3409 = vsel %vm3099, %v3386, 0
          %v3412 = vsel %vm3099, %v3392, 0
          %v3415 = vsel %vm3099, %v3394, 0
          %v3418 = vsel %vm3099, %v3396, 0
          %v3421 = vsel %vm3099, %v3398, 0
          %3423 = vmatprep.subr.bf16.mxu0 0
          %3424 = vmatpush1.bf16.xpose.msra.mxu0 %v3412
          %3425 = vmatprep.subr.bf16.mxu0 0
          %3426 = vmatpush1.bf16.xpose.msra.mxu0 %v3415
          %3427 = vmatprep.subr.bf16.mxu0 0
          %3428 = vmatpush1.bf16.xpose.msra.mxu0 %v3418
          %3429 = vmatprep.subr.bf16.mxu0 0
          %3430 = vmatpush1.bf16.xpose.msra.mxu0 %v3421
          %3431 = vmatprep.subr.bf16.mxu0 0
          %3432 = vmatpush1.bf16.xpose.msra.mxu0 0
          %3433 = vmatprep.subr.bf16.mxu0 0
          %3434 = vmatpush1.bf16.xpose.msra.mxu0 0
          %3435 = vmatprep.subr.bf16.mxu0 0
          %3436 = vmatpush1.bf16.xpose.msra.mxu0 0
          %3437 = vmatprep.subr.bf16.mxu0 0
          %3438 = vmatpush1.bf16.xpose.msra.mxu0 0
          %3439 = vmatprep.subr.bf16.mxu0 0
          %3440 = vmatpush1.bf16.xpose.msra.mxu0 0
          %3441 = vmatprep.subr.bf16.mxu0 0
          %3442 = vmatpush1.bf16.xpose.msra.mxu0 0
          %3443 = vmatprep.subr.bf16.mxu0 0
          %3444 = vmatpush1.bf16.xpose.msra.mxu0 0
          %3445 = vmatprep.subr.bf16.mxu0 0
          %3446 = vmatpush1.bf16.xpose.msra.mxu0 0
          %3447 = vmatprep.subr.bf16.mxu0 0
          %3448 = vmatpush1.bf16.xpose.msra.mxu0 0
          %3449 = vmatprep.subr.bf16.mxu0 0
          %3450 = vmatpush1.bf16.xpose.msra.mxu0 0
          %3451 = vmatprep.subr.bf16.mxu0 0
          %3452 = vmatpush1.bf16.xpose.msra.mxu0 0
          %3453 = vmatprep.subr.bf16.mxu0 0
          %3454 = vmatpush1.bf16.xpose.msra.mxu0 0
          %3455 = vmatprep.mubr.bf16.mxu0 0
          %3456 = vmatmul.mubr.bf16.gmra.mrb[0].mxu0 %v3400
          %v3457 = vpop.f32.mrb[0].mxu0
          %v3458 = vadd.f32 0.0, %v3457
          %v3459 = vpop.f32.mrb[0].mxu0
          %v3460 = vpop.f32.mrb[0].mxu0
          %v3461 = vadd.f32 0.0, %v3460
          %v3462 = vpop.f32.mrb[0].mxu0
          %3463 = vmatprep.mubr.bf16.mxu0 0
          %3464 = vmatmul.mubr.bf16.gmra.mrb[0].mxu0 %v3403
          %v3465 = vpop.f32.mrb[0].mxu0
          %v3466 = vadd.f32 0.0, %v3465
          %v3467 = vpop.f32.mrb[0].mxu0
          %v3468 = vpop.f32.mrb[0].mxu0
          %v3469 = vadd.f32 0.0, %v3468
          %v3470 = vpop.f32.mrb[0].mxu0
          %3471 = vmatprep.mubr.bf16.mxu0 0
          %3472 = vmatmul.mubr.bf16.gmra.mrb[0].mxu0 %v3406
          %v3473 = vpop.f32.mrb[0].mxu0
          %v3474 = vadd.f32 0.0, %v3473
          %v3475 = vpop.f32.mrb[0].mxu0
          %v3476 = vpop.f32.mrb[0].mxu0
          %v3477 = vadd.f32 0.0, %v3476
          %v3478 = vpop.f32.mrb[0].mxu0
          %3479 = vmatprep.mubr.bf16.mxu0 0
          %3480 = vmatmul.mubr.bf16.gmra.mrb[0].mxu0 %v3409
          %v3481 = vpop.f32.mrb[0].mxu0
          %v3482 = vadd.f32 0.0, %v3481
          %v3483 = vpop.f32.mrb[0].mxu0
          %v3484 = vpop.f32.mrb[0].mxu0
          %v3485 = vadd.f32 0.0, %v3484
          %v3486 = vpop.f32.mrb[0].mxu0
          %3487 = vdwg.mxu0
          %v3488 = vmul.f32 %v3458, 0.17677669
          %v3489 = vmul.f32 %v3461, 0.17677669
          %v3490 = vmul.f32 %v3466, 0.17677669
          %v3491 = vmul.f32 %v3469, 0.17677669
          %v3492 = vmul.f32 %v3474, 0.17677669
          %v3493 = vmul.f32 %v3477, 0.17677669
          %v3494 = vmul.f32 %v3482, 0.17677669
          %v3495 = vmul.f32 %v3485, 0.17677669
          %v3496 = vsel %vm3197, %v3488, -inf
          %3497 = vmax.xlane.f32.xlu0 %v3496
          %v3498 = vpop.xlane.xlu0 %3497
          %v3499 = vsel %vm3197, %v3489, -inf
          %3500 = vmax.xlane.f32.xlu0 %v3499
          %v3501 = vpop.xlane.xlu0 %3500
          %v3502 = vsel %vm3197, %v3490, -inf
          %3503 = vmax.xlane.f32.xlu0 %v3502
          %v3504 = vpop.xlane.xlu0 %3503
          %v3505 = vsel %vm3197, %v3491, -inf
          %3506 = vmax.xlane.f32.xlu0 %v3505
          %v3507 = vpop.xlane.xlu0 %3506
          %v3508 = vsel %vm3197, %v3492, -inf
          %3509 = vmax.xlane.f32.xlu0 %v3508
          %v3510 = vpop.xlane.xlu0 %3509
          %v3511 = vsel %vm3197, %v3493, -inf
          %3512 = vmax.xlane.f32.xlu0 %v3511
          %v3513 = vpop.xlane.xlu0 %3512
          %v3514 = vsel %vm3197, %v3494, -inf
          %3515 = vmax.xlane.f32.xlu0 %v3514
          %v3516 = vpop.xlane.xlu0 %3515
          %v3517 = vsel %vm3197, %v3495, -inf
          %3518 = vmax.xlane.f32.xlu0 %v3517
          %v3519 = vpop.xlane.xlu0 %3518
          %v3520 = vsub.f32 %v3488, %v3498
          %v3521 = vsub.f32 %v3489, %v3501
          %v3522 = vsub.f32 %v3490, %v3504
          %v3523 = vsub.f32 %v3491, %v3507
          %v3524 = vsub.f32 %v3492, %v3510
          %v3525 = vsub.f32 %v3493, %v3513
          %v3526 = vsub.f32 %v3494, %v3516
          %v3527 = vsub.f32 %v3495, %v3519
          %v3528 = vmul.f32 %v3520, 1.442695
          %v3529 = vpow.pop %v3528
          %v3530 = vmul.f32 %v3521, 1.442695
          %v3531 = vpow.pop %v3530
          %v3532 = vmul.f32 %v3522, 1.442695
          %v3533 = vpow.pop %v3532
          %v3534 = vmul.f32 %v3523, 1.442695
          %v3535 = vpow.pop %v3534
          %v3536 = vmul.f32 %v3524, 1.442695
          %v3537 = vpow.pop %v3536
          %v3538 = vmul.f32 %v3525, 1.442695
          %v3539 = vpow.pop %v3538
          %v3540 = vmul.f32 %v3526, 1.442695
          %v3541 = vpow.pop %v3540
          %v3542 = vmul.f32 %v3527, 1.442695
          %v3543 = vpow.pop %v3542
          %v3544 = vsel %vm3197, %v3529, 0.0
          %3545 = vadd.xlane.f32.xlu0 %v3544
          %v3546 = vpop.xlane.xlu0 %3545
          %v3547 = vsel %vm3197, %v3531, 0.0
          %3548 = vadd.xlane.f32.xlu0 %v3547
          %v3549 = vpop.xlane.xlu0 %3548
          %v3550 = vsel %vm3197, %v3533, 0.0
          %3551 = vadd.xlane.f32.xlu0 %v3550
          %v3552 = vpop.xlane.xlu0 %3551
          %v3553 = vsel %vm3197, %v3535, 0.0
          %3554 = vadd.xlane.f32.xlu0 %v3553
          %v3555 = vpop.xlane.xlu0 %3554
          %v3556 = vsel %vm3197, %v3537, 0.0
          %3557 = vadd.xlane.f32.xlu0 %v3556
          %v3558 = vpop.xlane.xlu0 %3557
          %v3559 = vsel %vm3197, %v3539, 0.0
          %3560 = vadd.xlane.f32.xlu0 %v3559
          %v3561 = vpop.xlane.xlu0 %3560
          %v3562 = vsel %vm3197, %v3541, 0.0
          %3563 = vadd.xlane.f32.xlu0 %v3562
          %v3564 = vpop.xlane.xlu0 %3563
          %v3565 = vsel %vm3197, %v3543, 0.0
          %3566 = vadd.xlane.f32.xlu0 %v3565
          %v3567 = vpop.xlane.xlu0 %3566
          %v3568 = vrcp.pop %v3546
          %v3569 = vrcp.pop %v3549
          %v3570 = vrcp.pop %v3552
          %v3571 = vrcp.pop %v3555
          %v3572 = vrcp.pop %v3558
          %v3573 = vrcp.pop %v3561
          %v3574 = vrcp.pop %v3564
          %v3575 = vrcp.pop %v3567
          %v3576 = vmul.f32 %v3529, %v3568
          %v3577 = vmul.f32 %v3531, %v3569
          %v3578 = vmul.f32 %v3533, %v3570
          %v3579 = vmul.f32 %v3535, %v3571
          %v3580 = vmul.f32 %v3537, %v3572
          %v3581 = vmul.f32 %v3539, %v3573
          %v3582 = vmul.f32 %v3541, %v3574
          %v3583 = vmul.f32 %v3543, %v3575
          %v3584 = vpack.c.bf16 %v3577, %v3576
          %v3585 = vpack.c.bf16 %v3579, %v3578
          %v3586 = vpack.c.bf16 %v3581, %v3580
          %v3587 = vpack.c.bf16 %v3583, %v3582
          %3592 = vrot.lane.b32.xlu0 %v3095, 96
          %v3593 = vpop.permute.xlu0 %3592
          %3594 = vrot.lane.b32.xlu0 %v3096, 96
          %v3595 = vpop.permute.xlu0 %3594
          %3596 = vrot.lane.b32.xlu0 %v3097, 96
          %v3597 = vpop.permute.xlu0 %3596
          %3598 = vrot.lane.b32.xlu0 %v3098, 96
          %v3599 = vpop.permute.xlu0 %3598
          %v3605 = vsel %vm3197, %v3584, 0
          %v3608 = vsel %vm3197, %v3585, 0
          %v3611 = vsel %vm3197, %v3586, 0
          %v3614 = vsel %vm3197, %v3587, 0
          %3616 = vmatprep.subr.bf16.mxu0 0
          %3617 = vmatpush1.bf16.msra.mxu0 %v3593
          %3618 = vmatprep.subr.bf16.mxu0 0
          %3619 = vmatpush1.bf16.msra.mxu0 %v3595
          %3620 = vmatprep.subr.bf16.mxu0 0
          %3621 = vmatpush1.bf16.msra.mxu0 %v3597
          %3622 = vmatprep.subr.bf16.mxu0 0
          %3623 = vmatpush1.bf16.msra.mxu0 %v3599
          %3624 = vmatprep.subr.bf16.mxu0 0
          %3625 = vmatpush1.bf16.msra.mxu0 0
          %3626 = vmatprep.subr.bf16.mxu0 0
          %3627 = vmatpush1.bf16.msra.mxu0 0
          %3628 = vmatprep.subr.bf16.mxu0 0
          %3629 = vmatpush1.bf16.msra.mxu0 0
          %3630 = vmatprep.subr.bf16.mxu0 0
          %3631 = vmatpush1.bf16.msra.mxu0 0
          %3632 = vmatprep.subr.bf16.mxu0 0
          %3633 = vmatpush1.bf16.msra.mxu0 0
          %3634 = vmatprep.subr.bf16.mxu0 0
          %3635 = vmatpush1.bf16.msra.mxu0 0
          %3636 = vmatprep.subr.bf16.mxu0 0
          %3637 = vmatpush1.bf16.msra.mxu0 0
          %3638 = vmatprep.subr.bf16.mxu0 0
          %3639 = vmatpush1.bf16.msra.mxu0 0
          %3640 = vmatprep.subr.bf16.mxu0 0
          %3641 = vmatpush1.bf16.msra.mxu0 0
          %3642 = vmatprep.subr.bf16.mxu0 0
          %3643 = vmatpush1.bf16.msra.mxu0 0
          %3644 = vmatprep.subr.bf16.mxu0 0
          %3645 = vmatpush1.bf16.msra.mxu0 0
          %3646 = vmatprep.subr.bf16.mxu0 0
          %3647 = vmatpush1.bf16.msra.mxu0 0
          %3648 = vmatprep.mubr.bf16.mxu0 0
          %3649 = vmatmul.mubr.bf16.gmra.mrb[0].mxu0 %v3605
          %v3650 = vpop.f32.mrb[0].mxu0
          %v3651 = vadd.f32 0.0, %v3650
          %v3652 = vpop.f32.mrb[0].mxu0
          %v3653 = vpop.f32.mrb[0].mxu0
          %v3654 = vadd.f32 0.0, %v3653
          %v3655 = vpop.f32.mrb[0].mxu0
          %3656 = vmatprep.mubr.bf16.mxu0 0
          %3657 = vmatmul.mubr.bf16.gmra.mrb[0].mxu0 %v3608
          %v3658 = vpop.f32.mrb[0].mxu0
          %v3659 = vadd.f32 0.0, %v3658
          %v3660 = vpop.f32.mrb[0].mxu0
          %v3661 = vpop.f32.mrb[0].mxu0
          %v3662 = vadd.f32 0.0, %v3661
          %v3663 = vpop.f32.mrb[0].mxu0
          %3664 = vmatprep.mubr.bf16.mxu0 0
          %3665 = vmatmul.mubr.bf16.gmra.mrb[0].mxu0 %v3611
          %v3666 = vpop.f32.mrb[0].mxu0
          %v3667 = vadd.f32 0.0, %v3666
          %v3668 = vpop.f32.mrb[0].mxu0
          %v3669 = vpop.f32.mrb[0].mxu0
          %v3670 = vadd.f32 0.0, %v3669
          %v3671 = vpop.f32.mrb[0].mxu0
          %3672 = vmatprep.mubr.bf16.mxu0 0
          %3673 = vmatmul.mubr.bf16.gmra.mrb[0].mxu0 %v3614
          %v3674 = vpop.f32.mrb[0].mxu0
          %v3675 = vadd.f32 0.0, %v3674
          %v3676 = vpop.f32.mrb[0].mxu0
          %v3677 = vpop.f32.mrb[0].mxu0
          %v3678 = vadd.f32 0.0, %v3677
          %v3679 = vpop.f32.mrb[0].mxu0
          %3680 = vdwg.mxu0
          %3689 = vrot.lane.b32.xlu0 %v3651, 32
          %v3690 = vpop.permute.xlu0 %3689
          %3691 = vrot.lane.b32.xlu0 %v3654, 32
          %v3692 = vpop.permute.xlu0 %3691
          %3693 = vrot.lane.b32.xlu0 %v3659, 32
          %v3694 = vpop.permute.xlu0 %3693
          %3695 = vrot.lane.b32.xlu0 %v3662, 32
          %v3696 = vpop.permute.xlu0 %3695
          %3697 = vrot.lane.b32.xlu0 %v3667, 32
          %v3698 = vpop.permute.xlu0 %3697
          %3699 = vrot.lane.b32.xlu0 %v3670, 32
          %v3700 = vpop.permute.xlu0 %3699
          %3701 = vrot.lane.b32.xlu0 %v3675, 32
          %v3702 = vpop.permute.xlu0 %3701
          %3703 = vrot.lane.b32.xlu0 %v3678, 32
          %v3704 = vpop.permute.xlu0 %3703
          %vm3713 = vcmask 523520
          %3714 = vst.msk [vmem:[#allocation2] sm:$0xff] %vm3713, %v3690
          %3715 = vst.msk [vmem:[#allocation2 + $0x8] sm:$0xff] %vm3713, %v3692
          %3716 = vst.msk [vmem:[#allocation2 + $0x10] sm:$0xff] %vm3713, %v3694
          %3717 = vst.msk [vmem:[#allocation2 + $0x18] sm:$0xff] %vm3713, %v3696
          %3718 = vst.msk [vmem:[#allocation2 + $0x20] sm:$0xff] %vm3713, %v3698
          %3719 = vst.msk [vmem:[#allocation2 + $0x28] sm:$0xff] %vm3713, %v3700
          %3720 = vst.msk [vmem:[#allocation2 + $0x30] sm:$0xff] %vm3713, %v3702
          %3721 = vst.msk [vmem:[#allocation2 + $0x38] sm:$0xff] %vm3713, %v3704
          %3722 = vrot.lane.b32.xlu0 %v3087, 64
          %v3723 = vpop.permute.xlu0 %3722
          %3724 = vrot.lane.b32.xlu0 %v3088, 64
          %v3725 = vpop.permute.xlu0 %3724
          %3726 = vrot.lane.b32.xlu0 %v3089, 64
          %v3727 = vpop.permute.xlu0 %3726
          %3728 = vrot.lane.b32.xlu0 %v3090, 64
          %v3729 = vpop.permute.xlu0 %3728
          %3730 = vrot.lane.b32.xlu0 %v3091, 64
          %v3731 = vpop.permute.xlu0 %3730
          %3732 = vrot.lane.b32.xlu0 %v3092, 64
          %v3733 = vpop.permute.xlu0 %3732
          %3734 = vrot.lane.b32.xlu0 %v3093, 64
          %v3735 = vpop.permute.xlu0 %3734
          %3736 = vrot.lane.b32.xlu0 %v3094, 64
          %v3737 = vpop.permute.xlu0 %3736
          %v3739 = vsel %vm3099, %v3723, 0
          %v3742 = vsel %vm3099, %v3725, 0
          %v3745 = vsel %vm3099, %v3727, 0
          %v3748 = vsel %vm3099, %v3729, 0
          %v3751 = vsel %vm3099, %v3731, 0
          %v3754 = vsel %vm3099, %v3733, 0
          %v3757 = vsel %vm3099, %v3735, 0
          %v3760 = vsel %vm3099, %v3737, 0
          %3762 = vmatprep.subr.bf16.mxu0 0
          %3763 = vmatpush1.bf16.xpose.msra.mxu0 %v3751
          %3764 = vmatprep.subr.bf16.mxu0 0
          %3765 = vmatpush1.bf16.xpose.msra.mxu0 %v3754
          %3766 = vmatprep.subr.bf16.mxu0 0
          %3767 = vmatpush1.bf16.xpose.msra.mxu0 %v3757
          %3768 = vmatprep.subr.bf16.mxu0 0
          %3769 = vmatpush1.bf16.xpose.msra.mxu0 %v3760
          %3770 = vmatprep.subr.bf16.mxu0 0
          %3771 = vmatpush1.bf16.xpose.msra.mxu0 0
          %3772 = vmatprep.subr.bf16.mxu0 0
          %3773 = vmatpush1.bf16.xpose.msra.mxu0 0
          %3774 = vmatprep.subr.bf16.mxu0 0
          %3775 = vmatpush1.bf16.xpose.msra.mxu0 0
          %3776 = vmatprep.subr.bf16.mxu0 0
          %3777 = vmatpush1.bf16.xpose.msra.mxu0 0
          %3778 = vmatprep.subr.bf16.mxu0 0
          %3779 = vmatpush1.bf16.xpose.msra.mxu0 0
          %3780 = vmatprep.subr.bf16.mxu0 0
          %3781 = vmatpush1.bf16.xpose.msra.mxu0 0
          %3782 = vmatprep.subr.bf16.mxu0 0
          %3783 = vmatpush1.bf16.xpose.msra.mxu0 0
          %3784 = vmatprep.subr.bf16.mxu0 0
          %3785 = vmatpush1.bf16.xpose.msra.mxu0 0
          %3786 = vmatprep.subr.bf16.mxu0 0
          %3787 = vmatpush1.bf16.xpose.msra.mxu0 0
          %3788 = vmatprep.subr.bf16.mxu0 0
          %3789 = vmatpush1.bf16.xpose.msra.mxu0 0
          %3790 = vmatprep.subr.bf16.mxu0 0
          %3791 = vmatpush1.bf16.xpose.msra.mxu0 0
          %3792 = vmatprep.subr.bf16.mxu0 0
          %3793 = vmatpush1.bf16.xpose.msra.mxu0 0
          %3794 = vmatprep.mubr.bf16.mxu0 0
          %3795 = vmatmul.mubr.bf16.gmra.mrb[0].mxu0 %v3739
          %v3796 = vpop.f32.mrb[0].mxu0
          %v3797 = vadd.f32 0.0, %v3796
          %v3798 = vpop.f32.mrb[0].mxu0
          %v3799 = vpop.f32.mrb[0].mxu0
          %v3800 = vadd.f32 0.0, %v3799
          %v3801 = vpop.f32.mrb[0].mxu0
          %3802 = vmatprep.mubr.bf16.mxu0 0
          %3803 = vmatmul.mubr.bf16.gmra.mrb[0].mxu0 %v3742
          %v3804 = vpop.f32.mrb[0].mxu0
          %v3805 = vadd.f32 0.0, %v3804
          %v3806 = vpop.f32.mrb[0].mxu0
          %v3807 = vpop.f32.mrb[0].mxu0
          %v3808 = vadd.f32 0.0, %v3807
          %v3809 = vpop.f32.mrb[0].mxu0
          %3810 = vmatprep.mubr.bf16.mxu0 0
          %3811 = vmatmul.mubr.bf16.gmra.mrb[0].mxu0 %v3745
          %v3812 = vpop.f32.mrb[0].mxu0
          %v3813 = vadd.f32 0.0, %v3812
          %v3814 = vpop.f32.mrb[0].mxu0
          %v3815 = vpop.f32.mrb[0].mxu0
          %v3816 = vadd.f32 0.0, %v3815
          %v3817 = vpop.f32.mrb[0].mxu0
          %3818 = vmatprep.mubr.bf16.mxu0 0
          %3819 = vmatmul.mubr.bf16.gmra.mrb[0].mxu0 %v3748
          %v3820 = vpop.f32.mrb[0].mxu0
          %v3821 = vadd.f32 0.0, %v3820
          %v3822 = vpop.f32.mrb[0].mxu0
          %v3823 = vpop.f32.mrb[0].mxu0
          %v3824 = vadd.f32 0.0, %v3823
          %v3825 = vpop.f32.mrb[0].mxu0
          %3826 = vdwg.mxu0
          %v3827 = vmul.f32 %v3797, 0.17677669
          %v3828 = vmul.f32 %v3800, 0.17677669
          %v3829 = vmul.f32 %v3805, 0.17677669
          %v3830 = vmul.f32 %v3808, 0.17677669
          %v3831 = vmul.f32 %v3813, 0.17677669
          %v3832 = vmul.f32 %v3816, 0.17677669
          %v3833 = vmul.f32 %v3821, 0.17677669
          %v3834 = vmul.f32 %v3824, 0.17677669
          %v3835 = vsel %vm3197, %v3827, -inf
          %3836 = vmax.xlane.f32.xlu0 %v3835
          %v3837 = vpop.xlane.xlu0 %3836
          %v3838 = vsel %vm3197, %v3828, -inf
          %3839 = vmax.xlane.f32.xlu0 %v3838
          %v3840 = vpop.xlane.xlu0 %3839
          %v3841 = vsel %vm3197, %v3829, -inf
          %3842 = vmax.xlane.f32.xlu0 %v3841
          %v3843 = vpop.xlane.xlu0 %3842
          %v3844 = vsel %vm3197, %v3830, -inf
          %3845 = vmax.xlane.f32.xlu0 %v3844
          %v3846 = vpop.xlane.xlu0 %3845
          %v3847 = vsel %vm3197, %v3831, -inf
          %3848 = vmax.xlane.f32.xlu0 %v3847
          %v3849 = vpop.xlane.xlu0 %3848
          %v3850 = vsel %vm3197, %v3832, -inf
          %3851 = vmax.xlane.f32.xlu0 %v3850
          %v3852 = vpop.xlane.xlu0 %3851
          %v3853 = vsel %vm3197, %v3833, -inf
          %3854 = vmax.xlane.f32.xlu0 %v3853
          %v3855 = vpop.xlane.xlu0 %3854
          %v3856 = vsel %vm3197, %v3834, -inf
          %3857 = vmax.xlane.f32.xlu0 %v3856
          %v3858 = vpop.xlane.xlu0 %3857
          %v3859 = vsub.f32 %v3827, %v3837
          %v3860 = vsub.f32 %v3828, %v3840
          %v3861 = vsub.f32 %v3829, %v3843
          %v3862 = vsub.f32 %v3830, %v3846
          %v3863 = vsub.f32 %v3831, %v3849
          %v3864 = vsub.f32 %v3832, %v3852
          %v3865 = vsub.f32 %v3833, %v3855
          %v3866 = vsub.f32 %v3834, %v3858
          %v3867 = vmul.f32 %v3859, 1.442695
          %v3868 = vpow.pop %v3867
          %v3869 = vmul.f32 %v3860, 1.442695
          %v3870 = vpow.pop %v3869
          %v3871 = vmul.f32 %v3861, 1.442695
          %v3872 = vpow.pop %v3871
          %v3873 = vmul.f32 %v3862, 1.442695
          %v3874 = vpow.pop %v3873
          %v3875 = vmul.f32 %v3863, 1.442695
          %v3876 = vpow.pop %v3875
          %v3877 = vmul.f32 %v3864, 1.442695
          %v3878 = vpow.pop %v3877
          %v3879 = vmul.f32 %v3865, 1.442695
          %v3880 = vpow.pop %v3879
          %v3881 = vmul.f32 %v3866, 1.442695
          %v3882 = vpow.pop %v3881
          %v3883 = vsel %vm3197, %v3868, 0.0
          %3884 = vadd.xlane.f32.xlu0 %v3883
          %v3885 = vpop.xlane.xlu0 %3884
          %v3886 = vsel %vm3197, %v3870, 0.0
          %3887 = vadd.xlane.f32.xlu0 %v3886
          %v3888 = vpop.xlane.xlu0 %3887
          %v3889 = vsel %vm3197, %v3872, 0.0
          %3890 = vadd.xlane.f32.xlu0 %v3889
          %v3891 = vpop.xlane.xlu0 %3890
          %v3892 = vsel %vm3197, %v3874, 0.0
          %3893 = vadd.xlane.f32.xlu0 %v3892
          %v3894 = vpop.xlane.xlu0 %3893
          %v3895 = vsel %vm3197, %v3876, 0.0
          %3896 = vadd.xlane.f32.xlu0 %v3895
          %v3897 = vpop.xlane.xlu0 %3896
          %v3898 = vsel %vm3197, %v3878, 0.0
          %3899 = vadd.xlane.f32.xlu0 %v3898
          %v3900 = vpop.xlane.xlu0 %3899
          %v3901 = vsel %vm3197, %v3880, 0.0
          %3902 = vadd.xlane.f32.xlu0 %v3901
          %v3903 = vpop.xlane.xlu0 %3902
          %v3904 = vsel %vm3197, %v3882, 0.0
          %3905 = vadd.xlane.f32.xlu0 %v3904
          %v3906 = vpop.xlane.xlu0 %3905
          %v3907 = vrcp.pop %v3885
          %v3908 = vrcp.pop %v3888
          %v3909 = vrcp.pop %v3891
          %v3910 = vrcp.pop %v3894
          %v3911 = vrcp.pop %v3897
          %v3912 = vrcp.pop %v3900
          %v3913 = vrcp.pop %v3903
          %v3914 = vrcp.pop %v3906
          %v3915 = vmul.f32 %v3868, %v3907
          %v3916 = vmul.f32 %v3870, %v3908
          %v3917 = vmul.f32 %v3872, %v3909
          %v3918 = vmul.f32 %v3874, %v3910
          %v3919 = vmul.f32 %v3876, %v3911
          %v3920 = vmul.f32 %v3878, %v3912
          %v3921 = vmul.f32 %v3880, %v3913
          %v3922 = vmul.f32 %v3882, %v3914
          %v3923 = vpack.c.bf16 %v3916, %v3915
          %v3924 = vpack.c.bf16 %v3918, %v3917
          %v3925 = vpack.c.bf16 %v3920, %v3919
          %v3926 = vpack.c.bf16 %v3922, %v3921
          %3927 = vrot.lane.b32.xlu0 %v3095, 64
          %v3928 = vpop.permute.xlu0 %3927
          %3929 = vrot.lane.b32.xlu0 %v3096, 64
          %v3930 = vpop.permute.xlu0 %3929
          %3931 = vrot.lane.b32.xlu0 %v3097, 64
          %v3932 = vpop.permute.xlu0 %3931
          %3933 = vrot.lane.b32.xlu0 %v3098, 64
          %v3934 = vpop.permute.xlu0 %3933
          %v3940 = vsel %vm3197, %v3923, 0
          %v3943 = vsel %vm3197, %v3924, 0
          %v3946 = vsel %vm3197, %v3925, 0
          %v3949 = vsel %vm3197, %v3926, 0
          %3951 = vmatprep.subr.bf16.mxu0 0
          %3952 = vmatpush1.bf16.msra.mxu0 %v3928
          %3953 = vmatprep.subr.bf16.mxu0 0
          %3954 = vmatpush1.bf16.msra.mxu0 %v3930
          %3955 = vmatprep.subr.bf16.mxu0 0
          %3956 = vmatpush1.bf16.msra.mxu0 %v3932
          %3957 = vmatprep.subr.bf16.mxu0 0
          %3958 = vmatpush1.bf16.msra.mxu0 %v3934
          %3959 = vmatprep.subr.bf16.mxu0 0
          %3960 = vmatpush1.bf16.msra.mxu0 0
          %3961 = vmatprep.subr.bf16.mxu0 0
          %3962 = vmatpush1.bf16.msra.mxu0 0
          %3963 = vmatprep.subr.bf16.mxu0 0
          %3964 = vmatpush1.bf16.msra.mxu0 0
          %3965 = vmatprep.subr.bf16.mxu0 0
          %3966 = vmatpush1.bf16.msra.mxu0 0
          %3967 = vmatprep.subr.bf16.mxu0 0
          %3968 = vmatpush1.bf16.msra.mxu0 0
          %3969 = vmatprep.subr.bf16.mxu0 0
          %3970 = vmatpush1.bf16.msra.mxu0 0
          %3971 = vmatprep.subr.bf16.mxu0 0
          %3972 = vmatpush1.bf16.msra.mxu0 0
          %3973 = vmatprep.subr.bf16.mxu0 0
          %3974 = vmatpush1.bf16.msra.mxu0 0
          %3975 = vmatprep.subr.bf16.mxu0 0
          %3976 = vmatpush1.bf16.msra.mxu0 0
          %3977 = vmatprep.subr.bf16.mxu0 0
          %3978 = vmatpush1.bf16.msra.mxu0 0
          %3979 = vmatprep.subr.bf16.mxu0 0
          %3980 = vmatpush1.bf16.msra.mxu0 0
          %3981 = vmatprep.subr.bf16.mxu0 0
          %3982 = vmatpush1.bf16.msra.mxu0 0
          %3983 = vmatprep.mubr.bf16.mxu0 0
          %3984 = vmatmul.mubr.bf16.gmra.mrb[0].mxu0 %v3940
          %v3985 = vpop.f32.mrb[0].mxu0
          %v3986 = vadd.f32 0.0, %v3985
          %v3987 = vpop.f32.mrb[0].mxu0
          %v3988 = vpop.f32.mrb[0].mxu0
          %v3989 = vadd.f32 0.0, %v3988
          %v3990 = vpop.f32.mrb[0].mxu0
          %3991 = vmatprep.mubr.bf16.mxu0 0
          %3992 = vmatmul.mubr.bf16.gmra.mrb[0].mxu0 %v3943
          %v3993 = vpop.f32.mrb[0].mxu0
          %v3994 = vadd.f32 0.0, %v3993
          %v3995 = vpop.f32.mrb[0].mxu0
          %v3996 = vpop.f32.mrb[0].mxu0
          %v3997 = vadd.f32 0.0, %v3996
          %v3998 = vpop.f32.mrb[0].mxu0
          %3999 = vmatprep.mubr.bf16.mxu0 0
          %4000 = vmatmul.mubr.bf16.gmra.mrb[0].mxu0 %v3946
          %v4001 = vpop.f32.mrb[0].mxu0
          %v4002 = vadd.f32 0.0, %v4001
          %v4003 = vpop.f32.mrb[0].mxu0
          %v4004 = vpop.f32.mrb[0].mxu0
          %v4005 = vadd.f32 0.0, %v4004
          %v4006 = vpop.f32.mrb[0].mxu0
          %4007 = vmatprep.mubr.bf16.mxu0 0
          %4008 = vmatmul.mubr.bf16.gmra.mrb[0].mxu0 %v3949
          %v4009 = vpop.f32.mrb[0].mxu0
          %v4010 = vadd.f32 0.0, %v4009
          %v4011 = vpop.f32.mrb[0].mxu0
          %v4012 = vpop.f32.mrb[0].mxu0
          %v4013 = vadd.f32 0.0, %v4012
          %v4014 = vpop.f32.mrb[0].mxu0
          %4015 = vdwg.mxu0
          %4024 = vrot.lane.b32.xlu0 %v3986, 64
          %v4025 = vpop.permute.xlu0 %4024
          %4026 = vrot.lane.b32.xlu0 %v3989, 64
          %v4027 = vpop.permute.xlu0 %4026
          %4028 = vrot.lane.b32.xlu0 %v3994, 64
          %v4029 = vpop.permute.xlu0 %4028
          %4030 = vrot.lane.b32.xlu0 %v3997, 64
          %v4031 = vpop.permute.xlu0 %4030
          %4032 = vrot.lane.b32.xlu0 %v4002, 64
          %v4033 = vpop.permute.xlu0 %4032
          %4034 = vrot.lane.b32.xlu0 %v4005, 64
          %v4035 = vpop.permute.xlu0 %4034
          %4036 = vrot.lane.b32.xlu0 %v4010, 64
          %v4037 = vpop.permute.xlu0 %4036
          %4038 = vrot.lane.b32.xlu0 %v4013, 64
          %v4039 = vpop.permute.xlu0 %4038
          %vm4048 = vcmask 785920
          %4049 = vst.msk [vmem:[#allocation2] sm:$0xff] %vm4048, %v4025
          %4050 = vst.msk [vmem:[#allocation2 + $0x8] sm:$0xff] %vm4048, %v4027
          %4051 = vst.msk [vmem:[#allocation2 + $0x10] sm:$0xff] %vm4048, %v4029
          %4052 = vst.msk [vmem:[#allocation2 + $0x18] sm:$0xff] %vm4048, %v4031
          %4053 = vst.msk [vmem:[#allocation2 + $0x20] sm:$0xff] %vm4048, %v4033
          %4054 = vst.msk [vmem:[#allocation2 + $0x28] sm:$0xff] %vm4048, %v4035
          %4055 = vst.msk [vmem:[#allocation2 + $0x30] sm:$0xff] %vm4048, %v4037
          %4056 = vst.msk [vmem:[#allocation2 + $0x38] sm:$0xff] %vm4048, %v4039
          %4057 = vrot.lane.b32.xlu0 %v3087, 32
          %v4058 = vpop.permute.xlu0 %4057
          %4059 = vrot.lane.b32.xlu0 %v3088, 32
          %v4060 = vpop.permute.xlu0 %4059
          %4061 = vrot.lane.b32.xlu0 %v3089, 32
          %v4062 = vpop.permute.xlu0 %4061
          %4063 = vrot.lane.b32.xlu0 %v3090, 32
          %v4064 = vpop.permute.xlu0 %4063
          %4065 = vrot.lane.b32.xlu0 %v3091, 32
          %v4066 = vpop.permute.xlu0 %4065
          %4067 = vrot.lane.b32.xlu0 %v3092, 32
          %v4068 = vpop.permute.xlu0 %4067
          %4069 = vrot.lane.b32.xlu0 %v3093, 32
          %v4070 = vpop.permute.xlu0 %4069
          %4071 = vrot.lane.b32.xlu0 %v3094, 32
          %v4072 = vpop.permute.xlu0 %4071
          %v4074 = vsel %vm3099, %v4058, 0
          %v4077 = vsel %vm3099, %v4060, 0
          %v4080 = vsel %vm3099, %v4062, 0
          %v4083 = vsel %vm3099, %v4064, 0
          %v4086 = vsel %vm3099, %v4066, 0
          %v4089 = vsel %vm3099, %v4068, 0
          %v4092 = vsel %vm3099, %v4070, 0
          %v4095 = vsel %vm3099, %v4072, 0
          %4097 = vmatprep.subr.bf16.mxu0 0
          %4098 = vmatpush1.bf16.xpose.msra.mxu0 %v4086
          %4099 = vmatprep.subr.bf16.mxu0 0
          %4100 = vmatpush1.bf16.xpose.msra.mxu0 %v4089
          %4101 = vmatprep.subr.bf16.mxu0 0
          %4102 = vmatpush1.bf16.xpose.msra.mxu0 %v4092
          %4103 = vmatprep.subr.bf16.mxu0 0
          %4104 = vmatpush1.bf16.xpose.msra.mxu0 %v4095
          %4105 = vmatprep.subr.bf16.mxu0 0
          %4106 = vmatpush1.bf16.xpose.msra.mxu0 0
          %4107 = vmatprep.subr.bf16.mxu0 0
          %4108 = vmatpush1.bf16.xpose.msra.mxu0 0
          %4109 = vmatprep.subr.bf16.mxu0 0
          %4110 = vmatpush1.bf16.xpose.msra.mxu0 0
          %4111 = vmatprep.subr.bf16.mxu0 0
          %4112 = vmatpush1.bf16.xpose.msra.mxu0 0
          %4113 = vmatprep.subr.bf16.mxu0 0
          %4114 = vmatpush1.bf16.xpose.msra.mxu0 0
          %4115 = vmatprep.subr.bf16.mxu0 0
          %4116 = vmatpush1.bf16.xpose.msra.mxu0 0
          %4117 = vmatprep.subr.bf16.mxu0 0
          %4118 = vmatpush1.bf16.xpose.msra.mxu0 0
          %4119 = vmatprep.subr.bf16.mxu0 0
          %4120 = vmatpush1.bf16.xpose.msra.mxu0 0
          %4121 = vmatprep.subr.bf16.mxu0 0
          %4122 = vmatpush1.bf16.xpose.msra.mxu0 0
          %4123 = vmatprep.subr.bf16.mxu0 0
          %4124 = vmatpush1.bf16.xpose.msra.mxu0 0
          %4125 = vmatprep.subr.bf16.mxu0 0
          %4126 = vmatpush1.bf16.xpose.msra.mxu0 0
          %4127 = vmatprep.subr.bf16.mxu0 0
          %4128 = vmatpush1.bf16.xpose.msra.mxu0 0
          %4129 = vmatprep.mubr.bf16.mxu0 0
          %4130 = vmatmul.mubr.bf16.gmra.mrb[0].mxu0 %v4074
          %v4131 = vpop.f32.mrb[0].mxu0
          %v4132 = vadd.f32 0.0, %v4131
          %v4133 = vpop.f32.mrb[0].mxu0
          %v4134 = vpop.f32.mrb[0].mxu0
          %v4135 = vadd.f32 0.0, %v4134
          %v4136 = vpop.f32.mrb[0].mxu0
          %4137 = vmatprep.mubr.bf16.mxu0 0
          %4138 = vmatmul.mubr.bf16.gmra.mrb[0].mxu0 %v4077
          %v4139 = vpop.f32.mrb[0].mxu0
          %v4140 = vadd.f32 0.0, %v4139
          %v4141 = vpop.f32.mrb[0].mxu0
          %v4142 = vpop.f32.mrb[0].mxu0
          %v4143 = vadd.f32 0.0, %v4142
          %v4144 = vpop.f32.mrb[0].mxu0
          %4145 = vmatprep.mubr.bf16.mxu0 0
          %4146 = vmatmul.mubr.bf16.gmra.mrb[0].mxu0 %v4080
          %v4147 = vpop.f32.mrb[0].mxu0
          %v4148 = vadd.f32 0.0, %v4147
          %v4149 = vpop.f32.mrb[0].mxu0
          %v4150 = vpop.f32.mrb[0].mxu0
          %v4151 = vadd.f32 0.0, %v4150
          %v4152 = vpop.f32.mrb[0].mxu0
          %4153 = vmatprep.mubr.bf16.mxu0 0
          %4154 = vmatmul.mubr.bf16.gmra.mrb[0].mxu0 %v4083
          %v4155 = vpop.f32.mrb[0].mxu0
          %v4156 = vadd.f32 0.0, %v4155
          %v4157 = vpop.f32.mrb[0].mxu0
          %v4158 = vpop.f32.mrb[0].mxu0
          %v4159 = vadd.f32 0.0, %v4158
          %v4160 = vpop.f32.mrb[0].mxu0
          %4161 = vdwg.mxu0
          %v4162 = vmul.f32 %v4132, 0.17677669
          %v4163 = vmul.f32 %v4135, 0.17677669
          %v4164 = vmul.f32 %v4140, 0.17677669
          %v4165 = vmul.f32 %v4143, 0.17677669
          %v4166 = vmul.f32 %v4148, 0.17677669
          %v4167 = vmul.f32 %v4151, 0.17677669
          %v4168 = vmul.f32 %v4156, 0.17677669
          %v4169 = vmul.f32 %v4159, 0.17677669
          %v4170 = vsel %vm3197, %v4162, -inf
          %4171 = vmax.xlane.f32.xlu0 %v4170
          %v4172 = vpop.xlane.xlu0 %4171
          %v4173 = vsel %vm3197, %v4163, -inf
          %4174 = vmax.xlane.f32.xlu0 %v4173
          %v4175 = vpop.xlane.xlu0 %4174
          %v4176 = vsel %vm3197, %v4164, -inf
          %4177 = vmax.xlane.f32.xlu0 %v4176
          %v4178 = vpop.xlane.xlu0 %4177
          %v4179 = vsel %vm3197, %v4165, -inf
          %4180 = vmax.xlane.f32.xlu0 %v4179
          %v4181 = vpop.xlane.xlu0 %4180
          %v4182 = vsel %vm3197, %v4166, -inf
          %4183 = vmax.xlane.f32.xlu0 %v4182
          %v4184 = vpop.xlane.xlu0 %4183
          %v4185 = vsel %vm3197, %v4167, -inf
          %4186 = vmax.xlane.f32.xlu0 %v4185
          %v4187 = vpop.xlane.xlu0 %4186
          %v4188 = vsel %vm3197, %v4168, -inf
          %4189 = vmax.xlane.f32.xlu0 %v4188
          %v4190 = vpop.xlane.xlu0 %4189
          %v4191 = vsel %vm3197, %v4169, -inf
          %4192 = vmax.xlane.f32.xlu0 %v4191
          %v4193 = vpop.xlane.xlu0 %4192
          %v4194 = vsub.f32 %v4162, %v4172
          %v4195 = vsub.f32 %v4163, %v4175
          %v4196 = vsub.f32 %v4164, %v4178
          %v4197 = vsub.f32 %v4165, %v4181
          %v4198 = vsub.f32 %v4166, %v4184
          %v4199 = vsub.f32 %v4167, %v4187
          %v4200 = vsub.f32 %v4168, %v4190
          %v4201 = vsub.f32 %v4169, %v4193
          %v4202 = vmul.f32 %v4194, 1.442695
          %v4203 = vpow.pop %v4202
          %v4204 = vmul.f32 %v4195, 1.442695
          %v4205 = vpow.pop %v4204
          %v4206 = vmul.f32 %v4196, 1.442695
          %v4207 = vpow.pop %v4206
          %v4208 = vmul.f32 %v4197, 1.442695
          %v4209 = vpow.pop %v4208
          %v4210 = vmul.f32 %v4198, 1.442695
          %v4211 = vpow.pop %v4210
          %v4212 = vmul.f32 %v4199, 1.442695
          %v4213 = vpow.pop %v4212
          %v4214 = vmul.f32 %v4200, 1.442695
          %v4215 = vpow.pop %v4214
          %v4216 = vmul.f32 %v4201, 1.442695
          %v4217 = vpow.pop %v4216
          %v4218 = vsel %vm3197, %v4203, 0.0
          %4219 = vadd.xlane.f32.xlu0 %v4218
          %v4220 = vpop.xlane.xlu0 %4219
          %v4221 = vsel %vm3197, %v4205, 0.0
          %4222 = vadd.xlane.f32.xlu0 %v4221
          %v4223 = vpop.xlane.xlu0 %4222
          %v4224 = vsel %vm3197, %v4207, 0.0
          %4225 = vadd.xlane.f32.xlu0 %v4224
          %v4226 = vpop.xlane.xlu0 %4225
          %v4227 = vsel %vm3197, %v4209, 0.0
          %4228 = vadd.xlane.f32.xlu0 %v4227
          %v4229 = vpop.xlane.xlu0 %4228
          %v4230 = vsel %vm3197, %v4211, 0.0
          %4231 = vadd.xlane.f32.xlu0 %v4230
          %v4232 = vpop.xlane.xlu0 %4231
          %v4233 = vsel %vm3197, %v4213, 0.0
          %4234 = vadd.xlane.f32.xlu0 %v4233
          %v4235 = vpop.xlane.xlu0 %4234
          %v4236 = vsel %vm3197, %v4215, 0.0
          %4237 = vadd.xlane.f32.xlu0 %v4236
          %v4238 = vpop.xlane.xlu0 %4237
          %v4239 = vsel %vm3197, %v4217, 0.0
          %4240 = vadd.xlane.f32.xlu0 %v4239
          %v4241 = vpop.xlane.xlu0 %4240
          %v4242 = vrcp.pop %v4220
          %v4243 = vrcp.pop %v4223
          %v4244 = vrcp.pop %v4226
          %v4245 = vrcp.pop %v4229
          %v4246 = vrcp.pop %v4232
          %v4247 = vrcp.pop %v4235
          %v4248 = vrcp.pop %v4238
          %v4249 = vrcp.pop %v4241
          %v4250 = vmul.f32 %v4203, %v4242
          %v4251 = vmul.f32 %v4205, %v4243
          %v4252 = vmul.f32 %v4207, %v4244
          %v4253 = vmul.f32 %v4209, %v4245
          %v4254 = vmul.f32 %v4211, %v4246
          %v4255 = vmul.f32 %v4213, %v4247
          %v4256 = vmul.f32 %v4215, %v4248
          %v4257 = vmul.f32 %v4217, %v4249
          %v4258 = vpack.c.bf16 %v4251, %v4250
          %v4259 = vpack.c.bf16 %v4253, %v4252
          %v4260 = vpack.c.bf16 %v4255, %v4254
          %v4261 = vpack.c.bf16 %v4257, %v4256
          %4262 = vrot.lane.b32.xlu0 %v3095, 32
          %v4263 = vpop.permute.xlu0 %4262
          %4264 = vrot.lane.b32.xlu0 %v3096, 32
          %v4265 = vpop.permute.xlu0 %4264
          %4266 = vrot.lane.b32.xlu0 %v3097, 32
          %v4267 = vpop.permute.xlu0 %4266
          %4268 = vrot.lane.b32.xlu0 %v3098, 32
          %v4269 = vpop.permute.xlu0 %4268
          %v4275 = vsel %vm3197, %v4258, 0
          %v4278 = vsel %vm3197, %v4259, 0
          %v4281 = vsel %vm3197, %v4260, 0
          %v4284 = vsel %vm3197, %v4261, 0
          %4286 = vmatprep.subr.bf16.mxu0 0
          %4287 = vmatpush1.bf16.msra.mxu0 %v4263
          %4288 = vmatprep.subr.bf16.mxu0 0
          %4289 = vmatpush1.bf16.msra.mxu0 %v4265
          %4290 = vmatprep.subr.bf16.mxu0 0
          %4291 = vmatpush1.bf16.msra.mxu0 %v4267
          %4292 = vmatprep.subr.bf16.mxu0 0
          %4293 = vmatpush1.bf16.msra.mxu0 %v4269
          %4294 = vmatprep.subr.bf16.mxu0 0
          %4295 = vmatpush1.bf16.msra.mxu0 0
          %4296 = vmatprep.subr.bf16.mxu0 0
          %4297 = vmatpush1.bf16.msra.mxu0 0
          %4298 = vmatprep.subr.bf16.mxu0 0
          %4299 = vmatpush1.bf16.msra.mxu0 0
          %4300 = vmatprep.subr.bf16.mxu0 0
          %4301 = vmatpush1.bf16.msra.mxu0 0
          %4302 = vmatprep.subr.bf16.mxu0 0
          %4303 = vmatpush1.bf16.msra.mxu0 0
          %4304 = vmatprep.subr.bf16.mxu0 0
          %4305 = vmatpush1.bf16.msra.mxu0 0
          %4306 = vmatprep.subr.bf16.mxu0 0
          %4307 = vmatpush1.bf16.msra.mxu0 0
          %4308 = vmatprep.subr.bf16.mxu0 0
          %4309 = vmatpush1.bf16.msra.mxu0 0
          %4310 = vmatprep.subr.bf16.mxu0 0
          %4311 = vmatpush1.bf16.msra.mxu0 0
          %4312 = vmatprep.subr.bf16.mxu0 0
          %4313 = vmatpush1.bf16.msra.mxu0 0
          %4314 = vmatprep.subr.bf16.mxu0 0
          %4315 = vmatpush1.bf16.msra.mxu0 0
          %4316 = vmatprep.subr.bf16.mxu0 0
          %4317 = vmatpush1.bf16.msra.mxu0 0
          %4318 = vmatprep.mubr.bf16.mxu0 0
          %4319 = vmatmul.mubr.bf16.gmra.mrb[0].mxu0 %v4275
          %v4320 = vpop.f32.mrb[0].mxu0
          %v4321 = vadd.f32 0.0, %v4320
          %v4322 = vpop.f32.mrb[0].mxu0
          %v4323 = vpop.f32.mrb[0].mxu0
          %v4324 = vadd.f32 0.0, %v4323
          %v4325 = vpop.f32.mrb[0].mxu0
          %4326 = vmatprep.mubr.bf16.mxu0 0
          %4327 = vmatmul.mubr.bf16.gmra.mrb[0].mxu0 %v4278
          %v4328 = vpop.f32.mrb[0].mxu0
          %v4329 = vadd.f32 0.0, %v4328
          %v4330 = vpop.f32.mrb[0].mxu0
          %v4331 = vpop.f32.mrb[0].mxu0
          %v4332 = vadd.f32 0.0, %v4331
          %v4333 = vpop.f32.mrb[0].mxu0
          %4334 = vmatprep.mubr.bf16.mxu0 0
          %4335 = vmatmul.mubr.bf16.gmra.mrb[0].mxu0 %v4281
          %v4336 = vpop.f32.mrb[0].mxu0
          %v4337 = vadd.f32 0.0, %v4336
          %v4338 = vpop.f32.mrb[0].mxu0
          %v4339 = vpop.f32.mrb[0].mxu0
          %v4340 = vadd.f32 0.0, %v4339
          %v4341 = vpop.f32.mrb[0].mxu0
          %4342 = vmatprep.mubr.bf16.mxu0 0
          %4343 = vmatmul.mubr.bf16.gmra.mrb[0].mxu0 %v4284
          %v4344 = vpop.f32.mrb[0].mxu0
          %v4345 = vadd.f32 0.0, %v4344
          %v4346 = vpop.f32.mrb[0].mxu0
          %v4347 = vpop.f32.mrb[0].mxu0
          %v4348 = vadd.f32 0.0, %v4347
          %v4349 = vpop.f32.mrb[0].mxu0
          %4350 = vdwg.mxu0
          %4359 = vrot.lane.b32.xlu0 %v4321, 96
          %v4360 = vpop.permute.xlu0 %4359
          %4361 = vrot.lane.b32.xlu0 %v4324, 96
          %v4362 = vpop.permute.xlu0 %4361
          %4363 = vrot.lane.b32.xlu0 %v4329, 96
          %v4364 = vpop.permute.xlu0 %4363
          %4365 = vrot.lane.b32.xlu0 %v4332, 96
          %v4366 = vpop.permute.xlu0 %4365
          %4367 = vrot.lane.b32.xlu0 %v4337, 96
          %v4368 = vpop.permute.xlu0 %4367
          %4369 = vrot.lane.b32.xlu0 %v4340, 96
          %v4370 = vpop.permute.xlu0 %4369
          %4371 = vrot.lane.b32.xlu0 %v4345, 96
          %v4372 = vpop.permute.xlu0 %4371
          %4373 = vrot.lane.b32.xlu0 %v4348, 96
          %v4374 = vpop.permute.xlu0 %4373
          %vm4383 = vcmask 1048320
          %4384 = vst.msk [vmem:[#allocation2] sm:$0xff] %vm4383, %v4360
          %4385 = vst.msk [vmem:[#allocation2 + $0x8] sm:$0xff] %vm4383, %v4362
          %4386 = vst.msk [vmem:[#allocation2 + $0x10] sm:$0xff] %vm4383, %v4364
          %4387 = vst.msk [vmem:[#allocation2 + $0x18] sm:$0xff] %vm4383, %v4366
          %4388 = vst.msk [vmem:[#allocation2 + $0x20] sm:$0xff] %vm4383, %v4368
          %4389 = vst.msk [vmem:[#allocation2 + $0x28] sm:$0xff] %vm4383, %v4370
          %4390 = vst.msk [vmem:[#allocation2 + $0x30] sm:$0xff] %vm4383, %v4372
          %4391 = vst.msk [vmem:[#allocation2 + $0x38] sm:$0xff] %vm4383, %v4374
          %v4392 = vld [vmem:[#allocation2] sm:$0xff]
          %v4393 = vld [vmem:[#allocation2 + $0x8] sm:$0xff]
          %v4394 = vld [vmem:[#allocation2 + $0x10] sm:$0xff]
          %v4395 = vld [vmem:[#allocation2 + $0x18] sm:$0xff]
          %v4396 = vld [vmem:[#allocation2 + $0x20] sm:$0xff]
          %v4397 = vld [vmem:[#allocation2 + $0x28] sm:$0xff]
          %v4398 = vld [vmem:[#allocation2 + $0x30] sm:$0xff]
          %v4399 = vld [vmem:[#allocation2 + $0x38] sm:$0xff]
          %v4400 = vpack.c.bf16 %v4393, %v4392
          %v4401 = vpack.c.bf16 %v4395, %v4394
          %v4402 = vpack.c.bf16 %v4397, %v4396
          %v4403 = vpack.c.bf16 %v4399, %v4398
          %s4404 = scalar_lea.vmem %s3, 64
          %v4405 = vld [vmem:[%s4404] sm:$0xf]
          %v4406 = vld [vmem:[%s4404 + $0x4] sm:$0xf]
          %v4407 = vld [vmem:[%s4404 + $0x8] sm:$0xf]
          %v4408 = vld [vmem:[%s4404 + $0xc] sm:$0xf]
          %v4409 = vld [vmem:[%s4404 + $0x10] sm:$0xf]
          %v4410 = vld [vmem:[%s4404 + $0x14] sm:$0xf]
          %v4411 = vld [vmem:[%s4404 + $0x18] sm:$0xf]
          %v4412 = vld [vmem:[%s4404 + $0x1c] sm:$0xf]
          %v4413 = vld [vmem:[%s4404 + $0x20] sm:$0xf]
          %v4414 = vld [vmem:[%s4404 + $0x24] sm:$0xf]
          %v4415 = vld [vmem:[%s4404 + $0x28] sm:$0xf]
          %v4416 = vld [vmem:[%s4404 + $0x2c] sm:$0xf]
          %v4417 = vld [vmem:[%s4404 + $0x30] sm:$0xf]
          %v4418 = vld [vmem:[%s4404 + $0x34] sm:$0xf]
          %v4419 = vld [vmem:[%s4404 + $0x38] sm:$0xf]
          %v4420 = vld [vmem:[%s4404 + $0x3c] sm:$0xf]
          %v4437 = vunpack.c.l.b16 %v4405
          %v4438 = vunpack.c.l.b16 %v4406
          %v4439 = vunpack.c.l.b16 %v4407
          %v4440 = vunpack.c.l.b16 %v4408
          %v4441 = vunpack.c.l.b16 %v4409
          %v4442 = vunpack.c.l.b16 %v4410
          %v4443 = vunpack.c.l.b16 %v4411
          %v4444 = vunpack.c.l.b16 %v4412
          %v4445 = vunpack.c.l.b16 %v4413
          %v4446 = vunpack.c.l.b16 %v4414
          %v4447 = vunpack.c.l.b16 %v4415
          %v4448 = vunpack.c.l.b16 %v4416
          %v4449 = vunpack.c.l.b16 %v4417
          %v4450 = vunpack.c.l.b16 %v4418
          %v4451 = vunpack.c.l.b16 %v4419
          %v4452 = vunpack.c.l.b16 %v4420
          %v4453 = vpack.c.b16 %v4438, %v4437
          %v4454 = vpack.c.b16 %v4440, %v4439
          %v4455 = vpack.c.b16 %v4442, %v4441
          %v4456 = vpack.c.b16 %v4444, %v4443
          %v4457 = vpack.c.b16 %v4446, %v4445
          %v4458 = vpack.c.b16 %v4448, %v4447
          %v4459 = vpack.c.b16 %v4450, %v4449
          %v4460 = vpack.c.b16 %v4452, %v4451
          %4469 = vmatprep.subr.bf16.mxu0 0
          %4470 = vmatpush1.bf16.msra.mxu0 %v4453
          %4471 = vmatprep.subr.bf16.mxu0 0
          %4472 = vmatpush1.bf16.msra.mxu0 %v4454
          %4473 = vmatprep.subr.bf16.mxu0 0
          %4474 = vmatpush1.bf16.msra.mxu0 %v4455
          %4475 = vmatprep.subr.bf16.mxu0 0
          %4476 = vmatpush1.bf16.msra.mxu0 %v4456
          %4477 = vmatprep.subr.bf16.mxu0 0
          %4478 = vmatpush1.bf16.msra.mxu0 %v4457
          %4479 = vmatprep.subr.bf16.mxu0 0
          %4480 = vmatpush1.bf16.msra.mxu0 %v4458
          %4481 = vmatprep.subr.bf16.mxu0 0
          %4482 = vmatpush1.bf16.msra.mxu0 %v4459
          %4483 = vmatprep.subr.bf16.mxu0 0
          %4484 = vmatpush1.bf16.msra.mxu0 %v4460
          %4485 = vmatprep.subr.bf16.mxu0 0
          %4486 = vmatpush1.bf16.msra.mxu0 0
          %4487 = vmatprep.subr.bf16.mxu0 0
          %4488 = vmatpush1.bf16.msra.mxu0 0
          %4489 = vmatprep.subr.bf16.mxu0 0
          %4490 = vmatpush1.bf16.msra.mxu0 0
          %4491 = vmatprep.subr.bf16.mxu0 0
          %4492 = vmatpush1.bf16.msra.mxu0 0
          %4493 = vmatprep.subr.bf16.mxu0 0
          %4494 = vmatpush1.bf16.msra.mxu0 0
          %4495 = vmatprep.subr.bf16.mxu0 0
          %4496 = vmatpush1.bf16.msra.mxu0 0
          %4497 = vmatprep.subr.bf16.mxu0 0
          %4498 = vmatpush1.bf16.msra.mxu0 0
          %4499 = vmatprep.subr.bf16.mxu0 0
          %4500 = vmatpush1.bf16.msra.mxu0 0
          %4501 = vmatprep.mubr.bf16.mxu0 0
          %4502 = vmatmul.mubr.bf16.gmra.mrb[0].mxu0 %v4400
          %v4503 = vpop.f32.mrb[0].mxu0
          %v4504 = vadd.f32 0.0, %v4503
          %v4505 = vpop.f32.mrb[0].mxu0
          %v4506 = vpop.f32.mrb[0].mxu0
          %v4507 = vadd.f32 0.0, %v4506
          %v4508 = vpop.f32.mrb[0].mxu0
          %4509 = vmatprep.mubr.bf16.mxu0 0
          %4510 = vmatmul.mubr.bf16.gmra.mrb[0].mxu0 %v4401
          %v4511 = vpop.f32.mrb[0].mxu0
          %v4512 = vadd.f32 0.0, %v4511
          %v4513 = vpop.f32.mrb[0].mxu0
          %v4514 = vpop.f32.mrb[0].mxu0
          %v4515 = vadd.f32 0.0, %v4514
          %v4516 = vpop.f32.mrb[0].mxu0
          %4517 = vmatprep.mubr.bf16.mxu0 0
          %4518 = vmatmul.mubr.bf16.gmra.mrb[0].mxu0 %v4402
          %v4519 = vpop.f32.mrb[0].mxu0
          %v4520 = vadd.f32 0.0, %v4519
          %v4521 = vpop.f32.mrb[0].mxu0
          %v4522 = vpop.f32.mrb[0].mxu0
          %v4523 = vadd.f32 0.0, %v4522
          %v4524 = vpop.f32.mrb[0].mxu0
          %4525 = vmatprep.mubr.bf16.mxu0 0
          %4526 = vmatmul.mubr.bf16.gmra.mrb[0].mxu0 %v4403
          %v4527 = vpop.f32.mrb[0].mxu0
          %v4528 = vadd.f32 0.0, %v4527
          %v4529 = vpop.f32.mrb[0].mxu0
          %v4530 = vpop.f32.mrb[0].mxu0
          %v4531 = vadd.f32 0.0, %v4530
          %v4532 = vpop.f32.mrb[0].mxu0
          %4533 = vdwg.mxu0
          %v4534 = vadd.f32 %v2758, %v4504
          %v4535 = vadd.f32 %v2759, %v4507
          %v4536 = vadd.f32 %v2760, %v4512
          %v4537 = vadd.f32 %v2761, %v4515
          %v4538 = vadd.f32 %v2762, %v4520
          %v4539 = vadd.f32 %v2763, %v4523
          %v4540 = vadd.f32 %v2764, %v4528
          %v4541 = vadd.f32 %v2765, %v4531
          %s4542 = scalar_lea.vmem %s4, 1
          %v4543 = vld [vmem:[%s4542] sm:$0x1]
          %v4545 = vlaneseq
          %v4546 = vshrl.u32 %v4545, 7
          %v4547 = vsub.s32 0, %v4546
          %v4548 = vrot.slane %v4543, %v4547
          %v4550 = vadd.f32 %v4534, %v4548
          %v4551 = vadd.f32 %v4535, %v4548
          %v4552 = vadd.f32 %v4536, %v4548
          %v4553 = vadd.f32 %v4537, %v4548
          %v4554 = vadd.f32 %v4538, %v4548
          %v4555 = vadd.f32 %v4539, %v4548
          %v4556 = vadd.f32 %v4540, %v4548
          %v4557 = vadd.f32 %v4541, %v4548
          %v4558 = vpack.c.bf16 %v4551, %v4550
          %v4559 = vpack.c.bf16 %v4553, %v4552
          %v4560 = vpack.c.bf16 %v4555, %v4554
          %v4561 = vpack.c.bf16 %v4557, %v4556
          %s4562 = scalar_lea.vmem %s5, 128
          %v4563 = vld [vmem:[%s4562] sm:$0xff]
          %v4564 = vld [vmem:[%s4562 + $0x8] sm:$0xff]
          %v4565 = vld [vmem:[%s4562 + $0x10] sm:$0xff]
          %v4566 = vld [vmem:[%s4562 + $0x18] sm:$0xff]
          %v4567 = vld [vmem:[%s4562 + $0x20] sm:$0xff]
          %v4568 = vld [vmem:[%s4562 + $0x28] sm:$0xff]
          %v4569 = vld [vmem:[%s4562 + $0x30] sm:$0xff]
          %v4570 = vld [vmem:[%s4562 + $0x38] sm:$0xff]
          %v4571 = vld [vmem:[%s4562 + $0x40] sm:$0xff]
          %v4572 = vld [vmem:[%s4562 + $0x48] sm:$0xff]
          %v4573 = vld [vmem:[%s4562 + $0x50] sm:$0xff]
          %v4574 = vld [vmem:[%s4562 + $0x58] sm:$0xff]
          %v4575 = vld [vmem:[%s4562 + $0x60] sm:$0xff]
          %v4576 = vld [vmem:[%s4562 + $0x68] sm:$0xff]
          %v4577 = vld [vmem:[%s4562 + $0x70] sm:$0xff]
          %v4578 = vld [vmem:[%s4562 + $0x78] sm:$0xff]
          %s4579 = scalar_lea.vmem %s6, 2
          %v4580 = vld [vmem:[%s4579] sm:$0x3]
          %v4582 = vlaneseq
          %v4583 = vshrl.u32 %v4582, 7
          %v4584 = vsub.s32 0, %v4583
          %v4585 = vrot.slane %v4580, %v4584
          %v4586 = vlaneseq
          %v4587 = vshrl.u32 %v4586, 7
          %v4588 = vsub.s32 1, %v4587
          %v4589 = vrot.slane %v4580, %v4588
          %v4608 = vunpack.c.l.b16 %v4563
          %v4609 = vunpack.c.h.b16 %v4563
          %v4610 = vunpack.c.l.b16 %v4564
          %v4611 = vunpack.c.h.b16 %v4564
          %v4612 = vunpack.c.l.b16 %v4565
          %v4613 = vunpack.c.h.b16 %v4565
          %v4614 = vunpack.c.l.b16 %v4566
          %v4615 = vunpack.c.h.b16 %v4566
          %v4616 = vunpack.c.l.b16 %v4567
          %v4617 = vunpack.c.h.b16 %v4567
          %v4618 = vunpack.c.l.b16 %v4568
          %v4619 = vunpack.c.h.b16 %v4568
          %v4620 = vunpack.c.l.b16 %v4569
          %v4621 = vunpack.c.h.b16 %v4569
          %v4622 = vunpack.c.l.b16 %v4570
          %v4623 = vunpack.c.h.b16 %v4570
          %v4624 = vunpack.c.l.b16 %v4571
          %v4625 = vunpack.c.h.b16 %v4571
          %v4626 = vunpack.c.l.b16 %v4572
          %v4627 = vunpack.c.h.b16 %v4572
          %v4628 = vunpack.c.l.b16 %v4573
          %v4629 = vunpack.c.h.b16 %v4573
          %v4630 = vunpack.c.l.b16 %v4574
          %v4631 = vunpack.c.h.b16 %v4574
          %v4632 = vunpack.c.l.b16 %v4575
          %v4633 = vunpack.c.h.b16 %v4575
          %v4634 = vunpack.c.l.b16 %v4576
          %v4635 = vunpack.c.h.b16 %v4576
          %v4636 = vunpack.c.l.b16 %v4577
          %v4637 = vunpack.c.h.b16 %v4577
          %v4638 = vunpack.c.l.b16 %v4578
          %v4639 = vunpack.c.h.b16 %v4578
          %v4640 = vpack.c.b16 %v4610, %v4608
          %v4641 = vpack.c.b16 %v4611, %v4609
          %v4642 = vpack.c.b16 %v4614, %v4612
          %v4643 = vpack.c.b16 %v4615, %v4613
          %v4644 = vpack.c.b16 %v4618, %v4616
          %v4645 = vpack.c.b16 %v4619, %v4617
          %v4646 = vpack.c.b16 %v4622, %v4620
          %v4647 = vpack.c.b16 %v4623, %v4621
          %v4648 = vpack.c.b16 %v4626, %v4624
          %v4649 = vpack.c.b16 %v4627, %v4625
          %v4650 = vpack.c.b16 %v4630, %v4628
          %v4651 = vpack.c.b16 %v4631, %v4629
          %v4652 = vpack.c.b16 %v4634, %v4632
          %v4653 = vpack.c.b16 %v4635, %v4633
          %v4654 = vpack.c.b16 %v4638, %v4636
          %v4655 = vpack.c.b16 %v4639, %v4637
          %4672 = vmatprep.subr.bf16.mxu0 %v4641
          %4673 = vmatpush1.bf16.msra.mxu0 %v4640
          %4674 = vmatprep.subr.bf16.mxu0 %v4643
          %4675 = vmatpush1.bf16.msra.mxu0 %v4642
          %4676 = vmatprep.subr.bf16.mxu0 %v4645
          %4677 = vmatpush1.bf16.msra.mxu0 %v4644
          %4678 = vmatprep.subr.bf16.mxu0 %v4647
          %4679 = vmatpush1.bf16.msra.mxu0 %v4646
          %4680 = vmatprep.subr.bf16.mxu0 %v4649
          %4681 = vmatpush1.bf16.msra.mxu0 %v4648
          %4682 = vmatprep.subr.bf16.mxu0 %v4651
          %4683 = vmatpush1.bf16.msra.mxu0 %v4650
          %4684 = vmatprep.subr.bf16.mxu0 %v4653
          %4685 = vmatpush1.bf16.msra.mxu0 %v4652
          %4686 = vmatprep.subr.bf16.mxu0 %v4655
          %4687 = vmatpush1.bf16.msra.mxu0 %v4654
          %4688 = vmatprep.subr.bf16.mxu0 0
          %4689 = vmatpush1.bf16.msra.mxu0 0
          %4690 = vmatprep.subr.bf16.mxu0 0
          %4691 = vmatpush1.bf16.msra.mxu0 0
          %4692 = vmatprep.subr.bf16.mxu0 0
          %4693 = vmatpush1.bf16.msra.mxu0 0
          %4694 = vmatprep.subr.bf16.mxu0 0
          %4695 = vmatpush1.bf16.msra.mxu0 0
          %4696 = vmatprep.subr.bf16.mxu0 0
          %4697 = vmatpush1.bf16.msra.mxu0 0
          %4698 = vmatprep.subr.bf16.mxu0 0
          %4699 = vmatpush1.bf16.msra.mxu0 0
          %4700 = vmatprep.subr.bf16.mxu0 0
          %4701 = vmatpush1.bf16.msra.mxu0 0
          %4702 = vmatprep.subr.bf16.mxu0 0
          %4703 = vmatpush1.bf16.msra.mxu0 0
          %4704 = vmatprep.mubr.bf16.mxu0 0
          %4705 = vmatmul.mubr.bf16.gmra.mrb[0].mxu0 %v4558
          %v4706 = vpop.f32.mrb[0].mxu0
          %v4707 = vadd.f32 %v4585, %v4706
          %v4708 = vpop.f32.mrb[0].mxu0
          %v4709 = vadd.f32 %v4589, %v4708
          %v4710 = vpop.f32.mrb[0].mxu0
          %v4711 = vadd.f32 %v4585, %v4710
          %v4712 = vpop.f32.mrb[0].mxu0
          %v4713 = vadd.f32 %v4589, %v4712
          %4714 = vmatprep.mubr.bf16.mxu0 0
          %4715 = vmatmul.mubr.bf16.gmra.mrb[0].mxu0 %v4559
          %v4716 = vpop.f32.mrb[0].mxu0
          %v4717 = vadd.f32 %v4585, %v4716
          %v4718 = vpop.f32.mrb[0].mxu0
          %v4719 = vadd.f32 %v4589, %v4718
          %v4720 = vpop.f32.mrb[0].mxu0
          %v4721 = vadd.f32 %v4585, %v4720
          %v4722 = vpop.f32.mrb[0].mxu0
          %v4723 = vadd.f32 %v4589, %v4722
          %4724 = vmatprep.mubr.bf16.mxu0 0
          %4725 = vmatmul.mubr.bf16.gmra.mrb[0].mxu0 %v4560
          %v4726 = vpop.f32.mrb[0].mxu0
          %v4727 = vadd.f32 %v4585, %v4726
          %v4728 = vpop.f32.mrb[0].mxu0
          %v4729 = vadd.f32 %v4589, %v4728
          %v4730 = vpop.f32.mrb[0].mxu0
          %v4731 = vadd.f32 %v4585, %v4730
          %v4732 = vpop.f32.mrb[0].mxu0
          %v4733 = vadd.f32 %v4589, %v4732
          %4734 = vmatprep.mubr.bf16.mxu0 0
          %4735 = vmatmul.mubr.bf16.gmra.mrb[0].mxu0 %v4561
          %v4736 = vpop.f32.mrb[0].mxu0
          %v4737 = vadd.f32 %v4585, %v4736
          %v4738 = vpop.f32.mrb[0].mxu0
          %v4739 = vadd.f32 %v4589, %v4738
          %v4740 = vpop.f32.mrb[0].mxu0
          %v4741 = vadd.f32 %v4585, %v4740
          %v4742 = vpop.f32.mrb[0].mxu0
          %v4743 = vadd.f32 %v4589, %v4742
          %4744 = vdwg.mxu0
          %v4745 = vadd.f32 %v4707, 3.0
          %v4746 = vadd.f32 %v4709, 3.0
          %v4747 = vadd.f32 %v4711, 3.0
          %v4748 = vadd.f32 %v4713, 3.0
          %v4749 = vadd.f32 %v4717, 3.0
          %v4750 = vadd.f32 %v4719, 3.0
          %v4751 = vadd.f32 %v4721, 3.0
          %v4752 = vadd.f32 %v4723, 3.0
          %v4753 = vadd.f32 %v4727, 3.0
          %v4754 = vadd.f32 %v4729, 3.0
          %v4755 = vadd.f32 %v4731, 3.0
          %v4756 = vadd.f32 %v4733, 3.0
          %v4757 = vadd.f32 %v4737, 3.0
          %v4758 = vadd.f32 %v4739, 3.0
          %v4759 = vadd.f32 %v4741, 3.0
          %v4760 = vadd.f32 %v4743, 3.0
          %v4761 = vmax.f32 %v4745, 0.0
          %v4762 = vmax.f32 %v4746, 0.0
          %v4763 = vmax.f32 %v4747, 0.0
          %v4764 = vmax.f32 %v4748, 0.0
          %v4765 = vmax.f32 %v4749, 0.0
          %v4766 = vmax.f32 %v4750, 0.0
          %v4767 = vmax.f32 %v4751, 0.0
          %v4768 = vmax.f32 %v4752, 0.0
          %v4769 = vmax.f32 %v4753, 0.0
          %v4770 = vmax.f32 %v4754, 0.0
          %v4771 = vmax.f32 %v4755, 0.0
          %v4772 = vmax.f32 %v4756, 0.0
          %v4773 = vmax.f32 %v4757, 0.0
          %v4774 = vmax.f32 %v4758, 0.0
          %v4775 = vmax.f32 %v4759, 0.0
          %v4776 = vmax.f32 %v4760, 0.0
          %v4777 = vmin.f32 %v4761, 6.0
          %v4778 = vmin.f32 %v4762, 6.0
          %v4779 = vmin.f32 %v4763, 6.0
          %v4780 = vmin.f32 %v4764, 6.0
          %v4781 = vmin.f32 %v4765, 6.0
          %v4782 = vmin.f32 %v4766, 6.0
          %v4783 = vmin.f32 %v4767, 6.0
          %v4784 = vmin.f32 %v4768, 6.0
          %v4785 = vmin.f32 %v4769, 6.0
          %v4786 = vmin.f32 %v4770, 6.0
          %v4787 = vmin.f32 %v4771, 6.0
          %v4788 = vmin.f32 %v4772, 6.0
          %v4789 = vmin.f32 %v4773, 6.0
          %v4790 = vmin.f32 %v4774, 6.0
          %v4791 = vmin.f32 %v4775, 6.0
          %v4792 = vmin.f32 %v4776, 6.0
          %v4793 = vmul.f32 %v4707, %v4777
          %v4794 = vmul.f32 %v4709, %v4778
          %v4795 = vmul.f32 %v4711, %v4779
          %v4796 = vmul.f32 %v4713, %v4780
          %v4797 = vmul.f32 %v4717, %v4781
          %v4798 = vmul.f32 %v4719, %v4782
          %v4799 = vmul.f32 %v4721, %v4783
          %v4800 = vmul.f32 %v4723, %v4784
          %v4801 = vmul.f32 %v4727, %v4785
          %v4802 = vmul.f32 %v4729, %v4786
          %v4803 = vmul.f32 %v4731, %v4787
          %v4804 = vmul.f32 %v4733, %v4788
          %v4805 = vmul.f32 %v4737, %v4789
          %v4806 = vmul.f32 %v4739, %v4790
          %v4807 = vmul.f32 %v4741, %v4791
          %v4808 = vmul.f32 %v4743, %v4792
          %v4809 = vmul.f32 %v4793, 0.16666667
          %v4810 = vmul.f32 %v4794, 0.16666667
          %v4811 = vmul.f32 %v4795, 0.16666667
          %v4812 = vmul.f32 %v4796, 0.16666667
          %v4813 = vmul.f32 %v4797, 0.16666667
          %v4814 = vmul.f32 %v4798, 0.16666667
          %v4815 = vmul.f32 %v4799, 0.16666667
          %v4816 = vmul.f32 %v4800, 0.16666667
          %v4817 = vmul.f32 %v4801, 0.16666667
          %v4818 = vmul.f32 %v4802, 0.16666667
          %v4819 = vmul.f32 %v4803, 0.16666667
          %v4820 = vmul.f32 %v4804, 0.16666667
          %v4821 = vmul.f32 %v4805, 0.16666667
          %v4822 = vmul.f32 %v4806, 0.16666667
          %v4823 = vmul.f32 %v4807, 0.16666667
          %v4824 = vmul.f32 %v4808, 0.16666667
          %v4825 = vpack.c.bf16 %v4811, %v4809
          %v4826 = vpack.c.bf16 %v4812, %v4810
          %v4827 = vpack.c.bf16 %v4815, %v4813
          %v4828 = vpack.c.bf16 %v4816, %v4814
          %v4829 = vpack.c.bf16 %v4819, %v4817
          %v4830 = vpack.c.bf16 %v4820, %v4818
          %v4831 = vpack.c.bf16 %v4823, %v4821
          %v4832 = vpack.c.bf16 %v4824, %v4822
          %s4833 = scalar_lea.vmem %s7, 128
          %v4834 = vld [vmem:[%s4833] sm:$0xf]
          %v4835 = vld [vmem:[%s4833 + $0x4] sm:$0xf]
          %v4836 = vld [vmem:[%s4833 + $0x8] sm:$0xf]
          %v4837 = vld [vmem:[%s4833 + $0xc] sm:$0xf]
          %v4838 = vld [vmem:[%s4833 + $0x10] sm:$0xf]
          %v4839 = vld [vmem:[%s4833 + $0x14] sm:$0xf]
          %v4840 = vld [vmem:[%s4833 + $0x18] sm:$0xf]
          %v4841 = vld [vmem:[%s4833 + $0x1c] sm:$0xf]
          %v4842 = vld [vmem:[%s4833 + $0x20] sm:$0xf]
          %v4843 = vld [vmem:[%s4833 + $0x24] sm:$0xf]
          %v4844 = vld [vmem:[%s4833 + $0x28] sm:$0xf]
          %v4845 = vld [vmem:[%s4833 + $0x2c] sm:$0xf]
          %v4846 = vld [vmem:[%s4833 + $0x30] sm:$0xf]
          %v4847 = vld [vmem:[%s4833 + $0x34] sm:$0xf]
          %v4848 = vld [vmem:[%s4833 + $0x38] sm:$0xf]
          %v4849 = vld [vmem:[%s4833 + $0x3c] sm:$0xf]
          %v4850 = vld [vmem:[%s4833 + $0x40] sm:$0xf]
          %v4851 = vld [vmem:[%s4833 + $0x44] sm:$0xf]
          %v4852 = vld [vmem:[%s4833 + $0x48] sm:$0xf]
          %v4853 = vld [vmem:[%s4833 + $0x4c] sm:$0xf]
          %v4854 = vld [vmem:[%s4833 + $0x50] sm:$0xf]
          %v4855 = vld [vmem:[%s4833 + $0x54] sm:$0xf]
          %v4856 = vld [vmem:[%s4833 + $0x58] sm:$0xf]
          %v4857 = vld [vmem:[%s4833 + $0x5c] sm:$0xf]
          %v4858 = vld [vmem:[%s4833 + $0x60] sm:$0xf]
          %v4859 = vld [vmem:[%s4833 + $0x64] sm:$0xf]
          %v4860 = vld [vmem:[%s4833 + $0x68] sm:$0xf]
          %v4861 = vld [vmem:[%s4833 + $0x6c] sm:$0xf]
          %v4862 = vld [vmem:[%s4833 + $0x70] sm:$0xf]
          %v4863 = vld [vmem:[%s4833 + $0x74] sm:$0xf]
          %v4864 = vld [vmem:[%s4833 + $0x78] sm:$0xf]
          %v4865 = vld [vmem:[%s4833 + $0x7c] sm:$0xf]
          %v4898 = vunpack.c.l.b16 %v4834
          %v4899 = vunpack.c.l.b16 %v4835
          %v4900 = vunpack.c.l.b16 %v4836
          %v4901 = vunpack.c.l.b16 %v4837
          %v4902 = vunpack.c.l.b16 %v4838
          %v4903 = vunpack.c.l.b16 %v4839
          %v4904 = vunpack.c.l.b16 %v4840
          %v4905 = vunpack.c.l.b16 %v4841
          %v4906 = vunpack.c.l.b16 %v4842
          %v4907 = vunpack.c.l.b16 %v4843
          %v4908 = vunpack.c.l.b16 %v4844
          %v4909 = vunpack.c.l.b16 %v4845
          %v4910 = vunpack.c.l.b16 %v4846
          %v4911 = vunpack.c.l.b16 %v4847
          %v4912 = vunpack.c.l.b16 %v4848
          %v4913 = vunpack.c.l.b16 %v4849
          %v4914 = vunpack.c.l.b16 %v4850
          %v4915 = vunpack.c.l.b16 %v4851
          %v4916 = vunpack.c.l.b16 %v4852
          %v4917 = vunpack.c.l.b16 %v4853
          %v4918 = vunpack.c.l.b16 %v4854
          %v4919 = vunpack.c.l.b16 %v4855
          %v4920 = vunpack.c.l.b16 %v4856
          %v4921 = vunpack.c.l.b16 %v4857
          %v4922 = vunpack.c.l.b16 %v4858
          %v4923 = vunpack.c.l.b16 %v4859
          %v4924 = vunpack.c.l.b16 %v4860
          %v4925 = vunpack.c.l.b16 %v4861
          %v4926 = vunpack.c.l.b16 %v4862
          %v4927 = vunpack.c.l.b16 %v4863
          %v4928 = vunpack.c.l.b16 %v4864
          %v4929 = vunpack.c.l.b16 %v4865
          %v4930 = vpack.c.b16 %v4899, %v4898
          %v4931 = vpack.c.b16 %v4901, %v4900
          %v4932 = vpack.c.b16 %v4903, %v4902
          %v4933 = vpack.c.b16 %v4905, %v4904
          %v4934 = vpack.c.b16 %v4907, %v4906
          %v4935 = vpack.c.b16 %v4909, %v4908
          %v4936 = vpack.c.b16 %v4911, %v4910
          %v4937 = vpack.c.b16 %v4913, %v4912
          %v4938 = vpack.c.b16 %v4915, %v4914
          %v4939 = vpack.c.b16 %v4917, %v4916
          %v4940 = vpack.c.b16 %v4919, %v4918
          %v4941 = vpack.c.b16 %v4921, %v4920
          %v4942 = vpack.c.b16 %v4923, %v4922
          %v4943 = vpack.c.b16 %v4925, %v4924
          %v4944 = vpack.c.b16 %v4927, %v4926
          %v4945 = vpack.c.b16 %v4929, %v4928
          %4962 = vmatprep.subr.bf16.mxu0 0
          %4963 = vmatpush1.bf16.msra.mxu0 %v4930
          %4964 = vmatprep.subr.bf16.mxu0 0
          %4965 = vmatpush1.bf16.msra.mxu0 %v4931
          %4966 = vmatprep.subr.bf16.mxu0 0
          %4967 = vmatpush1.bf16.msra.mxu0 %v4932
          %4968 = vmatprep.subr.bf16.mxu0 0
          %4969 = vmatpush1.bf16.msra.mxu0 %v4933
          %4970 = vmatprep.subr.bf16.mxu0 0
          %4971 = vmatpush1.bf16.msra.mxu0 %v4934
          %4972 = vmatprep.subr.bf16.mxu0 0
          %4973 = vmatpush1.bf16.msra.mxu0 %v4935
          %4974 = vmatprep.subr.bf16.mxu0 0
          %4975 = vmatpush1.bf16.msra.mxu0 %v4936
          %4976 = vmatprep.subr.bf16.mxu0 0
          %4977 = vmatpush1.bf16.msra.mxu0 %v4937
          %4978 = vmatprep.subr.bf16.mxu0 0
          %4979 = vmatpush1.bf16.msra.mxu0 %v4938
          %4980 = vmatprep.subr.bf16.mxu0 0
          %4981 = vmatpush1.bf16.msra.mxu0 %v4939
          %4982 = vmatprep.subr.bf16.mxu0 0
          %4983 = vmatpush1.bf16.msra.mxu0 %v4940
          %4984 = vmatprep.subr.bf16.mxu0 0
          %4985 = vmatpush1.bf16.msra.mxu0 %v4941
          %4986 = vmatprep.subr.bf16.mxu0 0
          %4987 = vmatpush1.bf16.msra.mxu0 %v4942
          %4988 = vmatprep.subr.bf16.mxu0 0
          %4989 = vmatpush1.bf16.msra.mxu0 %v4943
          %4990 = vmatprep.subr.bf16.mxu0 0
          %4991 = vmatpush1.bf16.msra.mxu0 %v4944
          %4992 = vmatprep.subr.bf16.mxu0 0
          %4993 = vmatpush1.bf16.msra.mxu0 %v4945
          %4994 = vmatprep.mubr.bf16.mxu0 %v4826
          %4995 = vmatmul.mubr.bf16.gmra.mrb[0].mxu0 %v4825
          %v4996 = vpop.f32.mrb[0].mxu0
          %v4997 = vadd.f32 0.0, %v4996
          %v4998 = vpop.f32.mrb[0].mxu0
          %v4999 = vpop.f32.mrb[0].mxu0
          %v5000 = vadd.f32 0.0, %v4999
          %v5001 = vpop.f32.mrb[0].mxu0
          %5002 = vmatprep.mubr.bf16.mxu0 %v4828
          %5003 = vmatmul.mubr.bf16.gmra.mrb[0].mxu0 %v4827
          %v5004 = vpop.f32.mrb[0].mxu0
          %v5005 = vadd.f32 0.0, %v5004
          %v5006 = vpop.f32.mrb[0].mxu0
          %v5007 = vpop.f32.mrb[0].mxu0
          %v5008 = vadd.f32 0.0, %v5007
          %v5009 = vpop.f32.mrb[0].mxu0
          %5010 = vmatprep.mubr.bf16.mxu0 %v4830
          %5011 = vmatmul.mubr.bf16.gmra.mrb[0].mxu0 %v4829
          %v5012 = vpop.f32.mrb[0].mxu0
          %v5013 = vadd.f32 0.0, %v5012
          %v5014 = vpop.f32.mrb[0].mxu0
          %v5015 = vpop.f32.mrb[0].mxu0
          %v5016 = vadd.f32 0.0, %v5015
          %v5017 = vpop.f32.mrb[0].mxu0
          %5018 = vmatprep.mubr.bf16.mxu0 %v4832
          %5019 = vmatmul.mubr.bf16.gmra.mrb[0].mxu0 %v4831
          %v5020 = vpop.f32.mrb[0].mxu0
          %v5021 = vadd.f32 0.0, %v5020
          %v5022 = vpop.f32.mrb[0].mxu0
          %v5023 = vpop.f32.mrb[0].mxu0
          %v5024 = vadd.f32 0.0, %v5023
          %v5025 = vpop.f32.mrb[0].mxu0
          %5026 = vdwg.mxu0
          %v5027 = vadd.f32 %v4550, %v4997
          %v5028 = vadd.f32 %v4551, %v5000
          %v5029 = vadd.f32 %v4552, %v5005
          %v5030 = vadd.f32 %v4553, %v5008
          %v5031 = vadd.f32 %v4554, %v5013
          %v5032 = vadd.f32 %v4555, %v5016
          %v5033 = vadd.f32 %v4556, %v5021
          %v5034 = vadd.f32 %v4557, %v5024
          %s5035 = scalar_lea.vmem %s8, 1
          %v5036 = vld [vmem:[%s5035] sm:$0x1]
          %v5038 = vlaneseq
          %v5039 = vshrl.u32 %v5038, 7
          %v5040 = vsub.s32 0, %v5039
          %v5041 = vrot.slane %v5036, %v5040
          %v5043 = vadd.f32 %v5027, %v5041
          %v5044 = vadd.f32 %v5028, %v5041
          %v5045 = vadd.f32 %v5029, %v5041
          %v5046 = vadd.f32 %v5030, %v5041
          %v5047 = vadd.f32 %v5031, %v5041
          %v5048 = vadd.f32 %v5032, %v5041
          %v5049 = vadd.f32 %v5033, %v5041
          %v5050 = vadd.f32 %v5034, %v5041
          %s5051 = sld [smem:[#allocation3 + $0x1]]
          %v5052 = vstv %s5051
          %v5053 = vmul.f32 %v5052, %v5043
          %v5054 = vmul.f32 %v5052, %v5044
          %v5055 = vmul.f32 %v5052, %v5045
          %v5056 = vmul.f32 %v5052, %v5046
          %v5057 = vmul.f32 %v5052, %v5047
          %v5058 = vmul.f32 %v5052, %v5048
          %v5059 = vmul.f32 %v5052, %v5049
          %v5060 = vmul.f32 %v5052, %v5050
          %v5061 = vadd.f32 %v2758, %v5053
          %v5062 = vadd.f32 %v2759, %v5054
          %v5063 = vadd.f32 %v2760, %v5055
          %v5064 = vadd.f32 %v2761, %v5056
          %v5065 = vadd.f32 %v2762, %v5057
          %v5066 = vadd.f32 %v2763, %v5058
          %v5067 = vadd.f32 %v2764, %v5059
          %v5068 = vadd.f32 %v2765, %v5060
          %5069 = vst [vmem:[%s406] sm:$0xff] %v5061
          %5070 = vst [vmem:[%s406 + $0x8] sm:$0xff] %v5062
          %5071 = vst [vmem:[%s406 + $0x10] sm:$0xff] %v5063
          %5072 = vst [vmem:[%s406 + $0x18] sm:$0xff] %v5064
          %5073 = vst [vmem:[%s406 + $0x20] sm:$0xff] %v5065
          %5074 = vst [vmem:[%s406 + $0x28] sm:$0xff] %v5066
          %5075 = vst [vmem:[%s406 + $0x30] sm:$0xff] %v5067
          %5076 = vst [vmem:[%s406 + $0x38] sm:$0xff] %v5068
        $region80: #{levit_stage_tinyfusion.3} parent=63 // pred_fallthru
          _
        %s5077 = sand.u32 %s271, 1
        %s5078 = scalar_lea.sflag [#allocation4], %s5077
        %s5079 = sand.u32 %s271, 1
        %s5080 = smul.addr %s5079, 64
        %s5081 = scalar_lea.vmem [#allocation8], %s5080
        // Predicated region
        $region81: #{levit_stage_tinyfusion.3} parent=63 // pred_check
          %p5082 = pneg %p281
        $region82: #{levit_stage_tinyfusion.3} parent=63 // pred_check_branch
          %5084 = sbr.rel (%p5082) target = $region84
        $region83: #{levit_stage_tinyfusion.3} parent=63 // pred_region
          %s5086 = ssub.s32 1024, 1024
          %5087 = vsyncadd %s5078, %s5086
          %s5088 = smul.addr %s27, 8
          %s5089 = smul.addr %s5088, 128
          %s5090 = scalar_lea.hbm %s11, %s5089
          %s5091 = sshll.u32 %s5081, 4
          %s5092 = int_to_ptr.vmem [resolvable:$true] %s5091
          %5097 = dma.vmem_to_hbm [thread:$0]  %s5092, 1024, %s5090, %s5078, 128, 128, 8
        $region84: #{levit_stage_tinyfusion.3} parent=63 // pred_fallthru
          _
      $region64: #{levit_stage_tinyfusion.3} parent=5 // pred_fallthru
        _
      %p5098 = scmp.le.s32.totalorder 2, %s22
      // Predicated region
      $region85: #{levit_stage_tinyfusion.3} parent=5 // pred_check
        %p5099 = pneg %p5098
      $region86: #{levit_stage_tinyfusion.3} parent=5 // pred_check_branch
        %5101 = sbr.rel (%p5099) target = $region88
      $region87: #{levit_stage_tinyfusion.3} parent=5 // pred_region
        %s5102 = ssub.s32 %s22, 2
        // Predicated region
        $region89: #{levit_stage_tinyfusion.3} parent=87 // pred_check
          %p5103 = pneg %p287
        $region90: #{levit_stage_tinyfusion.3} parent=87 // pred_check_branch
          %5105 = sbr.rel (%p5103) target = $region92
        $region91: #{levit_stage_tinyfusion.3} parent=87 // pred_region
          %s5106 = sand.u32 %s272, 1
          %s5107 = scalar_lea.sflag [#allocation4], %s5106
          %s5108 = sand.u32 %s272, 1
          %s5109 = smul.addr %s5108, 64
          %s5110 = scalar_lea.vmem [#allocation8], %s5109
          %5111 = dma.done %s5107, 1024
        $region92: #{levit_stage_tinyfusion.3} parent=87 // pred_fallthru
          _
      $region88: #{levit_stage_tinyfusion.3} parent=5 // pred_fallthru
        _
    $region6: #{levit_stage_tinyfusion.3} parent=1 // loop_footer
      %s26 = sadd.s32 1, %s22
    $region7: #{levit_stage_tinyfusion.3} parent=1 // loop_footer_branch
      %21 = sbr.rel target = $region3
    $region8: #{levit_stage_tinyfusion.3} parent=1 // loop_exit
      _
    %5112 = vsyncpa [#allocation4], 1
    %s5113 = scalar_lea.sflag [#allocation4], 1
    %5114 = vsyncpa %s5113, 1
    %5115 = vsyncpa [#allocation5], 1
    %s5116 = scalar_lea.sflag [#allocation5], 1
    %5117 = vsyncpa %s5116, 1
    %5118 = vsyncpa [#allocation7], 1

</llo_original>
